<compile_context>
chip_gen: v6e
topology: v6e:2x2x1
jax: 0.10.0
libtpu: 0.0.40
codegen_flags: <defaults>
</compile_context>

<pallas_src>
import jax
import jax.numpy as jnp
from jax.experimental import pallas as pl
from jax.experimental.pallas import tpu as pltpu

# ----------------------------- model config (small) -----------------------------
B = 2           # batch
C_IMG = 3       # image channels
IMG = 16        # image height/width
PATCH = 8       # patch size -> 2x2 = 4 patches
NP = (IMG // PATCH) ** 2      # num patches = 4
SV = NP + 1                   # vision seq (cls + patches) = 5
DV = 32                       # vision hidden (real)
DL = 32                       # language hidden (real)
T = 8                         # text sequence length
VOCAB = 64                    # vocab size (real)
NHEADS = 2                    # attention heads
DH = DV // NHEADS             # head dim = 16
FF = 64                       # MLP hidden (real)
S = NP + T                    # LM sequence length = 12

DPAD = 128                    # lane-dense padded feature width
KPATCH = 256                  # padded patchified width (C*P*P = 192 -> 256)
SV_PAD = 8
S_PAD = 16
SCALE = 1.0 / (DH ** 0.5)

# row indices inside the packed "vecs" parameter [NVEC, DPAD] (biases / LN gammas+betas)
(I_PATCH_B, I_PRELN_G, I_PRELN_B, I_VLN1_G, I_VLN1_B, I_VQKV_B, I_VO_B,
 I_VLN2_G, I_VLN2_B, I_VFC1_B, I_VFC2_B, I_P1_B, I_P2_B,
 I_LRMS1_G, I_LRMS2_G, I_LFIN_G, I_HEAD_B) = range(17)
NVEC = 24


# ----------------------------- in-kernel helpers (traced) -----------------------------
def _layernorm(x, g, b, d_real):
    # x is zero-padded beyond d_real; g/b zero-padded -> padded lanes stay exactly 0.
    mu = jnp.sum(x, axis=-1, keepdims=True) / d_real
    ms = jnp.sum(x * x, axis=-1, keepdims=True) / d_real
    var = ms - mu * mu
    return (x - mu) * jax.lax.rsqrt(var + 1e-5) * g + b


def _rmsnorm(x, g, d_real):
    ms = jnp.sum(x * x, axis=-1, keepdims=True) / d_real
    return x * jax.lax.rsqrt(ms + 1e-6) * g


def _mm(x, w_ref, bias=None):
    # bf16 at the MXU input, f32 accumulation; weights are stored bf16 (halves weight DMA bytes).
    y = jnp.dot(x.astype(jnp.bfloat16), w_ref[...],
                preferred_element_type=jnp.float32)
    if bias is not None:
        y = y + bias
    return y


def _rope(x, cos, sin):
    half = DH // 2
    x_rot = jnp.concatenate([-x[:, half:], x[:, :half]], axis=-1)
    return x * cos + x_rot * sin


def _attn_block(q, k, v, o_w_ref, add_mask=None, cos=None, sin=None):
    """Multi-head attention + fused output projection. q/k/v: [Sq, NHEADS*DH] f32."""
    out = None
    for hd in range(NHEADS):
        lo, hi = hd * DH, (hd + 1) * DH
        qh, kh, vh = q[:, lo:hi], k[:, lo:hi], v[:, lo:hi]
        if cos is not None:
            qh = _rope(qh, cos, sin)
            kh = _rope(kh, cos, sin)
        # scores = qh @ kh^T (contract last dims) in bf16, accumulate f32
        s = jax.lax.dot_general(
            qh.astype(jnp.bfloat16), kh.astype(jnp.bfloat16),
            (((1,), (1,)), ((), ())),
            preferred_element_type=jnp.float32) * SCALE
        if add_mask is not None:
            s = s + add_mask
        m = jnp.max(s, axis=-1, keepdims=True)
        e = jnp.exp(s - m)
        p = e * pl.reciprocal(jnp.sum(e, axis=-1, keepdims=True), approx=True)
        oh = jnp.dot(p.astype(jnp.bfloat16), vh.astype(jnp.bfloat16),
                     preferred_element_type=jnp.float32)               # [Sq, DH]
        proj = jnp.dot(oh.astype(jnp.bfloat16), o_w_ref[lo:hi, :],
                       preferred_element_type=jnp.float32)             # [Sq, DPAD]
        out = proj if out is None else out + proj
    return out


# ----------------------------- the fused forward kernel -----------------------------
def _llava_forward_kernel(
        # per-batch data blocks
        patches_ref, tok_ref, bias_ref,
        # shared tables / packed vectors
        rope_ref, vecs_ref, visbias_ref,
        # weight matrices (bf16, lane-padded)
        patch_w, v_qkv_w, v_o_w, v_fc1_w, v_fc2_w, p1_w, p2_w,
        l_qkv_w, l_o_w, l_gateup_w, l_down_w, head_w,
        # output
        logits_ref):
    vrow = lambda i: vecs_ref[i:i + 1, :]          # [1, DPAD] f32

    # ---------------- vision tower (CLIP-ViT style, pre-LN encoder layer) ----------------
    patch_emb = _mm(patches_ref[...], patch_w, vrow(I_PATCH_B))            # [NP, DPAD]
    x = jnp.concatenate([jnp.zeros((1, DPAD), jnp.float32), patch_emb], axis=0)
    x = x + visbias_ref[...][:SV, :]                                       # CLS token + pos-emb
    x = _layernorm(x, vrow(I_PRELN_G), vrow(I_PRELN_B), DV)

    h = _layernorm(x, vrow(I_VLN1_G), vrow(I_VLN1_B), DV)
    qkv = _mm(h, v_qkv_w, vrow(I_VQKV_B))                                  # fused QKV
    a = _attn_block(qkv[:, 0:DV], qkv[:, DV:2 * DV], qkv[:, 2 * DV:3 * DV], v_o_w)
    x = x + a + vrow(I_VO_B)
    h = _layernorm(x, vrow(I_VLN2_G), vrow(I_VLN2_B), DV)
    m = jax.nn.gelu(_mm(h, v_fc1_w, vrow(I_VFC1_B)))
    x = x + _mm(m, v_fc2_w, vrow(I_VFC2_B))

    img = x[1:SV, :]                                                       # drop CLS ("patch" select)

    # ---------------- multimodal projector (mlp2x_gelu) ----------------
    img = jax.nn.gelu(_mm(img, p1_w, vrow(I_P1_B)))
    img = _mm(img, p2_w, vrow(I_P2_B))                                     # [NP, DPAD]

    # ---------------- language model (LLaMA-style decoder layer) ----------------
    x = jnp.concatenate([img, tok_ref[...]], axis=0)                       # [S, DPAD]

    rope = rope_ref[...]
    cos = rope[:S, 0:DH]
    sin = rope[:S, DH:2 * DH]

    # causal mask built in-kernel + key-padding additive bias (f32, no HBM mask buffer)
    rows = jax.lax.broadcasted_iota(jnp.int32, (S, S), 0)
    cols = jax.lax.broadcasted_iota(jnp.int32, (S, S), 1)
    add_mask = jnp.where(rows >= cols, jnp.float32(0.0), jnp.float32(-1e9))
    add_mask = add_mask + bias_ref[...][:, :S]

    h = _rmsnorm(x, vrow(I_LRMS1_G), DL)
    qkv = _mm(h, l_qkv_w)
    a = _attn_block(qkv[:, 0:DL], qkv[:, DL:2 * DL], qkv[:, 2 * DL:3 * DL],
                    l_o_w, add_mask=add_mask, cos=cos, sin=sin)
    x = x + a
    h = _rmsnorm(x, vrow(I_LRMS2_G), DL)
    gu = _mm(h, l_gateup_w)                                                # fused gate/up
    mlp = jax.nn.silu(gu[:, 0:FF]) * gu[:, FF:2 * FF]                      # [S, FF]
    x = x + _mm(mlp, l_down_w)
    x = _rmsnorm(x, vrow(I_LFIN_G), DL)

    logits_ref[...] = _mm(x, head_w, vrow(I_HEAD_B))                       # [S, DPAD]


# ----------------------------- wrapper (glue + pallas_call) -----------------------------
def _resident_spec(shape):
    nd = len(shape)
    return pl.BlockSpec(shape, lambda i: (0,) * nd)   # same block every step -> stays in VMEM


def llava_forward(params, input_ids, attention_mask, pixel_values, labels=None):
    b = pixel_values.shape[0]

    # patchify NCHW -> [B, NP, C*P*P], zero-pad K to 256 (lane-multiple)
    x = pixel_values.reshape(b, C_IMG, IMG // PATCH, PATCH, IMG // PATCH, PATCH)
    x = x.transpose(0, 2, 4, 1, 3, 5).reshape(b, NP, C_IMG * PATCH * PATCH)
    patches = jnp.zeros((b, NP, KPATCH), jnp.float32)
    patches = patches.at[:, :, :C_IMG * PATCH * PATCH].set(x)

    # token embedding gather in glue (already lane-padded to DPAD)
    tok = jnp.take(params["tok_emb"], input_ids, axis=0)                   # [B, T, DPAD]

    # key-padding additive bias over the concatenated (image + text) sequence
    full_mask = jnp.concatenate(
        [jnp.ones((b, NP), attention_mask.dtype), attention_mask], axis=1)  # [B, S]
    key_bias = jnp.where(full_mask > 0, 0.0, -1e9).astype(jnp.float32)
    lm_bias = jnp.zeros((b, 1, DPAD), jnp.float32).at[:, 0, :S].set(key_bias)

    weight_names = ("patch_w", "v_qkv_w", "v_o_w", "v_fc1_w", "v_fc2_w",
                    "p1_w", "p2_w", "l_qkv_w", "l_o_w", "l_gateup_w",
                    "l_down_w", "head_w")
    weights = [params[n] for n in weight_names]

    in_specs = [
        pl.BlockSpec((None, NP, KPATCH), lambda i: (i, 0, 0)),   # patches   (per batch)
        pl.BlockSpec((None, T, DPAD), lambda i: (i, 0, 0)),      # tok embeds(per batch)
        pl.BlockSpec((None, 1, DPAD), lambda i: (i, 0, 0)),      # key bias  (per batch)
        _resident_spec(params["rope"].shape),
        _resident_spec(params["vecs"].shape),
        _resident_spec(params["vis_bias"].shape),
    ] + [_resident_spec(w.shape) for w in weights]

    logits_pad = pl.pallas_call(
        _llava_forward_kernel,
        out_shape=jax.ShapeDtypeStruct((b, S, DPAD), jnp.float32),
        grid=(b,),
        in_specs=in_specs,
        out_specs=pl.BlockSpec((None, S, DPAD), lambda i: (i, 0, 0)),
        compiler_params=pltpu.CompilerParams(
            dimension_semantics=("parallel",)),    # batch sharded over v7x's 2 TensorCores
    )(patches, tok, lm_bias, params["rope"], params["vecs"], params["vis_bias"],
      *weights)

    logits = logits_pad[:, :, :VOCAB]                                      # [B, S, VOCAB]

    loss = None
    if labels is not None:
        # shifted next-token cross-entropy over the text-token logits only
        text_logits = logits[:, NP:, :]
        shift_logits = text_logits[:, :-1, :]
        shift_labels = labels[:, 1:]
        logp = jax.nn.log_softmax(shift_logits, axis=-1)
        nll = -jnp.take_along_axis(logp, shift_labels[..., None], axis=-1)[..., 0]
        valid = (shift_labels != -100).astype(jnp.float32)
        loss = jnp.sum(nll * valid) / jnp.maximum(jnp.sum(valid), 1.0)
    return loss, logits


# ----------------------------- deterministic params -----------------------------
def init_params(key):
    keys = iter(jax.random.split(key, 64))

    def padded_w(k_real, n_real, k_pad=DPAD, n_pad=DPAD):
        w = 0.02 * jax.random.normal(next(keys), (k_real, n_real), jnp.float32)
        full = jnp.zeros((k_pad, n_pad), jnp.float32).at[:k_real, :n_real].set(w)
        return full.astype(jnp.bfloat16)               # bf16 weights for the MXU

    def vec_gamma(d):
        return jnp.zeros((DPAD,), jnp.float32).at[:d].set(1.0)   # zero padding keeps lanes clean

    zero_row = jnp.zeros((DPAD,), jnp.float32)

    params = {}
    # vision tower
    params["patch_w"] = padded_w(C_IMG * PATCH * PATCH, DV, k_pad=KPATCH)
    cls = 0.02 * jax.random.normal(next(keys), (1, DV), jnp.float32)
    pos = 0.02 * jax.random.normal(next(keys), (SV, DV), jnp.float32)
    visb = pos.at[0].add(cls[0])                                   # row0 = CLS + pos[0]
    params["vis_bias"] = jnp.zeros((SV_PAD, DPAD), jnp.float32).at[:SV, :DV].set(visb)
    params["v_qkv_w"] = padded_w(DV, 3 * DV)                       # fused Q|K|V
    params["v_o_w"] = padded_w(DV, DV, k_pad=DV)                   # [32, 128]
    params["v_fc1_w"] = padded_w(DV, FF)
    params["v_fc2_w"] = padded_w(FF, DV)
    # multimodal projector
    params["p1_w"] = padded_w(DV, DL)
    params["p2_w"] = padded_w(DL, DL)
    # language model
    tok = 0.02 * jax.random.normal(next(keys), (VOCAB, DL), jnp.float32)
    params["tok_emb"] = jnp.zeros((VOCAB, DPAD), jnp.float32).at[:, :DL].set(tok)
    params["l_qkv_w"] = padded_w(DL, 3 * DL)                       # fused Q|K|V (no bias)
    params["l_o_w"] = padded_w(DL, DL, k_pad=DL)                   # [32, 128]
    params["l_gateup_w"] = padded_w(DL, 2 * FF)                    # fused gate|up
    params["l_down_w"] = padded_w(FF, DL, k_pad=FF)                # [64, 128]
    params["head_w"] = padded_w(DL, VOCAB)

    # packed per-row vectors (biases zero, LN/RMS gammas one on the real width)
    vec_rows = [zero_row] * NVEC
    for idx in (I_PRELN_G, I_VLN1_G, I_VLN2_G):
        vec_rows[idx] = vec_gamma(DV)
    for idx in (I_LRMS1_G, I_LRMS2_G, I_LFIN_G):
        vec_rows[idx] = vec_gamma(DL)
    params["vecs"] = jnp.stack(vec_rows, axis=0)                   # [NVEC, DPAD]

    # rotary table for the LM sequence: cols 0:DH = cos, DH:2*DH = sin
    posn = jnp.arange(S, dtype=jnp.float32)
    inv_freq = 1.0 / (10000.0 ** (jnp.arange(0, DH, 2, dtype=jnp.float32) / DH))
    freqs = posn[:, None] * inv_freq[None, :]                      # [S, DH/2]
    emb = jnp.concatenate([freqs, freqs], axis=-1)                 # [S, DH]
    rope = jnp.zeros((S_PAD, DPAD), jnp.float32)
    rope = rope.at[:S, :DH].set(jnp.cos(emb)).at[:S, DH:2 * DH].set(jnp.sin(emb))
    params["rope"] = rope
    return params


# ----------------------------- main -----------------------------
if __name__ == "__main__":
    root = jax.random.PRNGKey(0)
    kp, k1, k2, k3 = jax.random.split(root, 4)

    params = init_params(kp)
    pixel_values = jax.random.normal(k1, (B, C_IMG, IMG, IMG), jnp.float32)   # NCHW like PyTorch
    input_ids = jax.random.randint(k2, (B, T), 0, VOCAB, dtype=jnp.int32)
    attention_mask = jnp.ones((B, T), jnp.int32)
    labels = jax.random.randint(k3, (B, T), 0, VOCAB, dtype=jnp.int32)

    fwd = jax.jit(llava_forward)
    loss, logits = fwd(params, input_ids, attention_mask, pixel_values, labels)
    jax.block_until_ready((loss, logits))

    assert logits.shape == (B, NP + T, VOCAB)
    assert bool(jnp.isfinite(loss))
    print("KERNEL_OK")
</pallas_src>

<mosaic_0001>
module attributes {stable_mosaic.version = 11 : i64} {
  func.func @_llava_forward_kernel(%arg0: i32, %arg1: memref<1x4x256xf32, #tpu.memory_space<vmem>>, %arg2: memref<1x8x128xf32, #tpu.memory_space<vmem>>, %arg3: memref<1x1x128xf32, #tpu.memory_space<vmem>>, %arg4: memref<16x128xf32, #tpu.memory_space<vmem>>, %arg5: memref<24x128xf32, #tpu.memory_space<vmem>>, %arg6: memref<8x128xf32, #tpu.memory_space<vmem>>, %arg7: memref<256x128xbf16, #tpu.memory_space<vmem>>, %arg8: memref<128x128xbf16, #tpu.memory_space<vmem>>, %arg9: memref<32x128xbf16, #tpu.memory_space<vmem>>, %arg10: memref<128x128xbf16, #tpu.memory_space<vmem>>, %arg11: memref<128x128xbf16, #tpu.memory_space<vmem>>, %arg12: memref<128x128xbf16, #tpu.memory_space<vmem>>, %arg13: memref<128x128xbf16, #tpu.memory_space<vmem>>, %arg14: memref<128x128xbf16, #tpu.memory_space<vmem>>, %arg15: memref<32x128xbf16, #tpu.memory_space<vmem>>, %arg16: memref<128x128xbf16, #tpu.memory_space<vmem>>, %arg17: memref<64x128xbf16, #tpu.memory_space<vmem>>, %arg18: memref<128x128xbf16, #tpu.memory_space<vmem>>, %arg19: memref<1x12x128xf32, #tpu.memory_space<vmem>>) attributes {dimension_semantics = [#tpu.dimension_semantics<parallel>], iteration_bounds = array<i64: 2>, scalar_prefetch = 0 : i64, scratch_operands = 0 : i64, tpu.core_type = #tpu.core_type<tc>, window_params = [{transform_indices = @transform_0, window_bounds = array<i64: 1, 4, 256>}, {transform_indices = @transform_1, window_bounds = array<i64: 1, 8, 128>}, {transform_indices = @transform_2, window_bounds = array<i64: 1, 1, 128>}, {pipeline_mode = #tpu.pipeline_mode<synchronous>, transform_indices = @transform_3, window_bounds = array<i64: 16, 128>}, {pipeline_mode = #tpu.pipeline_mode<synchronous>, transform_indices = @transform_4, window_bounds = array<i64: 24, 128>}, {pipeline_mode = #tpu.pipeline_mode<synchronous>, transform_indices = @transform_5, window_bounds = array<i64: 8, 128>}, {pipeline_mode = #tpu.pipeline_mode<synchronous>, transform_indices = @transform_6, window_bounds = array<i64: 256, 128>}, {pipeline_mode = #tpu.pipeline_mode<synchronous>, transform_indices = @transform_7, window_bounds = array<i64: 128, 128>}, {pipeline_mode = #tpu.pipeline_mode<synchronous>, transform_indices = @transform_8, window_bounds = array<i64: 32, 128>}, {pipeline_mode = #tpu.pipeline_mode<synchronous>, transform_indices = @transform_9, window_bounds = array<i64: 128, 128>}, {pipeline_mode = #tpu.pipeline_mode<synchronous>, transform_indices = @transform_10, window_bounds = array<i64: 128, 128>}, {pipeline_mode = #tpu.pipeline_mode<synchronous>, transform_indices = @transform_11, window_bounds = array<i64: 128, 128>}, {pipeline_mode = #tpu.pipeline_mode<synchronous>, transform_indices = @transform_12, window_bounds = array<i64: 128, 128>}, {pipeline_mode = #tpu.pipeline_mode<synchronous>, transform_indices = @transform_13, window_bounds = array<i64: 128, 128>}, {pipeline_mode = #tpu.pipeline_mode<synchronous>, transform_indices = @transform_14, window_bounds = array<i64: 32, 128>}, {pipeline_mode = #tpu.pipeline_mode<synchronous>, transform_indices = @transform_15, window_bounds = array<i64: 128, 128>}, {pipeline_mode = #tpu.pipeline_mode<synchronous>, transform_indices = @transform_16, window_bounds = array<i64: 64, 128>}, {pipeline_mode = #tpu.pipeline_mode<synchronous>, transform_indices = @transform_17, window_bounds = array<i64: 128, 128>}, {transform_indices = @transform_18, window_bounds = array<i64: 1, 12, 128>}]} {
    %c0 = arith.constant 0 : index
    %c0_0 = arith.constant 0 : index
    %c0_1 = arith.constant 0 : index
    %0 = vector.load %arg1[%c0, %c0_0, %c0_1] : memref<1x4x256xf32, #tpu.memory_space<vmem>>, vector<1x4x256xf32>
    %1 = vector.shape_cast %0 : vector<1x4x256xf32> to vector<4x256xf32>
    %c0_2 = arith.constant 0 : index
    %c0_3 = arith.constant 0 : index
    %2 = vector.load %arg5[%c0_2, %c0_3] : memref<24x128xf32, #tpu.memory_space<vmem>>, vector<1x128xf32>
    %3 = arith.truncf %1 : vector<4x256xf32> to vector<4x256xbf16>
    %c0_4 = arith.constant 0 : index
    %c0_5 = arith.constant 0 : index
    %4 = vector.load %arg7[%c0_4, %c0_5] : memref<256x128xbf16, #tpu.memory_space<vmem>>, vector<256x128xbf16>
    %cst = arith.constant dense<0.000000e+00> : vector<4x128xf32>
    %5 = tpu.matmul %3, %4, %cst {dimension_numbers = #tpu.dot_dimension_numbers<[1], [0], [0], [1], [0, 0, 1, 1], [], []>} : vector<4x256xbf16>, vector<256x128xbf16>, vector<4x128xf32> -> vector<4x128xf32>
    %6 = vector.broadcast %2 : vector<1x128xf32> to vector<4x128xf32>
    %7 = arith.addf %5, %6 : vector<4x128xf32>
    %cst_6 = arith.constant 0.000000e+00 : f32
    %8 = vector.broadcast %cst_6 : f32 to vector<1x128xf32>
    %9 = tpu.concatenate %8, %7 in 0 : vector<1x128xf32>, vector<4x128xf32> -> vector<5x128xf32>
    %c0_7 = arith.constant 0 : index
    %c0_8 = arith.constant 0 : index
    %10 = vector.load %arg6[%c0_7, %c0_8] : memref<8x128xf32, #tpu.memory_space<vmem>>, vector<8x128xf32>
    %11 = vector.extract_strided_slice %10 {offsets = [0, 0], sizes = [5, 128], strides = [1, 1]} : vector<8x128xf32> to vector<5x128xf32>
    %12 = arith.addf %9, %11 : vector<5x128xf32>
    %c1 = arith.constant 1 : index
    %c0_9 = arith.constant 0 : index
    %13 = vector.load %arg5[%c1, %c0_9] : memref<24x128xf32, #tpu.memory_space<vmem>>, vector<1x128xf32>
    %c2 = arith.constant 2 : index
    %c0_10 = arith.constant 0 : index
    %14 = vector.load %arg5[%c2, %c0_10] : memref<24x128xf32, #tpu.memory_space<vmem>>, vector<1x128xf32>
    %cst_11 = arith.constant dense<0.000000e+00> : vector<5xf32>
    %15 = vector.multi_reduction <add>, %12, %cst_11 [1] : vector<5x128xf32> to vector<5xf32>
    %16 = vector.shape_cast %15 : vector<5xf32> to vector<5x1xf32>
    %cst_12 = arith.constant 3.200000e+01 : f32
    %17 = vector.broadcast %cst_12 : f32 to vector<5x1xf32>
    %18 = arith.divf %16, %17 : vector<5x1xf32>
    %19 = arith.mulf %12, %12 : vector<5x128xf32>
    %cst_13 = arith.constant dense<0.000000e+00> : vector<5xf32>
    %20 = vector.multi_reduction <add>, %19, %cst_13 [1] : vector<5x128xf32> to vector<5xf32>
    %21 = vector.shape_cast %20 : vector<5xf32> to vector<5x1xf32>
    %cst_14 = arith.constant 3.200000e+01 : f32
    %22 = vector.broadcast %cst_14 : f32 to vector<5x1xf32>
    %23 = arith.divf %21, %22 : vector<5x1xf32>
    %24 = arith.mulf %18, %18 : vector<5x1xf32>
    %25 = arith.subf %23, %24 : vector<5x1xf32>
    %26 = vector.broadcast %18 : vector<5x1xf32> to vector<5x128xf32>
    %27 = arith.subf %12, %26 : vector<5x128xf32>
    %cst_15 = arith.constant 9.99999974E-6 : f32
    %28 = vector.broadcast %cst_15 : f32 to vector<5x1xf32>
    %29 = arith.addf %25, %28 : vector<5x1xf32>
    %30 = math.rsqrt %29 : vector<5x1xf32>
    %31 = vector.broadcast %30 : vector<5x1xf32> to vector<5x128xf32>
    %32 = arith.mulf %27, %31 : vector<5x128xf32>
    %33 = vector.broadcast %13 : vector<1x128xf32> to vector<5x128xf32>
    %34 = arith.mulf %32, %33 : vector<5x128xf32>
    %35 = vector.broadcast %14 : vector<1x128xf32> to vector<5x128xf32>
    %36 = arith.addf %34, %35 : vector<5x128xf32>
    %c3 = arith.constant 3 : index
    %c0_16 = arith.constant 0 : index
    %37 = vector.load %arg5[%c3, %c0_16] : memref<24x128xf32, #tpu.memory_space<vmem>>, vector<1x128xf32>
    %c4 = arith.constant 4 : index
    %c0_17 = arith.constant 0 : index
    %38 = vector.load %arg5[%c4, %c0_17] : memref<24x128xf32, #tpu.memory_space<vmem>>, vector<1x128xf32>
    %cst_18 = arith.constant dense<0.000000e+00> : vector<5xf32>
    %39 = vector.multi_reduction <add>, %36, %cst_18 [1] : vector<5x128xf32> to vector<5xf32>
    %40 = vector.shape_cast %39 : vector<5xf32> to vector<5x1xf32>
    %cst_19 = arith.constant 3.200000e+01 : f32
    %41 = vector.broadcast %cst_19 : f32 to vector<5x1xf32>
    %42 = arith.divf %40, %41 : vector<5x1xf32>
    %43 = arith.mulf %36, %36 : vector<5x128xf32>
    %cst_20 = arith.constant dense<0.000000e+00> : vector<5xf32>
    %44 = vector.multi_reduction <add>, %43, %cst_20 [1] : vector<5x128xf32> to vector<5xf32>
    %45 = vector.shape_cast %44 : vector<5xf32> to vector<5x1xf32>
    %cst_21 = arith.constant 3.200000e+01 : f32
    %46 = vector.broadcast %cst_21 : f32 to vector<5x1xf32>
    %47 = arith.divf %45, %46 : vector<5x1xf32>
    %48 = arith.mulf %42, %42 : vector<5x1xf32>
    %49 = arith.subf %47, %48 : vector<5x1xf32>
    %50 = vector.broadcast %42 : vector<5x1xf32> to vector<5x128xf32>
    %51 = arith.subf %36, %50 : vector<5x128xf32>
    %cst_22 = arith.constant 9.99999974E-6 : f32
    %52 = vector.broadcast %cst_22 : f32 to vector<5x1xf32>
    %53 = arith.addf %49, %52 : vector<5x1xf32>
    %54 = math.rsqrt %53 : vector<5x1xf32>
    %55 = vector.broadcast %54 : vector<5x1xf32> to vector<5x128xf32>
    %56 = arith.mulf %51, %55 : vector<5x128xf32>
    %57 = vector.broadcast %37 : vector<1x128xf32> to vector<5x128xf32>
    %58 = arith.mulf %56, %57 : vector<5x128xf32>
    %59 = vector.broadcast %38 : vector<1x128xf32> to vector<5x128xf32>
    %60 = arith.addf %58, %59 : vector<5x128xf32>
    %c5 = arith.constant 5 : index
    %c0_23 = arith.constant 0 : index
    %61 = vector.load %arg5[%c5, %c0_23] : memref<24x128xf32, #tpu.memory_space<vmem>>, vector<1x128xf32>
    %62 = arith.truncf %60 : vector<5x128xf32> to vector<5x128xbf16>
    %c0_24 = arith.constant 0 : index
    %c0_25 = arith.constant 0 : index
    %63 = vector.load %arg8[%c0_24, %c0_25] : memref<128x128xbf16, #tpu.memory_space<vmem>>, vector<128x128xbf16>
    %cst_26 = arith.constant dense<0.000000e+00> : vector<5x128xf32>
    %64 = tpu.matmul %62, %63, %cst_26 {dimension_numbers = #tpu.dot_dimension_numbers<[1], [0], [0], [1], [0, 0, 1, 1], [], []>} : vector<5x128xbf16>, vector<128x128xbf16>, vector<5x128xf32> -> vector<5x128xf32>
    %65 = vector.broadcast %61 : vector<1x128xf32> to vector<5x128xf32>
    %66 = arith.addf %64, %65 : vector<5x128xf32>
    %67 = vector.extract_strided_slice %66 {offsets = [0, 0], sizes = [5, 32], strides = [1, 1]} : vector<5x128xf32> to vector<5x32xf32>
    %68 = vector.extract_strided_slice %66 {offsets = [0, 32], sizes = [5, 32], strides = [1, 1]} : vector<5x128xf32> to vector<5x32xf32>
    %69 = vector.extract_strided_slice %66 {offsets = [0, 64], sizes = [5, 32], strides = [1, 1]} : vector<5x128xf32> to vector<5x32xf32>
    %70 = vector.extract_strided_slice %67 {offsets = [0, 0], sizes = [5, 16], strides = [1, 1]} : vector<5x32xf32> to vector<5x16xf32>
    %71 = vector.extract_strided_slice %68 {offsets = [0, 0], sizes = [5, 16], strides = [1, 1]} : vector<5x32xf32> to vector<5x16xf32>
    %72 = vector.extract_strided_slice %69 {offsets = [0, 0], sizes = [5, 16], strides = [1, 1]} : vector<5x32xf32> to vector<5x16xf32>
    %73 = arith.truncf %70 : vector<5x16xf32> to vector<5x16xbf16>
    %74 = arith.truncf %71 : vector<5x16xf32> to vector<5x16xbf16>
    %cst_27 = arith.constant dense<0.000000e+00> : vector<5x5xf32>
    %75 = tpu.matmul %73, %74, %cst_27 {dimension_numbers = #tpu.dot_dimension_numbers<[1], [1], [0], [0], [0, 0, 1, 0], [], []>} : vector<5x16xbf16>, vector<5x16xbf16>, vector<5x5xf32> -> vector<5x5xf32>
    %cst_28 = arith.constant 2.500000e-01 : f32
    %76 = vector.broadcast %cst_28 : f32 to vector<5x5xf32>
    %77 = arith.mulf %75, %76 : vector<5x5xf32>
    %cst_29 = arith.constant dense<0xFF800000> : vector<5xf32>
    %78 = vector.multi_reduction <maximumf>, %77, %cst_29 [1] : vector<5x5xf32> to vector<5xf32>
    %79 = vector.shape_cast %78 : vector<5xf32> to vector<5x1xf32>
    %80 = vector.broadcast %79 : vector<5x1xf32> to vector<5x5xf32>
    %81 = arith.subf %77, %80 : vector<5x5xf32>
    %82 = math.exp %81 : vector<5x5xf32>
    %cst_30 = arith.constant dense<0.000000e+00> : vector<5xf32>
    %83 = vector.multi_reduction <add>, %82, %cst_30 [1] : vector<5x5xf32> to vector<5xf32>
    %84 = vector.shape_cast %83 : vector<5xf32> to vector<5x1xf32>
    %85 = tpu.reciprocal %84 {approx = true} : vector<5x1xf32> -> vector<5x1xf32>
    %86 = vector.broadcast %85 : vector<5x1xf32> to vector<5x5xf32>
    %87 = arith.mulf %82, %86 : vector<5x5xf32>
    %88 = arith.truncf %87 : vector<5x5xf32> to vector<5x5xbf16>
    %89 = arith.truncf %72 : vector<5x16xf32> to vector<5x16xbf16>
    %cst_31 = arith.constant dense<0.000000e+00> : vector<5x16xf32>
    %90 = tpu.matmul %88, %89, %cst_31 {dimension_numbers = #tpu.dot_dimension_numbers<[1], [0], [0], [1], [0, 0, 1, 1], [], []>} : vector<5x5xbf16>, vector<5x16xbf16>, vector<5x16xf32> -> vector<5x16xf32>
    %91 = arith.truncf %90 : vector<5x16xf32> to vector<5x16xbf16>
    %c0_32 = arith.constant 0 : index
    %c0_33 = arith.constant 0 : index
    %92 = vector.load %arg9[%c0_32, %c0_33] : memref<32x128xbf16, #tpu.memory_space<vmem>>, vector<16x128xbf16>
    %cst_34 = arith.constant dense<0.000000e+00> : vector<5x128xf32>
    %93 = tpu.matmul %91, %92, %cst_34 {dimension_numbers = #tpu.dot_dimension_numbers<[1], [0], [0], [1], [0, 0, 1, 1], [], []>} : vector<5x16xbf16>, vector<16x128xbf16>, vector<5x128xf32> -> vector<5x128xf32>
    %94 = vector.extract_strided_slice %67 {offsets = [0, 16], sizes = [5, 16], strides = [1, 1]} : vector<5x32xf32> to vector<5x16xf32>
    %95 = vector.extract_strided_slice %68 {offsets = [0, 16], sizes = [5, 16], strides = [1, 1]} : vector<5x32xf32> to vector<5x16xf32>
    %96 = vector.extract_strided_slice %69 {offsets = [0, 16], sizes = [5, 16], strides = [1, 1]} : vector<5x32xf32> to vector<5x16xf32>
    %97 = arith.truncf %94 : vector<5x16xf32> to vector<5x16xbf16>
    %98 = arith.truncf %95 : vector<5x16xf32> to vector<5x16xbf16>
    %cst_35 = arith.constant dense<0.000000e+00> : vector<5x5xf32>
    %99 = tpu.matmul %97, %98, %cst_35 {dimension_numbers = #tpu.dot_dimension_numbers<[1], [1], [0], [0], [0, 0, 1, 0], [], []>} : vector<5x16xbf16>, vector<5x16xbf16>, vector<5x5xf32> -> vector<5x5xf32>
    %cst_36 = arith.constant 2.500000e-01 : f32
    %100 = vector.broadcast %cst_36 : f32 to vector<5x5xf32>
    %101 = arith.mulf %99, %100 : vector<5x5xf32>
    %cst_37 = arith.constant dense<0xFF800000> : vector<5xf32>
    %102 = vector.multi_reduction <maximumf>, %101, %cst_37 [1] : vector<5x5xf32> to vector<5xf32>
    %103 = vector.shape_cast %102 : vector<5xf32> to vector<5x1xf32>
    %104 = vector.broadcast %103 : vector<5x1xf32> to vector<5x5xf32>
    %105 = arith.subf %101, %104 : vector<5x5xf32>
    %106 = math.exp %105 : vector<5x5xf32>
    %cst_38 = arith.constant dense<0.000000e+00> : vector<5xf32>
    %107 = vector.multi_reduction <add>, %106, %cst_38 [1] : vector<5x5xf32> to vector<5xf32>
    %108 = vector.shape_cast %107 : vector<5xf32> to vector<5x1xf32>
    %109 = tpu.reciprocal %108 {approx = true} : vector<5x1xf32> -> vector<5x1xf32>
    %110 = vector.broadcast %109 : vector<5x1xf32> to vector<5x5xf32>
    %111 = arith.mulf %106, %110 : vector<5x5xf32>
    %112 = arith.truncf %111 : vector<5x5xf32> to vector<5x5xbf16>
    %113 = arith.truncf %96 : vector<5x16xf32> to vector<5x16xbf16>
    %cst_39 = arith.constant dense<0.000000e+00> : vector<5x16xf32>
    %114 = tpu.matmul %112, %113, %cst_39 {dimension_numbers = #tpu.dot_dimension_numbers<[1], [0], [0], [1], [0, 0, 1, 1], [], []>} : vector<5x5xbf16>, vector<5x16xbf16>, vector<5x16xf32> -> vector<5x16xf32>
    %115 = arith.truncf %114 : vector<5x16xf32> to vector<5x16xbf16>
    %c16 = arith.constant 16 : index
    %c0_40 = arith.constant 0 : index
    %116 = vector.load %arg9[%c16, %c0_40] : memref<32x128xbf16, #tpu.memory_space<vmem>>, vector<16x128xbf16>
    %cst_41 = arith.constant dense<0.000000e+00> : vector<5x128xf32>
    %117 = tpu.matmul %115, %116, %cst_41 {dimension_numbers = #tpu.dot_dimension_numbers<[1], [0], [0], [1], [0, 0, 1, 1], [], []>} : vector<5x16xbf16>, vector<16x128xbf16>, vector<5x128xf32> -> vector<5x128xf32>
    %118 = arith.addf %93, %117 : vector<5x128xf32>
    %119 = arith.addf %36, %118 : vector<5x128xf32>
    %c6 = arith.constant 6 : index
    %c0_42 = arith.constant 0 : index
    %120 = vector.load %arg5[%c6, %c0_42] : memref<24x128xf32, #tpu.memory_space<vmem>>, vector<1x128xf32>
    %121 = vector.broadcast %120 : vector<1x128xf32> to vector<5x128xf32>
    %122 = arith.addf %119, %121 : vector<5x128xf32>
    %c7 = arith.constant 7 : index
    %c0_43 = arith.constant 0 : index
    %123 = vector.load %arg5[%c7, %c0_43] : memref<24x128xf32, #tpu.memory_space<vmem>>, vector<1x128xf32>
    %c8 = arith.constant 8 : index
    %c0_44 = arith.constant 0 : index
    %124 = vector.load %arg5[%c8, %c0_44] : memref<24x128xf32, #tpu.memory_space<vmem>>, vector<1x128xf32>
    %cst_45 = arith.constant dense<0.000000e+00> : vector<5xf32>
    %125 = vector.multi_reduction <add>, %122, %cst_45 [1] : vector<5x128xf32> to vector<5xf32>
    %126 = vector.shape_cast %125 : vector<5xf32> to vector<5x1xf32>
    %cst_46 = arith.constant 3.200000e+01 : f32
    %127 = vector.broadcast %cst_46 : f32 to vector<5x1xf32>
    %128 = arith.divf %126, %127 : vector<5x1xf32>
    %129 = arith.mulf %122, %122 : vector<5x128xf32>
    %cst_47 = arith.constant dense<0.000000e+00> : vector<5xf32>
    %130 = vector.multi_reduction <add>, %129, %cst_47 [1] : vector<5x128xf32> to vector<5xf32>
    %131 = vector.shape_cast %130 : vector<5xf32> to vector<5x1xf32>
    %cst_48 = arith.constant 3.200000e+01 : f32
    %132 = vector.broadcast %cst_48 : f32 to vector<5x1xf32>
    %133 = arith.divf %131, %132 : vector<5x1xf32>
    %134 = arith.mulf %128, %128 : vector<5x1xf32>
    %135 = arith.subf %133, %134 : vector<5x1xf32>
    %136 = vector.broadcast %128 : vector<5x1xf32> to vector<5x128xf32>
    %137 = arith.subf %122, %136 : vector<5x128xf32>
    %cst_49 = arith.constant 9.99999974E-6 : f32
    %138 = vector.broadcast %cst_49 : f32 to vector<5x1xf32>
    %139 = arith.addf %135, %138 : vector<5x1xf32>
    %140 = math.rsqrt %139 : vector<5x1xf32>
    %141 = vector.broadcast %140 : vector<5x1xf32> to vector<5x128xf32>
    %142 = arith.mulf %137, %141 : vector<5x128xf32>
    %143 = vector.broadcast %123 : vector<1x128xf32> to vector<5x128xf32>
    %144 = arith.mulf %142, %143 : vector<5x128xf32>
    %145 = vector.broadcast %124 : vector<1x128xf32> to vector<5x128xf32>
    %146 = arith.addf %144, %145 : vector<5x128xf32>
    %c9 = arith.constant 9 : index
    %c0_50 = arith.constant 0 : index
    %147 = vector.load %arg5[%c9, %c0_50] : memref<24x128xf32, #tpu.memory_space<vmem>>, vector<1x128xf32>
    %148 = arith.truncf %146 : vector<5x128xf32> to vector<5x128xbf16>
    %c0_51 = arith.constant 0 : index
    %c0_52 = arith.constant 0 : index
    %149 = vector.load %arg10[%c0_51, %c0_52] : memref<128x128xbf16, #tpu.memory_space<vmem>>, vector<128x128xbf16>
    %cst_53 = arith.constant dense<0.000000e+00> : vector<5x128xf32>
    %150 = tpu.matmul %148, %149, %cst_53 {dimension_numbers = #tpu.dot_dimension_numbers<[1], [0], [0], [1], [0, 0, 1, 1], [], []>} : vector<5x128xbf16>, vector<128x128xbf16>, vector<5x128xf32> -> vector<5x128xf32>
    %151 = vector.broadcast %147 : vector<1x128xf32> to vector<5x128xf32>
    %152 = arith.addf %150, %151 : vector<5x128xf32>
    %153 = arith.mulf %152, %152 : vector<5x128xf32>
    %154 = arith.mulf %152, %153 : vector<5x128xf32>
    %cst_54 = arith.constant 4.471500e-02 : f32
    %155 = vector.broadcast %cst_54 : f32 to vector<5x128xf32>
    %156 = arith.mulf %155, %154 : vector<5x128xf32>
    %157 = arith.addf %152, %156 : vector<5x128xf32>
    %cst_55 = arith.constant 0.797884583 : f32
    %158 = vector.broadcast %cst_55 : f32 to vector<5x128xf32>
    %159 = arith.mulf %158, %157 : vector<5x128xf32>
    %160 = math.tanh %159 : vector<5x128xf32>
    %cst_56 = arith.constant 1.000000e+00 : f32
    %161 = vector.broadcast %cst_56 : f32 to vector<5x128xf32>
    %162 = arith.addf %161, %160 : vector<5x128xf32>
    %cst_57 = arith.constant 5.000000e-01 : f32
    %163 = vector.broadcast %cst_57 : f32 to vector<5x128xf32>
    %164 = arith.mulf %163, %162 : vector<5x128xf32>
    %165 = arith.mulf %152, %164 : vector<5x128xf32>
    %c10 = arith.constant 10 : index
    %c0_58 = arith.constant 0 : index
    %166 = vector.load %arg5[%c10, %c0_58] : memref<24x128xf32, #tpu.memory_space<vmem>>, vector<1x128xf32>
    %167 = arith.truncf %165 : vector<5x128xf32> to vector<5x128xbf16>
    %c0_59 = arith.constant 0 : index
    %c0_60 = arith.constant 0 : index
    %168 = vector.load %arg11[%c0_59, %c0_60] : memref<128x128xbf16, #tpu.memory_space<vmem>>, vector<128x128xbf16>
    %cst_61 = arith.constant dense<0.000000e+00> : vector<5x128xf32>
    %169 = tpu.matmul %167, %168, %cst_61 {dimension_numbers = #tpu.dot_dimension_numbers<[1], [0], [0], [1], [0, 0, 1, 1], [], []>} : vector<5x128xbf16>, vector<128x128xbf16>, vector<5x128xf32> -> vector<5x128xf32>
    %170 = vector.broadcast %166 : vector<1x128xf32> to vector<5x128xf32>
    %171 = arith.addf %169, %170 : vector<5x128xf32>
    %172 = arith.addf %122, %171 : vector<5x128xf32>
    %173 = vector.extract_strided_slice %172 {offsets = [1, 0], sizes = [4, 128], strides = [1, 1]} : vector<5x128xf32> to vector<4x128xf32>
    %c11 = arith.constant 11 : index
    %c0_62 = arith.constant 0 : index
    %174 = vector.load %arg5[%c11, %c0_62] : memref<24x128xf32, #tpu.memory_space<vmem>>, vector<1x128xf32>
    %175 = arith.truncf %173 : vector<4x128xf32> to vector<4x128xbf16>
    %c0_63 = arith.constant 0 : index
    %c0_64 = arith.constant 0 : index
    %176 = vector.load %arg12[%c0_63, %c0_64] : memref<128x128xbf16, #tpu.memory_space<vmem>>, vector<128x128xbf16>
    %cst_65 = arith.constant dense<0.000000e+00> : vector<4x128xf32>
    %177 = tpu.matmul %175, %176, %cst_65 {dimension_numbers = #tpu.dot_dimension_numbers<[1], [0], [0], [1], [0, 0, 1, 1], [], []>} : vector<4x128xbf16>, vector<128x128xbf16>, vector<4x128xf32> -> vector<4x128xf32>
    %178 = vector.broadcast %174 : vector<1x128xf32> to vector<4x128xf32>
    %179 = arith.addf %177, %178 : vector<4x128xf32>
    %180 = arith.mulf %179, %179 : vector<4x128xf32>
    %181 = arith.mulf %179, %180 : vector<4x128xf32>
    %cst_66 = arith.constant 4.471500e-02 : f32
    %182 = vector.broadcast %cst_66 : f32 to vector<4x128xf32>
    %183 = arith.mulf %182, %181 : vector<4x128xf32>
    %184 = arith.addf %179, %183 : vector<4x128xf32>
    %cst_67 = arith.constant 0.797884583 : f32
    %185 = vector.broadcast %cst_67 : f32 to vector<4x128xf32>
    %186 = arith.mulf %185, %184 : vector<4x128xf32>
    %187 = math.tanh %186 : vector<4x128xf32>
    %cst_68 = arith.constant 1.000000e+00 : f32
    %188 = vector.broadcast %cst_68 : f32 to vector<4x128xf32>
    %189 = arith.addf %188, %187 : vector<4x128xf32>
    %cst_69 = arith.constant 5.000000e-01 : f32
    %190 = vector.broadcast %cst_69 : f32 to vector<4x128xf32>
    %191 = arith.mulf %190, %189 : vector<4x128xf32>
    %192 = arith.mulf %179, %191 : vector<4x128xf32>
    %c12 = arith.constant 12 : index
    %c0_70 = arith.constant 0 : index
    %193 = vector.load %arg5[%c12, %c0_70] : memref<24x128xf32, #tpu.memory_space<vmem>>, vector<1x128xf32>
    %194 = arith.truncf %192 : vector<4x128xf32> to vector<4x128xbf16>
    %c0_71 = arith.constant 0 : index
    %c0_72 = arith.constant 0 : index
    %195 = vector.load %arg13[%c0_71, %c0_72] : memref<128x128xbf16, #tpu.memory_space<vmem>>, vector<128x128xbf16>
    %cst_73 = arith.constant dense<0.000000e+00> : vector<4x128xf32>
    %196 = tpu.matmul %194, %195, %cst_73 {dimension_numbers = #tpu.dot_dimension_numbers<[1], [0], [0], [1], [0, 0, 1, 1], [], []>} : vector<4x128xbf16>, vector<128x128xbf16>, vector<4x128xf32> -> vector<4x128xf32>
    %197 = vector.broadcast %193 : vector<1x128xf32> to vector<4x128xf32>
    %198 = arith.addf %196, %197 : vector<4x128xf32>
    %c0_74 = arith.constant 0 : index
    %c0_75 = arith.constant 0 : index
    %c0_76 = arith.constant 0 : index
    %199 = vector.load %arg2[%c0_74, %c0_75, %c0_76] : memref<1x8x128xf32, #tpu.memory_space<vmem>>, vector<1x8x128xf32>
    %200 = vector.shape_cast %199 : vector<1x8x128xf32> to vector<8x128xf32>
    %201 = tpu.concatenate %198, %200 in 0 : vector<4x128xf32>, vector<8x128xf32> -> vector<12x128xf32>
    %c0_77 = arith.constant 0 : index
    %c0_78 = arith.constant 0 : index
    %202 = vector.load %arg4[%c0_77, %c0_78] : memref<16x128xf32, #tpu.memory_space<vmem>>, vector<16x128xf32>
    %203 = vector.extract_strided_slice %202 {offsets = [0, 0], sizes = [12, 16], strides = [1, 1]} : vector<16x128xf32> to vector<12x16xf32>
    %204 = vector.extract_strided_slice %202 {offsets = [0, 16], sizes = [12, 16], strides = [1, 1]} : vector<16x128xf32> to vector<12x16xf32>
    %205 = tpu.iota {dimensions = array<i32: 0>} : vector<12x12xi32>
    %206 = tpu.iota {dimensions = array<i32: 1>} : vector<12x12xi32>
    %207 = arith.cmpi sge, %205, %206 : vector<12x12xi32>
    %cst_79 = arith.constant 0.000000e+00 : f32
    %cst_80 = arith.constant -1.000000e+09 : f32
    %208 = vector.broadcast %cst_79 : f32 to vector<12x12xf32>
    %209 = vector.broadcast %cst_80 : f32 to vector<12x12xf32>
    %210 = arith.select %207, %208, %209 : vector<12x12xi1>, vector<12x12xf32>
    %c0_81 = arith.constant 0 : index
    %c0_82 = arith.constant 0 : index
    %c0_83 = arith.constant 0 : index
    %211 = vector.load %arg3[%c0_81, %c0_82, %c0_83] : memref<1x1x128xf32, #tpu.memory_space<vmem>>, vector<1x1x128xf32>
    %212 = vector.shape_cast %211 : vector<1x1x128xf32> to vector<1x128xf32>
    %213 = vector.extract_strided_slice %212 {offsets = [0, 0], sizes = [1, 12], strides = [1, 1]} : vector<1x128xf32> to vector<1x12xf32>
    %214 = vector.broadcast %213 : vector<1x12xf32> to vector<12x12xf32>
    %215 = arith.addf %210, %214 : vector<12x12xf32>
    %c13 = arith.constant 13 : index
    %c0_84 = arith.constant 0 : index
    %216 = vector.load %arg5[%c13, %c0_84] : memref<24x128xf32, #tpu.memory_space<vmem>>, vector<1x128xf32>
    %217 = arith.mulf %201, %201 : vector<12x128xf32>
    %cst_85 = arith.constant dense<0.000000e+00> : vector<12xf32>
    %218 = vector.multi_reduction <add>, %217, %cst_85 [1] : vector<12x128xf32> to vector<12xf32>
    %219 = vector.shape_cast %218 : vector<12xf32> to vector<12x1xf32>
    %cst_86 = arith.constant 3.200000e+01 : f32
    %220 = vector.broadcast %cst_86 : f32 to vector<12x1xf32>
    %221 = arith.divf %219, %220 : vector<12x1xf32>
    %cst_87 = arith.constant 9.99999997E-7 : f32
    %222 = vector.broadcast %cst_87 : f32 to vector<12x1xf32>
    %223 = arith.addf %221, %222 : vector<12x1xf32>
    %224 = math.rsqrt %223 : vector<12x1xf32>
    %225 = vector.broadcast %224 : vector<12x1xf32> to vector<12x128xf32>
    %226 = arith.mulf %201, %225 : vector<12x128xf32>
    %227 = vector.broadcast %216 : vector<1x128xf32> to vector<12x128xf32>
    %228 = arith.mulf %226, %227 : vector<12x128xf32>
    %229 = arith.truncf %228 : vector<12x128xf32> to vector<12x128xbf16>
    %c0_88 = arith.constant 0 : index
    %c0_89 = arith.constant 0 : index
    %230 = vector.load %arg14[%c0_88, %c0_89] : memref<128x128xbf16, #tpu.memory_space<vmem>>, vector<128x128xbf16>
    %cst_90 = arith.constant dense<0.000000e+00> : vector<12x128xf32>
    %231 = tpu.matmul %229, %230, %cst_90 {dimension_numbers = #tpu.dot_dimension_numbers<[1], [0], [0], [1], [0, 0, 1, 1], [], []>} : vector<12x128xbf16>, vector<128x128xbf16>, vector<12x128xf32> -> vector<12x128xf32>
    %232 = vector.extract_strided_slice %231 {offsets = [0, 0], sizes = [12, 32], strides = [1, 1]} : vector<12x128xf32> to vector<12x32xf32>
    %233 = vector.extract_strided_slice %231 {offsets = [0, 32], sizes = [12, 32], strides = [1, 1]} : vector<12x128xf32> to vector<12x32xf32>
    %234 = vector.extract_strided_slice %231 {offsets = [0, 64], sizes = [12, 32], strides = [1, 1]} : vector<12x128xf32> to vector<12x32xf32>
    %235 = vector.extract_strided_slice %232 {offsets = [0, 0], sizes = [12, 16], strides = [1, 1]} : vector<12x32xf32> to vector<12x16xf32>
    %236 = vector.extract_strided_slice %233 {offsets = [0, 0], sizes = [12, 16], strides = [1, 1]} : vector<12x32xf32> to vector<12x16xf32>
    %237 = vector.extract_strided_slice %234 {offsets = [0, 0], sizes = [12, 16], strides = [1, 1]} : vector<12x32xf32> to vector<12x16xf32>
    %238 = vector.extract_strided_slice %235 {offsets = [0, 8], sizes = [12, 8], strides = [1, 1]} : vector<12x16xf32> to vector<12x8xf32>
    %cst_91 = arith.constant 0.000000e+00 : f32
    %239 = vector.broadcast %cst_91 : f32 to vector<12x8xf32>
    %240 = arith.subf %239, %238 : vector<12x8xf32>
    %241 = vector.extract_strided_slice %235 {offsets = [0, 0], sizes = [12, 8], strides = [1, 1]} : vector<12x16xf32> to vector<12x8xf32>
    %242 = tpu.concatenate %240, %241 in 1 : vector<12x8xf32>, vector<12x8xf32> -> vector<12x16xf32>
    %243 = arith.mulf %235, %203 : vector<12x16xf32>
    %244 = arith.mulf %242, %204 : vector<12x16xf32>
    %245 = arith.addf %243, %244 : vector<12x16xf32>
    %246 = vector.extract_strided_slice %236 {offsets = [0, 8], sizes = [12, 8], strides = [1, 1]} : vector<12x16xf32> to vector<12x8xf32>
    %cst_92 = arith.constant 0.000000e+00 : f32
    %247 = vector.broadcast %cst_92 : f32 to vector<12x8xf32>
    %248 = arith.subf %247, %246 : vector<12x8xf32>
    %249 = vector.extract_strided_slice %236 {offsets = [0, 0], sizes = [12, 8], strides = [1, 1]} : vector<12x16xf32> to vector<12x8xf32>
    %250 = tpu.concatenate %248, %249 in 1 : vector<12x8xf32>, vector<12x8xf32> -> vector<12x16xf32>
    %251 = arith.mulf %236, %203 : vector<12x16xf32>
    %252 = arith.mulf %250, %204 : vector<12x16xf32>
    %253 = arith.addf %251, %252 : vector<12x16xf32>
    %254 = arith.truncf %245 : vector<12x16xf32> to vector<12x16xbf16>
    %255 = arith.truncf %253 : vector<12x16xf32> to vector<12x16xbf16>
    %cst_93 = arith.constant dense<0.000000e+00> : vector<12x12xf32>
    %256 = tpu.matmul %254, %255, %cst_93 {dimension_numbers = #tpu.dot_dimension_numbers<[1], [1], [0], [0], [0, 0, 1, 0], [], []>} : vector<12x16xbf16>, vector<12x16xbf16>, vector<12x12xf32> -> vector<12x12xf32>
    %cst_94 = arith.constant 2.500000e-01 : f32
    %257 = vector.broadcast %cst_94 : f32 to vector<12x12xf32>
    %258 = arith.mulf %256, %257 : vector<12x12xf32>
    %259 = arith.addf %258, %215 : vector<12x12xf32>
    %cst_95 = arith.constant dense<0xFF800000> : vector<12xf32>
    %260 = vector.multi_reduction <maximumf>, %259, %cst_95 [1] : vector<12x12xf32> to vector<12xf32>
    %261 = vector.shape_cast %260 : vector<12xf32> to vector<12x1xf32>
    %262 = vector.broadcast %261 : vector<12x1xf32> to vector<12x12xf32>
    %263 = arith.subf %259, %262 : vector<12x12xf32>
    %264 = math.exp %263 : vector<12x12xf32>
    %cst_96 = arith.constant dense<0.000000e+00> : vector<12xf32>
    %265 = vector.multi_reduction <add>, %264, %cst_96 [1] : vector<12x12xf32> to vector<12xf32>
    %266 = vector.shape_cast %265 : vector<12xf32> to vector<12x1xf32>
    %267 = tpu.reciprocal %266 {approx = true} : vector<12x1xf32> -> vector<12x1xf32>
    %268 = vector.broadcast %267 : vector<12x1xf32> to vector<12x12xf32>
    %269 = arith.mulf %264, %268 : vector<12x12xf32>
    %270 = arith.truncf %269 : vector<12x12xf32> to vector<12x12xbf16>
    %271 = arith.truncf %237 : vector<12x16xf32> to vector<12x16xbf16>
    %cst_97 = arith.constant dense<0.000000e+00> : vector<12x16xf32>
    %272 = tpu.matmul %270, %271, %cst_97 {dimension_numbers = #tpu.dot_dimension_numbers<[1], [0], [0], [1], [0, 0, 1, 1], [], []>} : vector<12x12xbf16>, vector<12x16xbf16>, vector<12x16xf32> -> vector<12x16xf32>
    %273 = arith.truncf %272 : vector<12x16xf32> to vector<12x16xbf16>
    %c0_98 = arith.constant 0 : index
    %c0_99 = arith.constant 0 : index
    %274 = vector.load %arg15[%c0_98, %c0_99] : memref<32x128xbf16, #tpu.memory_space<vmem>>, vector<16x128xbf16>
    %cst_100 = arith.constant dense<0.000000e+00> : vector<12x128xf32>
    %275 = tpu.matmul %273, %274, %cst_100 {dimension_numbers = #tpu.dot_dimension_numbers<[1], [0], [0], [1], [0, 0, 1, 1], [], []>} : vector<12x16xbf16>, vector<16x128xbf16>, vector<12x128xf32> -> vector<12x128xf32>
    %276 = vector.extract_strided_slice %232 {offsets = [0, 16], sizes = [12, 16], strides = [1, 1]} : vector<12x32xf32> to vector<12x16xf32>
    %277 = vector.extract_strided_slice %233 {offsets = [0, 16], sizes = [12, 16], strides = [1, 1]} : vector<12x32xf32> to vector<12x16xf32>
    %278 = vector.extract_strided_slice %234 {offsets = [0, 16], sizes = [12, 16], strides = [1, 1]} : vector<12x32xf32> to vector<12x16xf32>
    %279 = vector.extract_strided_slice %276 {offsets = [0, 8], sizes = [12, 8], strides = [1, 1]} : vector<12x16xf32> to vector<12x8xf32>
    %cst_101 = arith.constant 0.000000e+00 : f32
    %280 = vector.broadcast %cst_101 : f32 to vector<12x8xf32>
    %281 = arith.subf %280, %279 : vector<12x8xf32>
    %282 = vector.extract_strided_slice %276 {offsets = [0, 0], sizes = [12, 8], strides = [1, 1]} : vector<12x16xf32> to vector<12x8xf32>
    %283 = tpu.concatenate %281, %282 in 1 : vector<12x8xf32>, vector<12x8xf32> -> vector<12x16xf32>
    %284 = arith.mulf %276, %203 : vector<12x16xf32>
    %285 = arith.mulf %283, %204 : vector<12x16xf32>
    %286 = arith.addf %284, %285 : vector<12x16xf32>
    %287 = vector.extract_strided_slice %277 {offsets = [0, 8], sizes = [12, 8], strides = [1, 1]} : vector<12x16xf32> to vector<12x8xf32>
    %cst_102 = arith.constant 0.000000e+00 : f32
    %288 = vector.broadcast %cst_102 : f32 to vector<12x8xf32>
    %289 = arith.subf %288, %287 : vector<12x8xf32>
    %290 = vector.extract_strided_slice %277 {offsets = [0, 0], sizes = [12, 8], strides = [1, 1]} : vector<12x16xf32> to vector<12x8xf32>
    %291 = tpu.concatenate %289, %290 in 1 : vector<12x8xf32>, vector<12x8xf32> -> vector<12x16xf32>
    %292 = arith.mulf %277, %203 : vector<12x16xf32>
    %293 = arith.mulf %291, %204 : vector<12x16xf32>
    %294 = arith.addf %292, %293 : vector<12x16xf32>
    %295 = arith.truncf %286 : vector<12x16xf32> to vector<12x16xbf16>
    %296 = arith.truncf %294 : vector<12x16xf32> to vector<12x16xbf16>
    %cst_103 = arith.constant dense<0.000000e+00> : vector<12x12xf32>
    %297 = tpu.matmul %295, %296, %cst_103 {dimension_numbers = #tpu.dot_dimension_numbers<[1], [1], [0], [0], [0, 0, 1, 0], [], []>} : vector<12x16xbf16>, vector<12x16xbf16>, vector<12x12xf32> -> vector<12x12xf32>
    %cst_104 = arith.constant 2.500000e-01 : f32
    %298 = vector.broadcast %cst_104 : f32 to vector<12x12xf32>
    %299 = arith.mulf %297, %298 : vector<12x12xf32>
    %300 = arith.addf %299, %215 : vector<12x12xf32>
    %cst_105 = arith.constant dense<0xFF800000> : vector<12xf32>
    %301 = vector.multi_reduction <maximumf>, %300, %cst_105 [1] : vector<12x12xf32> to vector<12xf32>
    %302 = vector.shape_cast %301 : vector<12xf32> to vector<12x1xf32>
    %303 = vector.broadcast %302 : vector<12x1xf32> to vector<12x12xf32>
    %304 = arith.subf %300, %303 : vector<12x12xf32>
    %305 = math.exp %304 : vector<12x12xf32>
    %cst_106 = arith.constant dense<0.000000e+00> : vector<12xf32>
    %306 = vector.multi_reduction <add>, %305, %cst_106 [1] : vector<12x12xf32> to vector<12xf32>
    %307 = vector.shape_cast %306 : vector<12xf32> to vector<12x1xf32>
    %308 = tpu.reciprocal %307 {approx = true} : vector<12x1xf32> -> vector<12x1xf32>
    %309 = vector.broadcast %308 : vector<12x1xf32> to vector<12x12xf32>
    %310 = arith.mulf %305, %309 : vector<12x12xf32>
    %311 = arith.truncf %310 : vector<12x12xf32> to vector<12x12xbf16>
    %312 = arith.truncf %278 : vector<12x16xf32> to vector<12x16xbf16>
    %cst_107 = arith.constant dense<0.000000e+00> : vector<12x16xf32>
    %313 = tpu.matmul %311, %312, %cst_107 {dimension_numbers = #tpu.dot_dimension_numbers<[1], [0], [0], [1], [0, 0, 1, 1], [], []>} : vector<12x12xbf16>, vector<12x16xbf16>, vector<12x16xf32> -> vector<12x16xf32>
    %314 = arith.truncf %313 : vector<12x16xf32> to vector<12x16xbf16>
    %c16_108 = arith.constant 16 : index
    %c0_109 = arith.constant 0 : index
    %315 = vector.load %arg15[%c16_108, %c0_109] : memref<32x128xbf16, #tpu.memory_space<vmem>>, vector<16x128xbf16>
    %cst_110 = arith.constant dense<0.000000e+00> : vector<12x128xf32>
    %316 = tpu.matmul %314, %315, %cst_110 {dimension_numbers = #tpu.dot_dimension_numbers<[1], [0], [0], [1], [0, 0, 1, 1], [], []>} : vector<12x16xbf16>, vector<16x128xbf16>, vector<12x128xf32> -> vector<12x128xf32>
    %317 = arith.addf %275, %316 : vector<12x128xf32>
    %318 = arith.addf %201, %317 : vector<12x128xf32>
    %c14 = arith.constant 14 : index
    %c0_111 = arith.constant 0 : index
    %319 = vector.load %arg5[%c14, %c0_111] : memref<24x128xf32, #tpu.memory_space<vmem>>, vector<1x128xf32>
    %320 = arith.mulf %318, %318 : vector<12x128xf32>
    %cst_112 = arith.constant dense<0.000000e+00> : vector<12xf32>
    %321 = vector.multi_reduction <add>, %320, %cst_112 [1] : vector<12x128xf32> to vector<12xf32>
    %322 = vector.shape_cast %321 : vector<12xf32> to vector<12x1xf32>
    %cst_113 = arith.constant 3.200000e+01 : f32
    %323 = vector.broadcast %cst_113 : f32 to vector<12x1xf32>
    %324 = arith.divf %322, %323 : vector<12x1xf32>
    %cst_114 = arith.constant 9.99999997E-7 : f32
    %325 = vector.broadcast %cst_114 : f32 to vector<12x1xf32>
    %326 = arith.addf %324, %325 : vector<12x1xf32>
    %327 = math.rsqrt %326 : vector<12x1xf32>
    %328 = vector.broadcast %327 : vector<12x1xf32> to vector<12x128xf32>
    %329 = arith.mulf %318, %328 : vector<12x128xf32>
    %330 = vector.broadcast %319 : vector<1x128xf32> to vector<12x128xf32>
    %331 = arith.mulf %329, %330 : vector<12x128xf32>
    %332 = arith.truncf %331 : vector<12x128xf32> to vector<12x128xbf16>
    %c0_115 = arith.constant 0 : index
    %c0_116 = arith.constant 0 : index
    %333 = vector.load %arg16[%c0_115, %c0_116] : memref<128x128xbf16, #tpu.memory_space<vmem>>, vector<128x128xbf16>
    %cst_117 = arith.constant dense<0.000000e+00> : vector<12x128xf32>
    %334 = tpu.matmul %332, %333, %cst_117 {dimension_numbers = #tpu.dot_dimension_numbers<[1], [0], [0], [1], [0, 0, 1, 1], [], []>} : vector<12x128xbf16>, vector<128x128xbf16>, vector<12x128xf32> -> vector<12x128xf32>
    %335 = vector.extract_strided_slice %334 {offsets = [0, 0], sizes = [12, 64], strides = [1, 1]} : vector<12x128xf32> to vector<12x64xf32>
    %336 = arith.negf %335 : vector<12x64xf32>
    %337 = math.exp %336 : vector<12x64xf32>
    %cst_118 = arith.constant 1.000000e+00 : f32
    %338 = vector.broadcast %cst_118 : f32 to vector<12x64xf32>
    %339 = arith.addf %338, %337 : vector<12x64xf32>
    %340 = arith.divf %338, %339 : vector<12x64xf32>
    %341 = arith.mulf %335, %340 : vector<12x64xf32>
    %342 = vector.extract_strided_slice %334 {offsets = [0, 64], sizes = [12, 64], strides = [1, 1]} : vector<12x128xf32> to vector<12x64xf32>
    %343 = arith.mulf %341, %342 : vector<12x64xf32>
    %344 = arith.truncf %343 : vector<12x64xf32> to vector<12x64xbf16>
    %c0_119 = arith.constant 0 : index
    %c0_120 = arith.constant 0 : index
    %345 = vector.load %arg17[%c0_119, %c0_120] : memref<64x128xbf16, #tpu.memory_space<vmem>>, vector<64x128xbf16>
    %cst_121 = arith.constant dense<0.000000e+00> : vector<12x128xf32>
    %346 = tpu.matmul %344, %345, %cst_121 {dimension_numbers = #tpu.dot_dimension_numbers<[1], [0], [0], [1], [0, 0, 1, 1], [], []>} : vector<12x64xbf16>, vector<64x128xbf16>, vector<12x128xf32> -> vector<12x128xf32>
    %347 = arith.addf %318, %346 : vector<12x128xf32>
    %c15 = arith.constant 15 : index
    %c0_122 = arith.constant 0 : index
    %348 = vector.load %arg5[%c15, %c0_122] : memref<24x128xf32, #tpu.memory_space<vmem>>, vector<1x128xf32>
    %349 = arith.mulf %347, %347 : vector<12x128xf32>
    %cst_123 = arith.constant dense<0.000000e+00> : vector<12xf32>
    %350 = vector.multi_reduction <add>, %349, %cst_123 [1] : vector<12x128xf32> to vector<12xf32>
    %351 = vector.shape_cast %350 : vector<12xf32> to vector<12x1xf32>
    %cst_124 = arith.constant 3.200000e+01 : f32
    %352 = vector.broadcast %cst_124 : f32 to vector<12x1xf32>
    %353 = arith.divf %351, %352 : vector<12x1xf32>
    %cst_125 = arith.constant 9.99999997E-7 : f32
    %354 = vector.broadcast %cst_125 : f32 to vector<12x1xf32>
    %355 = arith.addf %353, %354 : vector<12x1xf32>
    %356 = math.rsqrt %355 : vector<12x1xf32>
    %357 = vector.broadcast %356 : vector<12x1xf32> to vector<12x128xf32>
    %358 = arith.mulf %347, %357 : vector<12x128xf32>
    %359 = vector.broadcast %348 : vector<1x128xf32> to vector<12x128xf32>
    %360 = arith.mulf %358, %359 : vector<12x128xf32>
    %c16_126 = arith.constant 16 : index
    %c0_127 = arith.constant 0 : index
    %361 = vector.load %arg5[%c16_126, %c0_127] : memref<24x128xf32, #tpu.memory_space<vmem>>, vector<1x128xf32>
    %362 = arith.truncf %360 : vector<12x128xf32> to vector<12x128xbf16>
    %c0_128 = arith.constant 0 : index
    %c0_129 = arith.constant 0 : index
    %363 = vector.load %arg18[%c0_128, %c0_129] : memref<128x128xbf16, #tpu.memory_space<vmem>>, vector<128x128xbf16>
    %cst_130 = arith.constant dense<0.000000e+00> : vector<12x128xf32>
    %364 = tpu.matmul %362, %363, %cst_130 {dimension_numbers = #tpu.dot_dimension_numbers<[1], [0], [0], [1], [0, 0, 1, 1], [], []>} : vector<12x128xbf16>, vector<128x128xbf16>, vector<12x128xf32> -> vector<12x128xf32>
    %365 = vector.broadcast %361 : vector<1x128xf32> to vector<12x128xf32>
    %366 = arith.addf %364, %365 : vector<12x128xf32>
    %c0_131 = arith.constant 0 : index
    %c0_132 = arith.constant 0 : index
    %c0_133 = arith.constant 0 : index
    %367 = vector.load %arg19[%c0_131, %c0_132, %c0_133] : memref<1x12x128xf32, #tpu.memory_space<vmem>>, vector<1x12x128xf32>
    %368 = vector.shape_cast %367 : vector<1x12x128xf32> to vector<12x128xf32>
    %369 = vector.shape_cast %366 : vector<12x128xf32> to vector<1x12x128xf32>
    tpu.vector_store %arg19[%c0_131, %c0_132, %c0_133], %369 {strides = array<i32>} : memref<1x12x128xf32, #tpu.memory_space<vmem>>, vector<1x12x128xf32>,
    return
  }
  func.func @transform_0(%arg0: i32) -> (i32, i32, i32) {
    %c0_i32 = arith.constant 0 : i32
    %c0_i32_0 = arith.constant 0 : i32
    %c0_i32_1 = arith.constant 0 : i32
    return %arg0, %c0_i32, %c0_i32_0 : i32, i32, i32
  }
  func.func @transform_1(%arg0: i32) -> (i32, i32, i32) {
    %c0_i32 = arith.constant 0 : i32
    %c0_i32_0 = arith.constant 0 : i32
    %c0_i32_1 = arith.constant 0 : i32
    return %arg0, %c0_i32, %c0_i32_0 : i32, i32, i32
  }
  func.func @transform_2(%arg0: i32) -> (i32, i32, i32) {
    %c0_i32 = arith.constant 0 : i32
    %c0_i32_0 = arith.constant 0 : i32
    %c0_i32_1 = arith.constant 0 : i32
    return %arg0, %c0_i32, %c0_i32_0 : i32, i32, i32
  }
  func.func @transform_3(%arg0: i32) -> (i32, i32) {
    %c0_i32 = arith.constant 0 : i32
    %c0_i32_0 = arith.constant 0 : i32
    %c0_i32_1 = arith.constant 0 : i32
    return %c0_i32, %c0_i32_0 : i32, i32
  }
  func.func @transform_4(%arg0: i32) -> (i32, i32) {
    %c0_i32 = arith.constant 0 : i32
    %c0_i32_0 = arith.constant 0 : i32
    %c0_i32_1 = arith.constant 0 : i32
    return %c0_i32, %c0_i32_0 : i32, i32
  }
  func.func @transform_5(%arg0: i32) -> (i32, i32) {
    %c0_i32 = arith.constant 0 : i32
    %c0_i32_0 = arith.constant 0 : i32
    %c0_i32_1 = arith.constant 0 : i32
    return %c0_i32, %c0_i32_0 : i32, i32
  }
  func.func @transform_6(%arg0: i32) -> (i32, i32) {
    %c0_i32 = arith.constant 0 : i32
    %c0_i32_0 = arith.constant 0 : i32
    %c0_i32_1 = arith.constant 0 : i32
    return %c0_i32, %c0_i32_0 : i32, i32
  }
  func.func @transform_7(%arg0: i32) -> (i32, i32) {
    %c0_i32 = arith.constant 0 : i32
    %c0_i32_0 = arith.constant 0 : i32
    %c0_i32_1 = arith.constant 0 : i32
    return %c0_i32, %c0_i32_0 : i32, i32
  }
  func.func @transform_8(%arg0: i32) -> (i32, i32) {
    %c0_i32 = arith.constant 0 : i32
    %c0_i32_0 = arith.constant 0 : i32
    %c0_i32_1 = arith.constant 0 : i32
    return %c0_i32, %c0_i32_0 : i32, i32
  }
  func.func @transform_9(%arg0: i32) -> (i32, i32) {
    %c0_i32 = arith.constant 0 : i32
    %c0_i32_0 = arith.constant 0 : i32
    %c0_i32_1 = arith.constant 0 : i32
    return %c0_i32, %c0_i32_0 : i32, i32
  }
  func.func @transform_10(%arg0: i32) -> (i32, i32) {
    %c0_i32 = arith.constant 0 : i32
    %c0_i32_0 = arith.constant 0 : i32
    %c0_i32_1 = arith.constant 0 : i32
    return %c0_i32, %c0_i32_0 : i32, i32
  }
  func.func @transform_11(%arg0: i32) -> (i32, i32) {
    %c0_i32 = arith.constant 0 : i32
    %c0_i32_0 = arith.constant 0 : i32
    %c0_i32_1 = arith.constant 0 : i32
    return %c0_i32, %c0_i32_0 : i32, i32
  }
  func.func @transform_12(%arg0: i32) -> (i32, i32) {
    %c0_i32 = arith.constant 0 : i32
    %c0_i32_0 = arith.constant 0 : i32
    %c0_i32_1 = arith.constant 0 : i32
    return %c0_i32, %c0_i32_0 : i32, i32
  }
  func.func @transform_13(%arg0: i32) -> (i32, i32) {
    %c0_i32 = arith.constant 0 : i32
    %c0_i32_0 = arith.constant 0 : i32
    %c0_i32_1 = arith.constant 0 : i32
    return %c0_i32, %c0_i32_0 : i32, i32
  }
  func.func @transform_14(%arg0: i32) -> (i32, i32) {
    %c0_i32 = arith.constant 0 : i32
    %c0_i32_0 = arith.constant 0 : i32
    %c0_i32_1 = arith.constant 0 : i32
    return %c0_i32, %c0_i32_0 : i32, i32
  }
  func.func @transform_15(%arg0: i32) -> (i32, i32) {
    %c0_i32 = arith.constant 0 : i32
    %c0_i32_0 = arith.constant 0 : i32
    %c0_i32_1 = arith.constant 0 : i32
    return %c0_i32, %c0_i32_0 : i32, i32
  }
  func.func @transform_16(%arg0: i32) -> (i32, i32) {
    %c0_i32 = arith.constant 0 : i32
    %c0_i32_0 = arith.constant 0 : i32
    %c0_i32_1 = arith.constant 0 : i32
    return %c0_i32, %c0_i32_0 : i32, i32
  }
  func.func @transform_17(%arg0: i32) -> (i32, i32) {
    %c0_i32 = arith.constant 0 : i32
    %c0_i32_0 = arith.constant 0 : i32
    %c0_i32_1 = arith.constant 0 : i32
    return %c0_i32, %c0_i32_0 : i32, i32
  }
  func.func @transform_18(%arg0: i32) -> (i32, i32, i32) {
    %c0_i32 = arith.constant 0 : i32
    %c0_i32_0 = arith.constant 0 : i32
    %c0_i32_1 = arith.constant 0 : i32
    return %arg0, %c0_i32, %c0_i32_0 : i32, i32, i32
  }
}

</mosaic_0001>

<llo_original>
// kernel: llava_forward.1
$region0: #{llava_forward.1}
  #allocation0 [shape = 'u32[]', space=smem, size = 0x4, offset = 0x4, fixed_abs, tag = 'smem constant byte address 0x4 - core index']
  #allocation1 [shape = 'u32[144,128]{1,0:T(1,128)}', space=vmem, size = 0x12000, scoped, tag = 'internal scratch']
  %s0 = inlined_call_operand.vmem [shape: f32[2,4,256], index: 0, kind: input, shape index: {}]
  %s1 = inlined_call_operand.vmem [shape: f32[2,8,128], index: 1, kind: input, shape index: {}]
  %s2 = inlined_call_operand.vmem [shape: f32[2,1,128], index: 2, kind: input, shape index: {}]
  %s3 = inlined_call_operand.vmem [shape: f32[16,128], index: 3, kind: input, shape index: {}]
  %s4 = inlined_call_operand.vmem [shape: f32[24,128], index: 4, kind: input, shape index: {}]
  %s5 = inlined_call_operand.vmem [shape: f32[8,128], index: 5, kind: input, shape index: {}]
  %s6 = inlined_call_operand.vmem [shape: bf16[256,128], index: 6, kind: input, shape index: {}]
  %s7 = inlined_call_operand.vmem [shape: bf16[128,128], index: 7, kind: input, shape index: {}]
  %s8 = inlined_call_operand.vmem [shape: bf16[32,128], index: 8, kind: input, shape index: {}]
  %s9 = inlined_call_operand.vmem [shape: bf16[128,128], index: 9, kind: input, shape index: {}]
  %s10 = inlined_call_operand.vmem [shape: bf16[128,128], index: 10, kind: input, shape index: {}]
  %s11 = inlined_call_operand.vmem [shape: bf16[128,128], index: 11, kind: input, shape index: {}]
  %s12 = inlined_call_operand.vmem [shape: bf16[128,128], index: 12, kind: input, shape index: {}]
  %s13 = inlined_call_operand.vmem [shape: bf16[128,128], index: 13, kind: input, shape index: {}]
  %s14 = inlined_call_operand.vmem [shape: bf16[32,128], index: 14, kind: input, shape index: {}]
  %s15 = inlined_call_operand.vmem [shape: bf16[128,128], index: 15, kind: input, shape index: {}]
  %s16 = inlined_call_operand.vmem [shape: bf16[64,128], index: 16, kind: input, shape index: {}]
  %s17 = inlined_call_operand.vmem [shape: bf16[128,128], index: 17, kind: input, shape index: {}]
  %s18 = inlined_call_operand.vmem [shape: f32[2,12,128], index: 18, kind: output, shape index: {}]
  %s19 = sld [smem:[#allocation0]]
  $region105: #{llava_forward.1} parent=0
    _
  %s21 = ssub.s32 1, %s19
  %s22 = scalar_select 0, %s21, %s19
  loop: start=0, step=1, limit=4
  $region2: #{llava_forward.1} parent=0 // loop_pre_header
    _
  $region3: #{llava_forward.1} parent=0 // loop_header
    %s24 = sphi 0, %s28
    %p25 = scmp.ge.s32.totalorder %s24, 4
    %s34 = sphi 0, %s36
    %s37 = sphi 0, %s34
    %s38 = sphi 0, %s37
    %s54 = sphi 0, %s38
    %s60 = sphi 0, %s62
    %s63 = sphi 0, %s60
    %s64 = sphi 0, %s63
    %s80 = sphi 0, %s64
    %s86 = sphi 0, %s88
    %s89 = sphi 0, %s86
    %s90 = sphi 0, %s89
    %s106 = sphi 0, %s90
    %s110 = sphi 0, %s110
    %s112 = sphi 0, %s110
    %s113 = sphi 0, %s112
    %s127 = sphi 0, %s113
    %s131 = sphi 0, %s131
    %s133 = sphi 0, %s131
    %s134 = sphi 0, %s133
    %s148 = sphi 0, %s134
    %s152 = sphi 0, %s152
    %s154 = sphi 0, %s152
    %s155 = sphi 0, %s154
    %s169 = sphi 0, %s155
    %s173 = sphi 0, %s173
    %s175 = sphi 0, %s173
    %s176 = sphi 0, %s175
    %s190 = sphi 0, %s176
    %s194 = sphi 0, %s194
    %s196 = sphi 0, %s194
    %s197 = sphi 0, %s196
    %s211 = sphi 0, %s197
    %s215 = sphi 0, %s215
    %s217 = sphi 0, %s215
    %s218 = sphi 0, %s217
    %s232 = sphi 0, %s218
    %s236 = sphi 0, %s236
    %s238 = sphi 0, %s236
    %s239 = sphi 0, %s238
    %s253 = sphi 0, %s239
    %s257 = sphi 0, %s257
    %s259 = sphi 0, %s257
    %s260 = sphi 0, %s259
    %s274 = sphi 0, %s260
    %s278 = sphi 0, %s278
    %s280 = sphi 0, %s278
    %s281 = sphi 0, %s280
    %s295 = sphi 0, %s281
    %s299 = sphi 0, %s299
    %s301 = sphi 0, %s299
    %s302 = sphi 0, %s301
    %s316 = sphi 0, %s302
    %s320 = sphi 0, %s320
    %s322 = sphi 0, %s320
    %s323 = sphi 0, %s322
    %s337 = sphi 0, %s323
    %s341 = sphi 0, %s341
    %s343 = sphi 0, %s341
    %s344 = sphi 0, %s343
    %s358 = sphi 0, %s344
    %s362 = sphi 0, %s362
    %s364 = sphi 0, %s362
    %s365 = sphi 0, %s364
    %s379 = sphi 0, %s365
    %s383 = sphi 0, %s383
    %s385 = sphi 0, %s383
    %s386 = sphi 0, %s385
    %s400 = sphi 0, %s386
    %s404 = sphi 0, %s404
    %s406 = sphi 0, %s404
    %s407 = sphi 0, %s406
    %s421 = sphi 0, %s407
    %s427 = sphi 0, %s429
    %s430 = sphi 0, %s427
    %s431 = sphi 0, %s430
    %s447 = sphi 0, %s431
  $region4: #{llava_forward.1} parent=0 // loop_header_branch
    %27 = sbr.rel (%p25) target = $region8
  $region5: #{llava_forward.1} parent=0 // loop_body
    %s29 = ssub.s32 %s24, 1
    %s30 = ssub.s32 %s24, 2
    %s31 = sadd.s32 %s24, 1
    %s32 = ssub.s32 %s24, %s31
    %p33 = scmp.eq.s32.totalorder %s32, 0
    %s35 = sadd.s32 %s34, 1
    %s36 = scalar_select %p33, %s34, %s35
    %p39 = pneg %p33
    %p40 = scmp.eq.s32.totalorder %s24, 1
    %p41 = por %p39, %p40
    %p42 = scmp.ne.s32.totalorder %s34, %s37
    %p43 = scmp.eq.s32.totalorder %s24, 0
    %p44 = por %p42, %p43
    %p45 = scmp.ne.s32.totalorder %s34, %s37
    %p46 = scmp.eq.s32.totalorder %s29, 1
    %p47 = por %p45, %p46
    %p48 = scmp.ne.s32.totalorder %s37, %s38
    %p49 = scmp.eq.s32.totalorder %s29, 0
    %p50 = por %p48, %p49
    %p51 = scmp.ne.s32.totalorder %s37, %s38
    %p52 = scmp.eq.s32.totalorder %s30, 1
    %p53 = por %p51, %p52
    %p55 = scmp.ne.s32.totalorder %s38, %s54
    %p56 = scmp.eq.s32.totalorder %s30, 0
    %p57 = por %p55, %p56
    %s58 = ssub.s32 %s24, %s31
    %p59 = scmp.eq.s32.totalorder %s58, 0
    %s61 = sadd.s32 %s60, 1
    %s62 = scalar_select %p59, %s60, %s61
    %p65 = pneg %p59
    %p66 = scmp.eq.s32.totalorder %s24, 1
    %p67 = por %p65, %p66
    %p68 = scmp.ne.s32.totalorder %s60, %s63
    %p69 = scmp.eq.s32.totalorder %s24, 0
    %p70 = por %p68, %p69
    %p71 = scmp.ne.s32.totalorder %s60, %s63
    %p72 = scmp.eq.s32.totalorder %s29, 1
    %p73 = por %p71, %p72
    %p74 = scmp.ne.s32.totalorder %s63, %s64
    %p75 = scmp.eq.s32.totalorder %s29, 0
    %p76 = por %p74, %p75
    %p77 = scmp.ne.s32.totalorder %s63, %s64
    %p78 = scmp.eq.s32.totalorder %s30, 1
    %p79 = por %p77, %p78
    %p81 = scmp.ne.s32.totalorder %s64, %s80
    %p82 = scmp.eq.s32.totalorder %s30, 0
    %p83 = por %p81, %p82
    %s84 = ssub.s32 %s24, %s31
    %p85 = scmp.eq.s32.totalorder %s84, 0
    %s87 = sadd.s32 %s86, 1
    %s88 = scalar_select %p85, %s86, %s87
    %p91 = pneg %p85
    %p92 = scmp.eq.s32.totalorder %s24, 1
    %p93 = por %p91, %p92
    %p94 = scmp.ne.s32.totalorder %s86, %s89
    %p95 = scmp.eq.s32.totalorder %s24, 0
    %p96 = por %p94, %p95
    %p97 = scmp.ne.s32.totalorder %s86, %s89
    %p98 = scmp.eq.s32.totalorder %s29, 1
    %p99 = por %p97, %p98
    %p100 = scmp.ne.s32.totalorder %s89, %s90
    %p101 = scmp.eq.s32.totalorder %s29, 0
    %p102 = por %p100, %p101
    %p103 = scmp.ne.s32.totalorder %s89, %s90
    %p104 = scmp.eq.s32.totalorder %s30, 1
    %p105 = por %p103, %p104
    %p107 = scmp.ne.s32.totalorder %s90, %s106
    %p108 = scmp.eq.s32.totalorder %s30, 0
    %p109 = por %p107, %p108
    %s111 = sadd.s32 %s110, 1
    %p114 = scmp.eq.s32.totalorder %s24, 1
    %p115 = scmp.ne.s32.totalorder %s110, %s112
    %p116 = scmp.eq.s32.totalorder %s24, 0
    %p117 = por %p115, %p116
    %p118 = scmp.ne.s32.totalorder %s110, %s112
    %p119 = scmp.eq.s32.totalorder %s29, 1
    %p120 = por %p118, %p119
    %p121 = scmp.ne.s32.totalorder %s112, %s113
    %p122 = scmp.eq.s32.totalorder %s29, 0
    %p123 = por %p121, %p122
    %p124 = scmp.ne.s32.totalorder %s112, %s113
    %p125 = scmp.eq.s32.totalorder %s30, 1
    %p126 = por %p124, %p125
    %p128 = scmp.ne.s32.totalorder %s113, %s127
    %p129 = scmp.eq.s32.totalorder %s30, 0
    %p130 = por %p128, %p129
    %s132 = sadd.s32 %s131, 1
    %p135 = scmp.eq.s32.totalorder %s24, 1
    %p136 = scmp.ne.s32.totalorder %s131, %s133
    %p137 = scmp.eq.s32.totalorder %s24, 0
    %p138 = por %p136, %p137
    %p139 = scmp.ne.s32.totalorder %s131, %s133
    %p140 = scmp.eq.s32.totalorder %s29, 1
    %p141 = por %p139, %p140
    %p142 = scmp.ne.s32.totalorder %s133, %s134
    %p143 = scmp.eq.s32.totalorder %s29, 0
    %p144 = por %p142, %p143
    %p145 = scmp.ne.s32.totalorder %s133, %s134
    %p146 = scmp.eq.s32.totalorder %s30, 1
    %p147 = por %p145, %p146
    %p149 = scmp.ne.s32.totalorder %s134, %s148
    %p150 = scmp.eq.s32.totalorder %s30, 0
    %p151 = por %p149, %p150
    %s153 = sadd.s32 %s152, 1
    %p156 = scmp.eq.s32.totalorder %s24, 1
    %p157 = scmp.ne.s32.totalorder %s152, %s154
    %p158 = scmp.eq.s32.totalorder %s24, 0
    %p159 = por %p157, %p158
    %p160 = scmp.ne.s32.totalorder %s152, %s154
    %p161 = scmp.eq.s32.totalorder %s29, 1
    %p162 = por %p160, %p161
    %p163 = scmp.ne.s32.totalorder %s154, %s155
    %p164 = scmp.eq.s32.totalorder %s29, 0
    %p165 = por %p163, %p164
    %p166 = scmp.ne.s32.totalorder %s154, %s155
    %p167 = scmp.eq.s32.totalorder %s30, 1
    %p168 = por %p166, %p167
    %p170 = scmp.ne.s32.totalorder %s155, %s169
    %p171 = scmp.eq.s32.totalorder %s30, 0
    %p172 = por %p170, %p171
    %s174 = sadd.s32 %s173, 1
    %p177 = scmp.eq.s32.totalorder %s24, 1
    %p178 = scmp.ne.s32.totalorder %s173, %s175
    %p179 = scmp.eq.s32.totalorder %s24, 0
    %p180 = por %p178, %p179
    %p181 = scmp.ne.s32.totalorder %s173, %s175
    %p182 = scmp.eq.s32.totalorder %s29, 1
    %p183 = por %p181, %p182
    %p184 = scmp.ne.s32.totalorder %s175, %s176
    %p185 = scmp.eq.s32.totalorder %s29, 0
    %p186 = por %p184, %p185
    %p187 = scmp.ne.s32.totalorder %s175, %s176
    %p188 = scmp.eq.s32.totalorder %s30, 1
    %p189 = por %p187, %p188
    %p191 = scmp.ne.s32.totalorder %s176, %s190
    %p192 = scmp.eq.s32.totalorder %s30, 0
    %p193 = por %p191, %p192
    %s195 = sadd.s32 %s194, 1
    %p198 = scmp.eq.s32.totalorder %s24, 1
    %p199 = scmp.ne.s32.totalorder %s194, %s196
    %p200 = scmp.eq.s32.totalorder %s24, 0
    %p201 = por %p199, %p200
    %p202 = scmp.ne.s32.totalorder %s194, %s196
    %p203 = scmp.eq.s32.totalorder %s29, 1
    %p204 = por %p202, %p203
    %p205 = scmp.ne.s32.totalorder %s196, %s197
    %p206 = scmp.eq.s32.totalorder %s29, 0
    %p207 = por %p205, %p206
    %p208 = scmp.ne.s32.totalorder %s196, %s197
    %p209 = scmp.eq.s32.totalorder %s30, 1
    %p210 = por %p208, %p209
    %p212 = scmp.ne.s32.totalorder %s197, %s211
    %p213 = scmp.eq.s32.totalorder %s30, 0
    %p214 = por %p212, %p213
    %s216 = sadd.s32 %s215, 1
    %p219 = scmp.eq.s32.totalorder %s24, 1
    %p220 = scmp.ne.s32.totalorder %s215, %s217
    %p221 = scmp.eq.s32.totalorder %s24, 0
    %p222 = por %p220, %p221
    %p223 = scmp.ne.s32.totalorder %s215, %s217
    %p224 = scmp.eq.s32.totalorder %s29, 1
    %p225 = por %p223, %p224
    %p226 = scmp.ne.s32.totalorder %s217, %s218
    %p227 = scmp.eq.s32.totalorder %s29, 0
    %p228 = por %p226, %p227
    %p229 = scmp.ne.s32.totalorder %s217, %s218
    %p230 = scmp.eq.s32.totalorder %s30, 1
    %p231 = por %p229, %p230
    %p233 = scmp.ne.s32.totalorder %s218, %s232
    %p234 = scmp.eq.s32.totalorder %s30, 0
    %p235 = por %p233, %p234
    %s237 = sadd.s32 %s236, 1
    %p240 = scmp.eq.s32.totalorder %s24, 1
    %p241 = scmp.ne.s32.totalorder %s236, %s238
    %p242 = scmp.eq.s32.totalorder %s24, 0
    %p243 = por %p241, %p242
    %p244 = scmp.ne.s32.totalorder %s236, %s238
    %p245 = scmp.eq.s32.totalorder %s29, 1
    %p246 = por %p244, %p245
    %p247 = scmp.ne.s32.totalorder %s238, %s239
    %p248 = scmp.eq.s32.totalorder %s29, 0
    %p249 = por %p247, %p248
    %p250 = scmp.ne.s32.totalorder %s238, %s239
    %p251 = scmp.eq.s32.totalorder %s30, 1
    %p252 = por %p250, %p251
    %p254 = scmp.ne.s32.totalorder %s239, %s253
    %p255 = scmp.eq.s32.totalorder %s30, 0
    %p256 = por %p254, %p255
    %s258 = sadd.s32 %s257, 1
    %p261 = scmp.eq.s32.totalorder %s24, 1
    %p262 = scmp.ne.s32.totalorder %s257, %s259
    %p263 = scmp.eq.s32.totalorder %s24, 0
    %p264 = por %p262, %p263
    %p265 = scmp.ne.s32.totalorder %s257, %s259
    %p266 = scmp.eq.s32.totalorder %s29, 1
    %p267 = por %p265, %p266
    %p268 = scmp.ne.s32.totalorder %s259, %s260
    %p269 = scmp.eq.s32.totalorder %s29, 0
    %p270 = por %p268, %p269
    %p271 = scmp.ne.s32.totalorder %s259, %s260
    %p272 = scmp.eq.s32.totalorder %s30, 1
    %p273 = por %p271, %p272
    %p275 = scmp.ne.s32.totalorder %s260, %s274
    %p276 = scmp.eq.s32.totalorder %s30, 0
    %p277 = por %p275, %p276
    %s279 = sadd.s32 %s278, 1
    %p282 = scmp.eq.s32.totalorder %s24, 1
    %p283 = scmp.ne.s32.totalorder %s278, %s280
    %p284 = scmp.eq.s32.totalorder %s24, 0
    %p285 = por %p283, %p284
    %p286 = scmp.ne.s32.totalorder %s278, %s280
    %p287 = scmp.eq.s32.totalorder %s29, 1
    %p288 = por %p286, %p287
    %p289 = scmp.ne.s32.totalorder %s280, %s281
    %p290 = scmp.eq.s32.totalorder %s29, 0
    %p291 = por %p289, %p290
    %p292 = scmp.ne.s32.totalorder %s280, %s281
    %p293 = scmp.eq.s32.totalorder %s30, 1
    %p294 = por %p292, %p293
    %p296 = scmp.ne.s32.totalorder %s281, %s295
    %p297 = scmp.eq.s32.totalorder %s30, 0
    %p298 = por %p296, %p297
    %s300 = sadd.s32 %s299, 1
    %p303 = scmp.eq.s32.totalorder %s24, 1
    %p304 = scmp.ne.s32.totalorder %s299, %s301
    %p305 = scmp.eq.s32.totalorder %s24, 0
    %p306 = por %p304, %p305
    %p307 = scmp.ne.s32.totalorder %s299, %s301
    %p308 = scmp.eq.s32.totalorder %s29, 1
    %p309 = por %p307, %p308
    %p310 = scmp.ne.s32.totalorder %s301, %s302
    %p311 = scmp.eq.s32.totalorder %s29, 0
    %p312 = por %p310, %p311
    %p313 = scmp.ne.s32.totalorder %s301, %s302
    %p314 = scmp.eq.s32.totalorder %s30, 1
    %p315 = por %p313, %p314
    %p317 = scmp.ne.s32.totalorder %s302, %s316
    %p318 = scmp.eq.s32.totalorder %s30, 0
    %p319 = por %p317, %p318
    %s321 = sadd.s32 %s320, 1
    %p324 = scmp.eq.s32.totalorder %s24, 1
    %p325 = scmp.ne.s32.totalorder %s320, %s322
    %p326 = scmp.eq.s32.totalorder %s24, 0
    %p327 = por %p325, %p326
    %p328 = scmp.ne.s32.totalorder %s320, %s322
    %p329 = scmp.eq.s32.totalorder %s29, 1
    %p330 = por %p328, %p329
    %p331 = scmp.ne.s32.totalorder %s322, %s323
    %p332 = scmp.eq.s32.totalorder %s29, 0
    %p333 = por %p331, %p332
    %p334 = scmp.ne.s32.totalorder %s322, %s323
    %p335 = scmp.eq.s32.totalorder %s30, 1
    %p336 = por %p334, %p335
    %p338 = scmp.ne.s32.totalorder %s323, %s337
    %p339 = scmp.eq.s32.totalorder %s30, 0
    %p340 = por %p338, %p339
    %s342 = sadd.s32 %s341, 1
    %p345 = scmp.eq.s32.totalorder %s24, 1
    %p346 = scmp.ne.s32.totalorder %s341, %s343
    %p347 = scmp.eq.s32.totalorder %s24, 0
    %p348 = por %p346, %p347
    %p349 = scmp.ne.s32.totalorder %s341, %s343
    %p350 = scmp.eq.s32.totalorder %s29, 1
    %p351 = por %p349, %p350
    %p352 = scmp.ne.s32.totalorder %s343, %s344
    %p353 = scmp.eq.s32.totalorder %s29, 0
    %p354 = por %p352, %p353
    %p355 = scmp.ne.s32.totalorder %s343, %s344
    %p356 = scmp.eq.s32.totalorder %s30, 1
    %p357 = por %p355, %p356
    %p359 = scmp.ne.s32.totalorder %s344, %s358
    %p360 = scmp.eq.s32.totalorder %s30, 0
    %p361 = por %p359, %p360
    %s363 = sadd.s32 %s362, 1
    %p366 = scmp.eq.s32.totalorder %s24, 1
    %p367 = scmp.ne.s32.totalorder %s362, %s364
    %p368 = scmp.eq.s32.totalorder %s24, 0
    %p369 = por %p367, %p368
    %p370 = scmp.ne.s32.totalorder %s362, %s364
    %p371 = scmp.eq.s32.totalorder %s29, 1
    %p372 = por %p370, %p371
    %p373 = scmp.ne.s32.totalorder %s364, %s365
    %p374 = scmp.eq.s32.totalorder %s29, 0
    %p375 = por %p373, %p374
    %p376 = scmp.ne.s32.totalorder %s364, %s365
    %p377 = scmp.eq.s32.totalorder %s30, 1
    %p378 = por %p376, %p377
    %p380 = scmp.ne.s32.totalorder %s365, %s379
    %p381 = scmp.eq.s32.totalorder %s30, 0
    %p382 = por %p380, %p381
    %s384 = sadd.s32 %s383, 1
    %p387 = scmp.eq.s32.totalorder %s24, 1
    %p388 = scmp.ne.s32.totalorder %s383, %s385
    %p389 = scmp.eq.s32.totalorder %s24, 0
    %p390 = por %p388, %p389
    %p391 = scmp.ne.s32.totalorder %s383, %s385
    %p392 = scmp.eq.s32.totalorder %s29, 1
    %p393 = por %p391, %p392
    %p394 = scmp.ne.s32.totalorder %s385, %s386
    %p395 = scmp.eq.s32.totalorder %s29, 0
    %p396 = por %p394, %p395
    %p397 = scmp.ne.s32.totalorder %s385, %s386
    %p398 = scmp.eq.s32.totalorder %s30, 1
    %p399 = por %p397, %p398
    %p401 = scmp.ne.s32.totalorder %s386, %s400
    %p402 = scmp.eq.s32.totalorder %s30, 0
    %p403 = por %p401, %p402
    %s405 = sadd.s32 %s404, 1
    %p408 = scmp.eq.s32.totalorder %s24, 1
    %p409 = scmp.ne.s32.totalorder %s404, %s406
    %p410 = scmp.eq.s32.totalorder %s24, 0
    %p411 = por %p409, %p410
    %p412 = scmp.ne.s32.totalorder %s404, %s406
    %p413 = scmp.eq.s32.totalorder %s29, 1
    %p414 = por %p412, %p413
    %p415 = scmp.ne.s32.totalorder %s406, %s407
    %p416 = scmp.eq.s32.totalorder %s29, 0
    %p417 = por %p415, %p416
    %p418 = scmp.ne.s32.totalorder %s406, %s407
    %p419 = scmp.eq.s32.totalorder %s30, 1
    %p420 = por %p418, %p419
    %p422 = scmp.ne.s32.totalorder %s407, %s421
    %p423 = scmp.eq.s32.totalorder %s30, 0
    %p424 = por %p422, %p423
    %s425 = ssub.s32 %s24, %s31
    %p426 = scmp.eq.s32.totalorder %s425, 0
    %s428 = sadd.s32 %s427, 1
    %s429 = scalar_select %p426, %s427, %s428
    %p432 = pneg %p426
    %p433 = scmp.eq.s32.totalorder %s24, 1
    %p434 = por %p432, %p433
    %p435 = scmp.ne.s32.totalorder %s427, %s430
    %p436 = scmp.eq.s32.totalorder %s24, 0
    %p437 = por %p435, %p436
    %p438 = scmp.ne.s32.totalorder %s427, %s430
    %p439 = scmp.eq.s32.totalorder %s29, 1
    %p440 = por %p438, %p439
    %p441 = scmp.ne.s32.totalorder %s430, %s431
    %p442 = scmp.eq.s32.totalorder %s29, 0
    %p443 = por %p441, %p442
    %p444 = scmp.ne.s32.totalorder %s430, %s431
    %p445 = scmp.eq.s32.totalorder %s30, 1
    %p446 = por %p444, %p445
    %p448 = scmp.ne.s32.totalorder %s431, %s447
    %p449 = scmp.eq.s32.totalorder %s30, 0
    %p450 = por %p448, %p449
    %p451 = scmp.le.s32.totalorder 1, %s24
    %p452 = scmp.lt.s32.totalorder %s24, 3
    %p453 = pnand %p451, %p452
    %p454 = pneg %p453
    // Predicated region
    $region9: #{llava_forward.1} parent=5 // pred_check
      _
    $region10: #{llava_forward.1} parent=5 // pred_check_branch
      %456 = sbr.rel (%p453) target = $region12
    $region11: #{llava_forward.1} parent=5 // pred_region
      %s457 = ssub.s32 %s24, 1
      // Predicated region
      $region13: #{llava_forward.1} parent=11 // pred_check
        %p458 = pneg %p123
      $region14: #{llava_forward.1} parent=11 // pred_check_branch
        %460 = sbr.rel (%p458) target = $region16
      $region15: #{llava_forward.1} parent=11 // pred_region
        _
      $region16: #{llava_forward.1} parent=11 // pred_fallthru
        _
      // Predicated region
      $region17: #{llava_forward.1} parent=11 // pred_check
        %p461 = pneg %p144
      $region18: #{llava_forward.1} parent=11 // pred_check_branch
        %463 = sbr.rel (%p461) target = $region20
      $region19: #{llava_forward.1} parent=11 // pred_region
        _
      $region20: #{llava_forward.1} parent=11 // pred_fallthru
        _
      // Predicated region
      $region21: #{llava_forward.1} parent=11 // pred_check
        %p464 = pneg %p165
      $region22: #{llava_forward.1} parent=11 // pred_check_branch
        %466 = sbr.rel (%p464) target = $region24
      $region23: #{llava_forward.1} parent=11 // pred_region
        _
      $region24: #{llava_forward.1} parent=11 // pred_fallthru
        _
      // Predicated region
      $region25: #{llava_forward.1} parent=11 // pred_check
        %p467 = pneg %p186
      $region26: #{llava_forward.1} parent=11 // pred_check_branch
        %469 = sbr.rel (%p467) target = $region28
      $region27: #{llava_forward.1} parent=11 // pred_region
        _
      $region28: #{llava_forward.1} parent=11 // pred_fallthru
        _
      // Predicated region
      $region29: #{llava_forward.1} parent=11 // pred_check
        %p470 = pneg %p207
      $region30: #{llava_forward.1} parent=11 // pred_check_branch
        %472 = sbr.rel (%p470) target = $region32
      $region31: #{llava_forward.1} parent=11 // pred_region
        _
      $region32: #{llava_forward.1} parent=11 // pred_fallthru
        _
      // Predicated region
      $region33: #{llava_forward.1} parent=11 // pred_check
        %p473 = pneg %p228
      $region34: #{llava_forward.1} parent=11 // pred_check_branch
        %475 = sbr.rel (%p473) target = $region36
      $region35: #{llava_forward.1} parent=11 // pred_region
        _
      $region36: #{llava_forward.1} parent=11 // pred_fallthru
        _
      // Predicated region
      $region37: #{llava_forward.1} parent=11 // pred_check
        %p476 = pneg %p249
      $region38: #{llava_forward.1} parent=11 // pred_check_branch
        %478 = sbr.rel (%p476) target = $region40
      $region39: #{llava_forward.1} parent=11 // pred_region
        _
      $region40: #{llava_forward.1} parent=11 // pred_fallthru
        _
      // Predicated region
      $region41: #{llava_forward.1} parent=11 // pred_check
        %p479 = pneg %p270
      $region42: #{llava_forward.1} parent=11 // pred_check_branch
        %481 = sbr.rel (%p479) target = $region44
      $region43: #{llava_forward.1} parent=11 // pred_region
        _
      $region44: #{llava_forward.1} parent=11 // pred_fallthru
        _
      // Predicated region
      $region45: #{llava_forward.1} parent=11 // pred_check
        %p482 = pneg %p291
      $region46: #{llava_forward.1} parent=11 // pred_check_branch
        %484 = sbr.rel (%p482) target = $region48
      $region47: #{llava_forward.1} parent=11 // pred_region
        _
      $region48: #{llava_forward.1} parent=11 // pred_fallthru
        _
      // Predicated region
      $region49: #{llava_forward.1} parent=11 // pred_check
        %p485 = pneg %p312
      $region50: #{llava_forward.1} parent=11 // pred_check_branch
        %487 = sbr.rel (%p485) target = $region52
      $region51: #{llava_forward.1} parent=11 // pred_region
        _
      $region52: #{llava_forward.1} parent=11 // pred_fallthru
        _
      // Predicated region
      $region53: #{llava_forward.1} parent=11 // pred_check
        %p488 = pneg %p333
      $region54: #{llava_forward.1} parent=11 // pred_check_branch
        %490 = sbr.rel (%p488) target = $region56
      $region55: #{llava_forward.1} parent=11 // pred_region
        _
      $region56: #{llava_forward.1} parent=11 // pred_fallthru
        _
      // Predicated region
      $region57: #{llava_forward.1} parent=11 // pred_check
        %p491 = pneg %p354
      $region58: #{llava_forward.1} parent=11 // pred_check_branch
        %493 = sbr.rel (%p491) target = $region60
      $region59: #{llava_forward.1} parent=11 // pred_region
        _
      $region60: #{llava_forward.1} parent=11 // pred_fallthru
        _
      // Predicated region
      $region61: #{llava_forward.1} parent=11 // pred_check
        %p494 = pneg %p375
      $region62: #{llava_forward.1} parent=11 // pred_check_branch
        %496 = sbr.rel (%p494) target = $region64
      $region63: #{llava_forward.1} parent=11 // pred_region
        _
      $region64: #{llava_forward.1} parent=11 // pred_fallthru
        _
      // Predicated region
      $region65: #{llava_forward.1} parent=11 // pred_check
        %p497 = pneg %p396
      $region66: #{llava_forward.1} parent=11 // pred_check_branch
        %499 = sbr.rel (%p497) target = $region68
      $region67: #{llava_forward.1} parent=11 // pred_region
        _
      $region68: #{llava_forward.1} parent=11 // pred_fallthru
        _
      // Predicated region
      $region69: #{llava_forward.1} parent=11 // pred_check
        %p500 = pneg %p417
      $region70: #{llava_forward.1} parent=11 // pred_check_branch
        %502 = sbr.rel (%p500) target = $region72
      $region71: #{llava_forward.1} parent=11 // pred_region
        _
      $region72: #{llava_forward.1} parent=11 // pred_fallthru
        _
    $region12: #{llava_forward.1} parent=5 // pred_fallthru
      _
    %p503 = scmp.lt.s32.totalorder %s24, 2
    // Predicated region
    $region73: #{llava_forward.1} parent=5 // pred_check
      %p504 = pneg %p503
    $region74: #{llava_forward.1} parent=5 // pred_check_branch
      %506 = sbr.rel (%p504) target = $region76
    $region75: #{llava_forward.1} parent=5 // pred_region
      // Predicated region
      $region77: #{llava_forward.1} parent=75 // pred_check
        %p507 = pneg %p44
      $region78: #{llava_forward.1} parent=75 // pred_check_branch
        %509 = sbr.rel (%p507) target = $region80
      $region79: #{llava_forward.1} parent=75 // pred_region
        %p510 = scmp.lt.s32.totalorder %s24, 1
        %s511 = scalar_select %p510, %s24, 1
        %s512 = smul.addr %s511, 2
        %s513 = smul.addr %s512, 4
        %s514 = scalar_lea.vmem %s0, %s513
      $region80: #{llava_forward.1} parent=75 // pred_fallthru
        _
      // Predicated region
      $region81: #{llava_forward.1} parent=75 // pred_check
        %p515 = pneg %p70
      $region82: #{llava_forward.1} parent=75 // pred_check_branch
        %517 = sbr.rel (%p515) target = $region84
      $region83: #{llava_forward.1} parent=75 // pred_region
        %p518 = scmp.lt.s32.totalorder %s24, 1
        %s519 = scalar_select %p518, %s24, 1
        %s520 = smul.addr %s519, 8
        %s521 = scalar_lea.vmem %s1, %s520
      $region84: #{llava_forward.1} parent=75 // pred_fallthru
        _
      // Predicated region
      $region85: #{llava_forward.1} parent=75 // pred_check
        %p522 = pneg %p96
      $region86: #{llava_forward.1} parent=75 // pred_check_branch
        %524 = sbr.rel (%p522) target = $region88
      $region87: #{llava_forward.1} parent=75 // pred_region
        %p525 = scmp.lt.s32.totalorder %s24, 1
        %s526 = scalar_select %p525, %s24, 1
        %s527 = scalar_lea.vmem %s2, %s526
      $region88: #{llava_forward.1} parent=75 // pred_fallthru
        _
    $region76: #{llava_forward.1} parent=5 // pred_fallthru
      _
    %p528 = scmp.le.s32.totalorder 1, %s24
    %p529 = scmp.lt.s32.totalorder %s24, 3
    %p530 = pnand %p528, %p529
    %p531 = pneg %p530
    // Predicated region
    $region89: #{llava_forward.1} parent=5 // pred_check
      _
    $region90: #{llava_forward.1} parent=5 // pred_check_branch
      %533 = sbr.rel (%p530) target = $region92
    $region91: #{llava_forward.1} parent=5 // pred_region
      %s534 = ssub.s32 %s24, 1
      %p535 = scmp.lt.s32.totalorder %s29, 1
      %s536 = scalar_select %p535, %s29, 1
      %s537 = smul.addr %s536, 2
      %s538 = smul.addr %s537, 4
      %s539 = scalar_lea.vmem %s0, %s538
      %p540 = pneg %p50
      %p541 = pneg %p47
      %p542 = scmp.lt.s32.totalorder %s29, 1
      %s543 = scalar_select %p542, %s29, 1
      %s544 = smul.addr %s543, 8
      %s545 = scalar_lea.vmem %s1, %s544
      %p546 = pneg %p76
      %p547 = pneg %p73
      %p548 = scmp.lt.s32.totalorder %s29, 1
      %s549 = scalar_select %p548, %s29, 1
      %s550 = scalar_lea.vmem %s2, %s549
      %p551 = pneg %p102
      %p552 = pneg %p99
      %p553 = pneg %p123
      %p554 = pneg %p120
      %p555 = pneg %p144
      %p556 = pneg %p141
      %p557 = pneg %p165
      %p558 = pneg %p162
      %p559 = pneg %p186
      %p560 = pneg %p183
      %p561 = pneg %p207
      %p562 = pneg %p204
      %p563 = pneg %p228
      %p564 = pneg %p225
      %p565 = pneg %p249
      %p566 = pneg %p246
      %p567 = pneg %p270
      %p568 = pneg %p267
      %p569 = pneg %p291
      %p570 = pneg %p288
      %p571 = pneg %p312
      %p572 = pneg %p309
      %p573 = pneg %p333
      %p574 = pneg %p330
      %p575 = pneg %p354
      %p576 = pneg %p351
      %p577 = pneg %p375
      %p578 = pneg %p372
      %p579 = pneg %p396
      %p580 = pneg %p393
      %p581 = pneg %p417
      %p582 = pneg %p414
      %p583 = pneg %p443
      %p584 = pneg %p440
      %p585 = scmp.lt.s32.totalorder %s29, 1
      %s586 = scalar_select %p585, %s29, 1
      %s587 = smul.addr %s586, 2
      %s588 = smul.addr %s587, 8
      %s589 = scalar_lea.vmem %s18, %s588
      %p590 = scmp.lt.s32.totalorder %s29, 1
      %s591 = scalar_select %p590, %s29, 1
      %s592 = smul.addr %s591, 2
      %s593 = smul.addr %s592, 4
      %s594 = scalar_lea.vmem %s0, %s593
      %p595 = scmp.lt.s32.totalorder %s29, 1
      %s596 = scalar_select %p595, %s29, 1
      %s597 = smul.addr %s596, 8
      %s598 = scalar_lea.vmem %s1, %s597
      %p599 = scmp.lt.s32.totalorder %s29, 1
      %s600 = scalar_select %p599, %s29, 1
      %s601 = scalar_lea.vmem %s2, %s600
      %p602 = scmp.lt.s32.totalorder %s29, 1
      %s603 = scalar_select %p602, %s29, 1
      %s604 = smul.addr %s603, 2
      %s605 = smul.addr %s604, 8
      %s606 = scalar_lea.vmem %s18, %s605
      %v608 = vld [vmem:[%s594] sm:$0xff]
      %v609 = vld [vmem:[%s4] sm:$0x1]
      %v611 = vcombine.high %v608, %v608
      %v613 = vpack.c.bf16 %v608, %v608
      %v614 = vpack.c.bf16 %v611, %v611
      %v615 = vld [vmem:[%s6] sm:$0xf]
      %v616 = vld [vmem:[%s6 + $0x4] sm:$0xf]
      %v617 = vld [vmem:[%s6 + $0x8] sm:$0xf]
      %v618 = vld [vmem:[%s6 + $0xc] sm:$0xf]
      %v619 = vld [vmem:[%s6 + $0x10] sm:$0xf]
      %v620 = vld [vmem:[%s6 + $0x14] sm:$0xf]
      %v621 = vld [vmem:[%s6 + $0x18] sm:$0xf]
      %v622 = vld [vmem:[%s6 + $0x1c] sm:$0xf]
      %v623 = vld [vmem:[%s6 + $0x20] sm:$0xf]
      %v624 = vld [vmem:[%s6 + $0x24] sm:$0xf]
      %v625 = vld [vmem:[%s6 + $0x28] sm:$0xf]
      %v626 = vld [vmem:[%s6 + $0x2c] sm:$0xf]
      %v627 = vld [vmem:[%s6 + $0x30] sm:$0xf]
      %v628 = vld [vmem:[%s6 + $0x34] sm:$0xf]
      %v629 = vld [vmem:[%s6 + $0x38] sm:$0xf]
      %v630 = vld [vmem:[%s6 + $0x3c] sm:$0xf]
      %v631 = vld [vmem:[%s6 + $0x40] sm:$0xf]
      %v632 = vld [vmem:[%s6 + $0x44] sm:$0xf]
      %v633 = vld [vmem:[%s6 + $0x48] sm:$0xf]
      %v634 = vld [vmem:[%s6 + $0x4c] sm:$0xf]
      %v635 = vld [vmem:[%s6 + $0x50] sm:$0xf]
      %v636 = vld [vmem:[%s6 + $0x54] sm:$0xf]
      %v637 = vld [vmem:[%s6 + $0x58] sm:$0xf]
      %v638 = vld [vmem:[%s6 + $0x5c] sm:$0xf]
      %v639 = vld [vmem:[%s6 + $0x60] sm:$0xf]
      %v640 = vld [vmem:[%s6 + $0x64] sm:$0xf]
      %v641 = vld [vmem:[%s6 + $0x68] sm:$0xf]
      %v642 = vld [vmem:[%s6 + $0x6c] sm:$0xf]
      %v643 = vld [vmem:[%s6 + $0x70] sm:$0xf]
      %v644 = vld [vmem:[%s6 + $0x74] sm:$0xf]
      %v645 = vld [vmem:[%s6 + $0x78] sm:$0xf]
      %v646 = vld [vmem:[%s6 + $0x7c] sm:$0xf]
      %v647 = vlaneseq
      %v648 = vshrl.u32 %v647, 7
      %v649 = vsub.s32 0, %v648
      %v650 = vrot.slane %v609, %v649
      %v683 = vunpack.c.l.b16 %v615
      %v684 = vunpack.c.l.b16 %v616
      %v685 = vunpack.c.l.b16 %v617
      %v686 = vunpack.c.l.b16 %v618
      %v687 = vunpack.c.l.b16 %v619
      %v688 = vunpack.c.l.b16 %v620
      %v689 = vunpack.c.l.b16 %v621
      %v690 = vunpack.c.l.b16 %v622
      %v691 = vunpack.c.l.b16 %v623
      %v692 = vunpack.c.l.b16 %v624
      %v693 = vunpack.c.l.b16 %v625
      %v694 = vunpack.c.l.b16 %v626
      %v695 = vunpack.c.l.b16 %v627
      %v696 = vunpack.c.l.b16 %v628
      %v697 = vunpack.c.l.b16 %v629
      %v698 = vunpack.c.l.b16 %v630
      %v699 = vunpack.c.l.b16 %v631
      %v700 = vunpack.c.l.b16 %v632
      %v701 = vunpack.c.l.b16 %v633
      %v702 = vunpack.c.l.b16 %v634
      %v703 = vunpack.c.l.b16 %v635
      %v704 = vunpack.c.l.b16 %v636
      %v705 = vunpack.c.l.b16 %v637
      %v706 = vunpack.c.l.b16 %v638
      %v707 = vunpack.c.l.b16 %v639
      %v708 = vunpack.c.l.b16 %v640
      %v709 = vunpack.c.l.b16 %v641
      %v710 = vunpack.c.l.b16 %v642
      %v711 = vunpack.c.l.b16 %v643
      %v712 = vunpack.c.l.b16 %v644
      %v713 = vunpack.c.l.b16 %v645
      %v714 = vunpack.c.l.b16 %v646
      %v715 = vpack.c.b16 %v684, %v683
      %v716 = vpack.c.b16 %v686, %v685
      %v717 = vpack.c.b16 %v688, %v687
      %v718 = vpack.c.b16 %v690, %v689
      %v719 = vpack.c.b16 %v692, %v691
      %v720 = vpack.c.b16 %v694, %v693
      %v721 = vpack.c.b16 %v696, %v695
      %v722 = vpack.c.b16 %v698, %v697
      %v723 = vpack.c.b16 %v700, %v699
      %v724 = vpack.c.b16 %v702, %v701
      %v725 = vpack.c.b16 %v704, %v703
      %v726 = vpack.c.b16 %v706, %v705
      %v727 = vpack.c.b16 %v708, %v707
      %v728 = vpack.c.b16 %v710, %v709
      %v729 = vpack.c.b16 %v712, %v711
      %v730 = vpack.c.b16 %v714, %v713
      %747 = vmatprep.subr.bf16.mxu0 0
      %748 = vmatpush1.bf16.msra.mxu0 %v722
      %749 = vmatprep.subr.bf16.mxu0 0
      %750 = vmatpush1.bf16.msra.mxu0 %v721
      %751 = vmatprep.subr.bf16.mxu0 0
      %752 = vmatpush1.bf16.msra.mxu0 %v720
      %753 = vmatprep.subr.bf16.mxu0 0
      %754 = vmatpush1.bf16.msra.mxu0 %v719
      %755 = vmatprep.subr.bf16.mxu0 0
      %756 = vmatpush1.bf16.msra.mxu0 %v718
      %757 = vmatprep.subr.bf16.mxu0 0
      %758 = vmatpush1.bf16.msra.mxu0 %v717
      %759 = vmatprep.subr.bf16.mxu0 0
      %760 = vmatpush1.bf16.msra.mxu0 %v716
      %761 = vmatprep.subr.bf16.mxu0 0
      %762 = vmatpush1.bf16.msra.mxu0 %v715
      %763 = vmatprep.subr.bf16.mxu0 0
      %764 = vmatpush2.bf16.msra.mxu0 %v730
      %765 = vmatprep.subr.bf16.mxu0 0
      %766 = vmatpush2.bf16.msra.mxu0 %v729
      %767 = vmatprep.subr.bf16.mxu0 0
      %768 = vmatpush2.bf16.msra.mxu0 %v728
      %769 = vmatprep.subr.bf16.mxu0 0
      %770 = vmatpush2.bf16.msra.mxu0 %v727
      %771 = vmatprep.subr.bf16.mxu0 0
      %772 = vmatpush2.bf16.msra.mxu0 %v726
      %773 = vmatprep.subr.bf16.mxu0 0
      %774 = vmatpush2.bf16.msra.mxu0 %v725
      %775 = vmatprep.subr.bf16.mxu0 0
      %776 = vmatpush2.bf16.msra.mxu0 %v724
      %777 = vmatprep.subr.bf16.mxu0 0
      %778 = vmatpush2.bf16.msra.mxu0 %v723
      %779 = vmatprep.mubr.bf16.mxu0 %v614
      %780 = vmatmul.mubr.bf16.gmra.mxu0 %v613
      %v781 = vpop.f32.mrf.mxu0
      %v782 = vadd.f32 %v650, %v781
      %v783 = vpop.f32.mrf.mxu0
      %v784 = vpop.f32.mrf.mxu0
      %v785 = vpop.f32.mrf.mxu0
      %786 = vdwg.mxu0
      %v788 = vrot.slane %v782, 7
      %vm790 = vcmask 1040384
      %v791 = vsel %vm790, 0.0, %v788
      %v792 = vld [vmem:[%s5] sm:$0xff]
      %v793 = vadd.f32 %v791, %v792
      %v794 = vld [vmem:[%s4 + $0x1] sm:$0x1]
      %v795 = vld [vmem:[%s4 + $0x2] sm:$0x1]
      %vm796 = vcmask 1044480
      %v797 = vsel %vm796, %v793, 0.0
      %798 = vadd.xlane.f32.xlu0 %v797
      %v799 = vpop.xlane.xlu0 %798
      %v800 = vrcp.pop 32.0
      %v801 = vmul.f32 %v799, %v800
      %v802 = vmul.f32 %v793, %v793
      %v803 = vsel %vm796, %v802, 0.0
      %804 = vadd.xlane.f32.xlu0 %v803
      %v805 = vpop.xlane.xlu0 %804
      %v806 = vmul.f32 %v805, %v800
      %v807 = vmul.f32 %v801, %v801
      %v808 = vsub.f32 %v806, %v807
      %v809 = vsub.f32 %v793, %v801
      %v810 = vadd.f32 %v808, 1e-05
      %v811 = vrsqrt.pop %v810
      %v812 = vmul.f32 %v809, %v811
      %v813 = vlaneseq
      %v814 = vshrl.u32 %v813, 7
      %v815 = vsub.s32 0, %v814
      %v816 = vrot.slane %v794, %v815
      %v817 = vmul.f32 %v812, %v816
      %v818 = vlaneseq
      %v819 = vshrl.u32 %v818, 7
      %v820 = vsub.s32 0, %v819
      %v821 = vrot.slane %v795, %v820
      %v822 = vadd.f32 %v817, %v821
      %v823 = vld [vmem:[%s4 + $0x3] sm:$0x1]
      %v824 = vld [vmem:[%s4 + $0x4] sm:$0x1]
      %v825 = vsel %vm796, %v822, 0.0
      %826 = vadd.xlane.f32.xlu0 %v825
      %v827 = vpop.xlane.xlu0 %826
      %v828 = vmul.f32 %v827, %v800
      %v829 = vmul.f32 %v822, %v822
      %v830 = vsel %vm796, %v829, 0.0
      %831 = vadd.xlane.f32.xlu0 %v830
      %v832 = vpop.xlane.xlu0 %831
      %v833 = vmul.f32 %v832, %v800
      %v834 = vmul.f32 %v828, %v828
      %v835 = vsub.f32 %v833, %v834
      %v836 = vsub.f32 %v822, %v828
      %v837 = vadd.f32 %v835, 1e-05
      %v838 = vrsqrt.pop %v837
      %v839 = vmul.f32 %v836, %v838
      %v840 = vlaneseq
      %v841 = vshrl.u32 %v840, 7
      %v842 = vsub.s32 0, %v841
      %v843 = vrot.slane %v823, %v842
      %v844 = vmul.f32 %v839, %v843
      %v845 = vlaneseq
      %v846 = vshrl.u32 %v845, 7
      %v847 = vsub.s32 0, %v846
      %v848 = vrot.slane %v824, %v847
      %v849 = vadd.f32 %v844, %v848
      %v850 = vld [vmem:[%s4 + $0x5] sm:$0x1]
      %v851 = vpack.c.bf16 %v849, %v849
      %v852 = vld [vmem:[%s7] sm:$0xf]
      %v853 = vld [vmem:[%s7 + $0x4] sm:$0xf]
      %v854 = vld [vmem:[%s7 + $0x8] sm:$0xf]
      %v855 = vld [vmem:[%s7 + $0xc] sm:$0xf]
      %v856 = vld [vmem:[%s7 + $0x10] sm:$0xf]
      %v857 = vld [vmem:[%s7 + $0x14] sm:$0xf]
      %v858 = vld [vmem:[%s7 + $0x18] sm:$0xf]
      %v859 = vld [vmem:[%s7 + $0x1c] sm:$0xf]
      %v860 = vld [vmem:[%s7 + $0x20] sm:$0xf]
      %v861 = vld [vmem:[%s7 + $0x24] sm:$0xf]
      %v862 = vld [vmem:[%s7 + $0x28] sm:$0xf]
      %v863 = vld [vmem:[%s7 + $0x2c] sm:$0xf]
      %v864 = vld [vmem:[%s7 + $0x30] sm:$0xf]
      %v865 = vld [vmem:[%s7 + $0x34] sm:$0xf]
      %v866 = vld [vmem:[%s7 + $0x38] sm:$0xf]
      %v867 = vld [vmem:[%s7 + $0x3c] sm:$0xf]
      %v868 = vlaneseq
      %v869 = vshrl.u32 %v868, 7
      %v870 = vsub.s32 0, %v869
      %v871 = vrot.slane %v850, %v870
      %v888 = vunpack.c.l.b16 %v852
      %v889 = vunpack.c.l.b16 %v853
      %v890 = vunpack.c.l.b16 %v854
      %v891 = vunpack.c.l.b16 %v855
      %v892 = vunpack.c.l.b16 %v856
      %v893 = vunpack.c.l.b16 %v857
      %v894 = vunpack.c.l.b16 %v858
      %v895 = vunpack.c.l.b16 %v859
      %v896 = vunpack.c.l.b16 %v860
      %v897 = vunpack.c.l.b16 %v861
      %v898 = vunpack.c.l.b16 %v862
      %v899 = vunpack.c.l.b16 %v863
      %v900 = vunpack.c.l.b16 %v864
      %v901 = vunpack.c.l.b16 %v865
      %v902 = vunpack.c.l.b16 %v866
      %v903 = vunpack.c.l.b16 %v867
      %v904 = vpack.c.b16 %v889, %v888
      %v905 = vpack.c.b16 %v891, %v890
      %v906 = vpack.c.b16 %v893, %v892
      %v907 = vpack.c.b16 %v895, %v894
      %v908 = vpack.c.b16 %v897, %v896
      %v909 = vpack.c.b16 %v899, %v898
      %v910 = vpack.c.b16 %v901, %v900
      %v911 = vpack.c.b16 %v903, %v902
      %920 = vmatprep.subr.bf16.mxu0 0
      %921 = vmatpush1.bf16.msra.mxu0 %v911
      %922 = vmatprep.subr.bf16.mxu0 0
      %923 = vmatpush1.bf16.msra.mxu0 %v910
      %924 = vmatprep.subr.bf16.mxu0 0
      %925 = vmatpush1.bf16.msra.mxu0 %v909
      %926 = vmatprep.subr.bf16.mxu0 0
      %927 = vmatpush1.bf16.msra.mxu0 %v908
      %928 = vmatprep.subr.bf16.mxu0 0
      %929 = vmatpush1.bf16.msra.mxu0 %v907
      %930 = vmatprep.subr.bf16.mxu0 0
      %931 = vmatpush1.bf16.msra.mxu0 %v906
      %932 = vmatprep.subr.bf16.mxu0 0
      %933 = vmatpush1.bf16.msra.mxu0 %v905
      %934 = vmatprep.subr.bf16.mxu0 0
      %935 = vmatpush1.bf16.msra.mxu0 %v904
      %936 = vmatprep.subr.bf16.mxu0 0
      %937 = vmatpush2.bf16.msra.mxu0 0
      %938 = vmatprep.subr.bf16.mxu0 0
      %939 = vmatpush2.bf16.msra.mxu0 0
      %940 = vmatprep.subr.bf16.mxu0 0
      %941 = vmatpush2.bf16.msra.mxu0 0
      %942 = vmatprep.subr.bf16.mxu0 0
      %943 = vmatpush2.bf16.msra.mxu0 0
      %944 = vmatprep.subr.bf16.mxu0 0
      %945 = vmatpush2.bf16.msra.mxu0 0
      %946 = vmatprep.subr.bf16.mxu0 0
      %947 = vmatpush2.bf16.msra.mxu0 0
      %948 = vmatprep.subr.bf16.mxu0 0
      %949 = vmatpush2.bf16.msra.mxu0 0
      %950 = vmatprep.subr.bf16.mxu0 0
      %951 = vmatpush2.bf16.msra.mxu0 0
      %952 = vmatprep.mubr.bf16.mxu0 0
      %953 = vmatmul.mubr.bf16.gmra.mxu0 %v851
      %v954 = vpop.f32.mrf.mxu0
      %v955 = vadd.f32 %v871, %v954
      %v956 = vpop.f32.mrf.mxu0
      %v957 = vpop.f32.mrf.mxu0
      %v958 = vpop.f32.mrf.mxu0
      %959 = vdwg.mxu0
      %v960 = vpack.c.bf16 %v955, %v955
      %962 = vrot.lane.b32.xlu0 %v960, 96
      %v963 = vpop.permute.xlu0 %962
      %vm964 = vcmask 130048
      %v966 = vsel %vm964, %v960, 0
      %v969 = vsel %vm964, %v963, 0
      %971 = vmatprep.subr.bf16.mxu0 0
      %972 = vmatpush1.bf16.xpose.msra.mxu0 0
      %973 = vmatprep.subr.bf16.mxu0 0
      %974 = vmatpush1.bf16.xpose.msra.mxu0 0
      %975 = vmatprep.subr.bf16.mxu0 0
      %976 = vmatpush1.bf16.xpose.msra.mxu0 0
      %977 = vmatprep.subr.bf16.mxu0 0
      %978 = vmatpush1.bf16.xpose.msra.mxu0 0
      %979 = vmatprep.subr.bf16.mxu0 0
      %980 = vmatpush1.bf16.xpose.msra.mxu0 0
      %981 = vmatprep.subr.bf16.mxu0 0
      %982 = vmatpush1.bf16.xpose.msra.mxu0 0
      %983 = vmatprep.subr.bf16.mxu0 0
      %984 = vmatpush1.bf16.xpose.msra.mxu0 0
      %985 = vmatprep.subr.bf16.mxu0 0
      %986 = vmatpush1.bf16.xpose.msra.mxu0 %v969
      %987 = vmatprep.subr.bf16.mxu0 0
      %988 = vmatpush2.bf16.xpose.msra.mxu0 0
      %989 = vmatprep.subr.bf16.mxu0 0
      %990 = vmatpush2.bf16.xpose.msra.mxu0 0
      %991 = vmatprep.subr.bf16.mxu0 0
      %992 = vmatpush2.bf16.xpose.msra.mxu0 0
      %993 = vmatprep.subr.bf16.mxu0 0
      %994 = vmatpush2.bf16.xpose.msra.mxu0 0
      %995 = vmatprep.subr.bf16.mxu0 0
      %996 = vmatpush2.bf16.xpose.msra.mxu0 0
      %997 = vmatprep.subr.bf16.mxu0 0
      %998 = vmatpush2.bf16.xpose.msra.mxu0 0
      %999 = vmatprep.subr.bf16.mxu0 0
      %1000 = vmatpush2.bf16.xpose.msra.mxu0 0
      %1001 = vmatprep.subr.bf16.mxu0 0
      %1002 = vmatpush2.bf16.xpose.msra.mxu0 0
      %1003 = vmatprep.mubr.bf16.mxu0 0
      %1004 = vmatmul.mubr.bf16.gmra.mxu0 %v966
      %v1005 = vpop.f32.mrf.mxu0
      %v1006 = vadd.f32 0.0, %v1005
      %v1007 = vpop.f32.mrf.mxu0
      %v1008 = vpop.f32.mrf.mxu0
      %v1009 = vpop.f32.mrf.mxu0
      %1010 = vdwg.mxu0
      %v1011 = vmul.f32 %v1006, 0.25
      %vm1012 = vcmask 36864
      %v1013 = vsel %vm1012, %v1011, -inf
      %1014 = vmax.xlane.f32.xlu0 %v1013
      %v1015 = vpop.xlane.xlu0 %1014
      %v1016 = vsub.f32 %v1011, %v1015
      %v1017 = vmul.f32 %v1016, 1.442695
      %v1018 = vpow.pop %v1017
      %v1019 = vsel %vm1012, %v1018, 0.0
      %1020 = vadd.xlane.f32.xlu0 %v1019
      %v1021 = vpop.xlane.xlu0 %1020
      %v1022 = vrcp.pop %v1021
      %v1023 = vmul.f32 %v1018, %v1022
      %v1024 = vpack.c.bf16 %v1023, %v1023
      %1025 = vrot.lane.b32.xlu0 %v960, 64
      %v1026 = vpop.permute.xlu0 %1025
      %vm1027 = vcmask 39936
      %v1029 = vsel %vm1027, %v1024, 0
      %vm1031 = vcmask 1041408
      %vm1032 = vcmask 1042432
      %v1033 = vsel %vm1031, 4294967295, 65535
      %v1034 = vsel %vm1032, %v1033, 0
      %v1036 = vand.u32 %v1026, %v1034
      %1038 = vmatprep.subr.bf16.mxu0 0
      %1039 = vmatpush1.bf16.msra.mxu0 0
      %1040 = vmatprep.subr.bf16.mxu0 0
      %1041 = vmatpush1.bf16.msra.mxu0 0
      %1042 = vmatprep.subr.bf16.mxu0 0
      %1043 = vmatpush1.bf16.msra.mxu0 0
      %1044 = vmatprep.subr.bf16.mxu0 0
      %1045 = vmatpush1.bf16.msra.mxu0 0
      %1046 = vmatprep.subr.bf16.mxu0 0
      %1047 = vmatpush1.bf16.msra.mxu0 0
      %1048 = vmatprep.subr.bf16.mxu0 0
      %1049 = vmatpush1.bf16.msra.mxu0 0
      %1050 = vmatprep.subr.bf16.mxu0 0
      %1051 = vmatpush1.bf16.msra.mxu0 0
      %1052 = vmatprep.subr.bf16.mxu0 0
      %1053 = vmatpush1.bf16.msra.mxu0 %v1036
      %1054 = vmatprep.subr.bf16.mxu0 0
      %1055 = vmatpush2.bf16.msra.mxu0 0
      %1056 = vmatprep.subr.bf16.mxu0 0
      %1057 = vmatpush2.bf16.msra.mxu0 0
      %1058 = vmatprep.subr.bf16.mxu0 0
      %1059 = vmatpush2.bf16.msra.mxu0 0
      %1060 = vmatprep.subr.bf16.mxu0 0
      %1061 = vmatpush2.bf16.msra.mxu0 0
      %1062 = vmatprep.subr.bf16.mxu0 0
      %1063 = vmatpush2.bf16.msra.mxu0 0
      %1064 = vmatprep.subr.bf16.mxu0 0
      %1065 = vmatpush2.bf16.msra.mxu0 0
      %1066 = vmatprep.subr.bf16.mxu0 0
      %1067 = vmatpush2.bf16.msra.mxu0 0
      %1068 = vmatprep.subr.bf16.mxu0 0
      %1069 = vmatpush2.bf16.msra.mxu0 0
      %1070 = vmatprep.mubr.bf16.mxu0 0
      %1071 = vmatmul.mubr.bf16.gmra.mxu0 %v1029
      %v1072 = vpop.f32.mrf.mxu0
      %v1073 = vadd.f32 0.0, %v1072
      %v1074 = vpop.f32.mrf.mxu0
      %v1075 = vpop.f32.mrf.mxu0
      %v1076 = vpop.f32.mrf.mxu0
      %1077 = vdwg.mxu0
      %v1078 = vpack.c.bf16 %v1073, %v1073
      %v1079 = vld [vmem:[%s8] sm:$0xf]
      %v1080 = vld [vmem:[%s8 + $0x4] sm:$0xf]
      %1081 = vrot.lane.b32.xlu0 %v960, 112
      %v1082 = vpop.permute.xlu0 %1081
      %1083 = vrot.lane.b32.xlu0 %v960, 80
      %v1084 = vpop.permute.xlu0 %1083
      %v1086 = vsel %vm964, %v1082, 0
      %v1089 = vsel %vm964, %v1084, 0
      %1091 = vmatprep.subr.bf16.mxu0 0
      %1092 = vmatpush1.bf16.xpose.msra.mxu0 0
      %1093 = vmatprep.subr.bf16.mxu0 0
      %1094 = vmatpush1.bf16.xpose.msra.mxu0 0
      %1095 = vmatprep.subr.bf16.mxu0 0
      %1096 = vmatpush1.bf16.xpose.msra.mxu0 0
      %1097 = vmatprep.subr.bf16.mxu0 0
      %1098 = vmatpush1.bf16.xpose.msra.mxu0 0
      %1099 = vmatprep.subr.bf16.mxu0 0
      %1100 = vmatpush1.bf16.xpose.msra.mxu0 0
      %1101 = vmatprep.subr.bf16.mxu0 0
      %1102 = vmatpush1.bf16.xpose.msra.mxu0 0
      %1103 = vmatprep.subr.bf16.mxu0 0
      %1104 = vmatpush1.bf16.xpose.msra.mxu0 0
      %1105 = vmatprep.subr.bf16.mxu0 0
      %1106 = vmatpush1.bf16.xpose.msra.mxu0 %v1089
      %1107 = vmatprep.subr.bf16.mxu0 0
      %1108 = vmatpush2.bf16.xpose.msra.mxu0 0
      %1109 = vmatprep.subr.bf16.mxu0 0
      %1110 = vmatpush2.bf16.xpose.msra.mxu0 0
      %1111 = vmatprep.subr.bf16.mxu0 0
      %1112 = vmatpush2.bf16.xpose.msra.mxu0 0
      %1113 = vmatprep.subr.bf16.mxu0 0
      %1114 = vmatpush2.bf16.xpose.msra.mxu0 0
      %1115 = vmatprep.subr.bf16.mxu0 0
      %1116 = vmatpush2.bf16.xpose.msra.mxu0 0
      %1117 = vmatprep.subr.bf16.mxu0 0
      %1118 = vmatpush2.bf16.xpose.msra.mxu0 0
      %1119 = vmatprep.subr.bf16.mxu0 0
      %1120 = vmatpush2.bf16.xpose.msra.mxu0 0
      %1121 = vmatprep.subr.bf16.mxu0 0
      %1122 = vmatpush2.bf16.xpose.msra.mxu0 0
      %1123 = vmatprep.mubr.bf16.mxu0 0
      %1124 = vmatmul.mubr.bf16.gmra.mxu0 %v1086
      %v1125 = vpop.f32.mrf.mxu0
      %v1126 = vadd.f32 0.0, %v1125
      %v1127 = vpop.f32.mrf.mxu0
      %v1128 = vpop.f32.mrf.mxu0
      %v1129 = vpop.f32.mrf.mxu0
      %1130 = vdwg.mxu0
      %v1131 = vmul.f32 %v1126, 0.25
      %v1132 = vsel %vm1012, %v1131, -inf
      %1133 = vmax.xlane.f32.xlu0 %v1132
      %v1134 = vpop.xlane.xlu0 %1133
      %v1135 = vsub.f32 %v1131, %v1134
      %v1136 = vmul.f32 %v1135, 1.442695
      %v1137 = vpow.pop %v1136
      %v1138 = vsel %vm1012, %v1137, 0.0
      %1139 = vadd.xlane.f32.xlu0 %v1138
      %v1140 = vpop.xlane.xlu0 %1139
      %v1141 = vrcp.pop %v1140
      %v1142 = vmul.f32 %v1137, %v1141
      %v1143 = vpack.c.bf16 %v1142, %v1142
      %1144 = vrot.lane.b32.xlu0 %v960, 48
      %v1145 = vpop.permute.xlu0 %1144
      %v1147 = vsel %vm1027, %v1143, 0
      %v1150 = vand.u32 %v1145, %v1034
      %1152 = vmatprep.subr.bf16.mxu0 0
      %1153 = vmatpush1.bf16.msra.mxu0 0
      %1154 = vmatprep.subr.bf16.mxu0 0
      %1155 = vmatpush1.bf16.msra.mxu0 0
      %1156 = vmatprep.subr.bf16.mxu0 0
      %1157 = vmatpush1.bf16.msra.mxu0 0
      %1158 = vmatprep.subr.bf16.mxu0 0
      %1159 = vmatpush1.bf16.msra.mxu0 0
      %1160 = vmatprep.subr.bf16.mxu0 0
      %1161 = vmatpush1.bf16.msra.mxu0 0
      %1162 = vmatprep.subr.bf16.mxu0 0
      %1163 = vmatpush1.bf16.msra.mxu0 0
      %1164 = vmatprep.subr.bf16.mxu0 0
      %1165 = vmatpush1.bf16.msra.mxu0 0
      %1166 = vmatprep.subr.bf16.mxu0 0
      %1167 = vmatpush1.bf16.msra.mxu0 %v1150
      %1168 = vmatprep.subr.bf16.mxu0 0
      %1169 = vmatpush2.bf16.msra.mxu0 0
      %1170 = vmatprep.subr.bf16.mxu0 0
      %1171 = vmatpush2.bf16.msra.mxu0 0
      %1172 = vmatprep.subr.bf16.mxu0 0
      %1173 = vmatpush2.bf16.msra.mxu0 0
      %1174 = vmatprep.subr.bf16.mxu0 0
      %1175 = vmatpush2.bf16.msra.mxu0 0
      %1176 = vmatprep.subr.bf16.mxu0 0
      %1177 = vmatpush2.bf16.msra.mxu0 0
      %1178 = vmatprep.subr.bf16.mxu0 0
      %1179 = vmatpush2.bf16.msra.mxu0 0
      %1180 = vmatprep.subr.bf16.mxu0 0
      %1181 = vmatpush2.bf16.msra.mxu0 0
      %1182 = vmatprep.subr.bf16.mxu0 0
      %1183 = vmatpush2.bf16.msra.mxu0 0
      %1184 = vmatprep.mubr.bf16.mxu0 0
      %1185 = vmatmul.mubr.bf16.gmra.mxu0 %v1147
      %v1186 = vpop.f32.mrf.mxu0
      %v1187 = vadd.f32 0.0, %v1186
      %v1188 = vpop.f32.mrf.mxu0
      %v1189 = vpop.f32.mrf.mxu0
      %v1190 = vpop.f32.mrf.mxu0
      %1191 = vdwg.mxu0
      %v1192 = vpack.c.bf16 %v1187, %v1187
      %v1193 = vld [vmem:[%s8 + $0x8] sm:$0xf]
      %v1194 = vld [vmem:[%s8 + $0xc] sm:$0xf]
      %v1197 = vunpack.c.l.b16 %v1193
      %v1198 = vunpack.c.l.b16 %v1194
      %v1199 = vpack.c.b16 %v1198, %v1197
      %v1202 = vsel %vm964, %v1192, 0
      %1204 = vmatprep.subr.bf16.mxu0 0
      %1205 = vmatpush1.bf16.msra.mxu0 0
      %1206 = vmatprep.subr.bf16.mxu0 0
      %1207 = vmatpush1.bf16.msra.mxu0 0
      %1208 = vmatprep.subr.bf16.mxu0 0
      %1209 = vmatpush1.bf16.msra.mxu0 0
      %1210 = vmatprep.subr.bf16.mxu0 0
      %1211 = vmatpush1.bf16.msra.mxu0 0
      %1212 = vmatprep.subr.bf16.mxu0 0
      %1213 = vmatpush1.bf16.msra.mxu0 0
      %1214 = vmatprep.subr.bf16.mxu0 0
      %1215 = vmatpush1.bf16.msra.mxu0 0
      %1216 = vmatprep.subr.bf16.mxu0 0
      %1217 = vmatpush1.bf16.msra.mxu0 0
      %1218 = vmatprep.subr.bf16.mxu0 0
      %1219 = vmatpush1.bf16.msra.mxu0 %v1199
      %1220 = vmatprep.subr.bf16.mxu0 0
      %1221 = vmatpush2.bf16.msra.mxu0 0
      %1222 = vmatprep.subr.bf16.mxu0 0
      %1223 = vmatpush2.bf16.msra.mxu0 0
      %1224 = vmatprep.subr.bf16.mxu0 0
      %1225 = vmatpush2.bf16.msra.mxu0 0
      %1226 = vmatprep.subr.bf16.mxu0 0
      %1227 = vmatpush2.bf16.msra.mxu0 0
      %1228 = vmatprep.subr.bf16.mxu0 0
      %1229 = vmatpush2.bf16.msra.mxu0 0
      %1230 = vmatprep.subr.bf16.mxu0 0
      %1231 = vmatpush2.bf16.msra.mxu0 0
      %1232 = vmatprep.subr.bf16.mxu0 0
      %1233 = vmatpush2.bf16.msra.mxu0 0
      %1234 = vmatprep.subr.bf16.mxu0 0
      %1235 = vmatpush2.bf16.msra.mxu0 0
      %1236 = vmatprep.mubr.bf16.mxu0 0
      %1237 = vmatmul.mubr.bf16.gmra.mxu0 %v1202
      %v1238 = vpop.f32.mrf.mxu0
      %v1239 = vadd.f32 0.0, %v1238
      %v1240 = vpop.f32.mrf.mxu0
      %v1241 = vpop.f32.mrf.mxu0
      %v1242 = vpop.f32.mrf.mxu0
      %1243 = vdwg.mxu0
      %v1246 = vunpack.c.l.b16 %v1079
      %v1247 = vunpack.c.l.b16 %v1080
      %v1248 = vpack.c.b16 %v1247, %v1246
      %v1251 = vsel %vm964, %v1078, 0
      %1253 = vmatprep.subr.bf16.mxu0 0
      %1254 = vmatpush1.bf16.msra.mxu0 0
      %1255 = vmatprep.subr.bf16.mxu0 0
      %1256 = vmatpush1.bf16.msra.mxu0 0
      %1257 = vmatprep.subr.bf16.mxu0 0
      %1258 = vmatpush1.bf16.msra.mxu0 0
      %1259 = vmatprep.subr.bf16.mxu0 0
      %1260 = vmatpush1.bf16.msra.mxu0 0
      %1261 = vmatprep.subr.bf16.mxu0 0
      %1262 = vmatpush1.bf16.msra.mxu0 0
      %1263 = vmatprep.subr.bf16.mxu0 0
      %1264 = vmatpush1.bf16.msra.mxu0 0
      %1265 = vmatprep.subr.bf16.mxu0 0
      %1266 = vmatpush1.bf16.msra.mxu0 0
      %1267 = vmatprep.subr.bf16.mxu0 0
      %1268 = vmatpush1.bf16.msra.mxu0 %v1248
      %1269 = vmatprep.subr.bf16.mxu0 0
      %1270 = vmatpush2.bf16.msra.mxu0 0
      %1271 = vmatprep.subr.bf16.mxu0 0
      %1272 = vmatpush2.bf16.msra.mxu0 0
      %1273 = vmatprep.subr.bf16.mxu0 0
      %1274 = vmatpush2.bf16.msra.mxu0 0
      %1275 = vmatprep.subr.bf16.mxu0 0
      %1276 = vmatpush2.bf16.msra.mxu0 0
      %1277 = vmatprep.subr.bf16.mxu0 0
      %1278 = vmatpush2.bf16.msra.mxu0 0
      %1279 = vmatprep.subr.bf16.mxu0 0
      %1280 = vmatpush2.bf16.msra.mxu0 0
      %1281 = vmatprep.subr.bf16.mxu0 0
      %1282 = vmatpush2.bf16.msra.mxu0 0
      %1283 = vmatprep.subr.bf16.mxu0 0
      %1284 = vmatpush2.bf16.msra.mxu0 0
      %1285 = vmatprep.mubr.bf16.mxu0 0
      %1286 = vmatmul.mubr.bf16.gmra.mxu0 %v1251
      %v1287 = vpop.f32.mrf.mxu0
      %v1288 = vadd.f32 %v1239, %v1287
      %v1289 = vpop.f32.mrf.mxu0
      %v1290 = vpop.f32.mrf.mxu0
      %v1291 = vpop.f32.mrf.mxu0
      %1292 = vdwg.mxu0
      %v1293 = vadd.f32 %v822, %v1288
      %v1294 = vld [vmem:[%s4 + $0x6] sm:$0x1]
      %v1295 = vlaneseq
      %v1296 = vshrl.u32 %v1295, 7
      %v1297 = vsub.s32 0, %v1296
      %v1298 = vrot.slane %v1294, %v1297
      %v1299 = vadd.f32 %v1293, %v1298
      %v1300 = vld [vmem:[%s4 + $0x7] sm:$0x1]
      %v1301 = vld [vmem:[%s4 + $0x8] sm:$0x1]
      %v1302 = vsel %vm796, %v1299, 0.0
      %1303 = vadd.xlane.f32.xlu0 %v1302
      %v1304 = vpop.xlane.xlu0 %1303
      %v1305 = vmul.f32 %v1304, %v800
      %v1306 = vmul.f32 %v1299, %v1299
      %v1307 = vsel %vm796, %v1306, 0.0
      %1308 = vadd.xlane.f32.xlu0 %v1307
      %v1309 = vpop.xlane.xlu0 %1308
      %v1310 = vmul.f32 %v1309, %v800
      %v1311 = vmul.f32 %v1305, %v1305
      %v1312 = vsub.f32 %v1310, %v1311
      %v1313 = vsub.f32 %v1299, %v1305
      %v1314 = vadd.f32 %v1312, 1e-05
      %v1315 = vrsqrt.pop %v1314
      %v1316 = vmul.f32 %v1313, %v1315
      %v1317 = vlaneseq
      %v1318 = vshrl.u32 %v1317, 7
      %v1319 = vsub.s32 0, %v1318
      %v1320 = vrot.slane %v1300, %v1319
      %v1321 = vmul.f32 %v1316, %v1320
      %v1322 = vlaneseq
      %v1323 = vshrl.u32 %v1322, 7
      %v1324 = vsub.s32 0, %v1323
      %v1325 = vrot.slane %v1301, %v1324
      %v1326 = vadd.f32 %v1321, %v1325
      %v1327 = vld [vmem:[%s4 + $0x9] sm:$0x1]
      %v1328 = vpack.c.bf16 %v1326, %v1326
      %v1329 = vld [vmem:[%s9] sm:$0xf]
      %v1330 = vld [vmem:[%s9 + $0x4] sm:$0xf]
      %v1331 = vld [vmem:[%s9 + $0x8] sm:$0xf]
      %v1332 = vld [vmem:[%s9 + $0xc] sm:$0xf]
      %v1333 = vld [vmem:[%s9 + $0x10] sm:$0xf]
      %v1334 = vld [vmem:[%s9 + $0x14] sm:$0xf]
      %v1335 = vld [vmem:[%s9 + $0x18] sm:$0xf]
      %v1336 = vld [vmem:[%s9 + $0x1c] sm:$0xf]
      %v1337 = vld [vmem:[%s9 + $0x20] sm:$0xf]
      %v1338 = vld [vmem:[%s9 + $0x24] sm:$0xf]
      %v1339 = vld [vmem:[%s9 + $0x28] sm:$0xf]
      %v1340 = vld [vmem:[%s9 + $0x2c] sm:$0xf]
      %v1341 = vld [vmem:[%s9 + $0x30] sm:$0xf]
      %v1342 = vld [vmem:[%s9 + $0x34] sm:$0xf]
      %v1343 = vld [vmem:[%s9 + $0x38] sm:$0xf]
      %v1344 = vld [vmem:[%s9 + $0x3c] sm:$0xf]
      %v1345 = vlaneseq
      %v1346 = vshrl.u32 %v1345, 7
      %v1347 = vsub.s32 0, %v1346
      %v1348 = vrot.slane %v1327, %v1347
      %v1365 = vunpack.c.l.b16 %v1329
      %v1366 = vunpack.c.l.b16 %v1330
      %v1367 = vunpack.c.l.b16 %v1331
      %v1368 = vunpack.c.l.b16 %v1332
      %v1369 = vunpack.c.l.b16 %v1333
      %v1370 = vunpack.c.l.b16 %v1334
      %v1371 = vunpack.c.l.b16 %v1335
      %v1372 = vunpack.c.l.b16 %v1336
      %v1373 = vunpack.c.l.b16 %v1337
      %v1374 = vunpack.c.l.b16 %v1338
      %v1375 = vunpack.c.l.b16 %v1339
      %v1376 = vunpack.c.l.b16 %v1340
      %v1377 = vunpack.c.l.b16 %v1341
      %v1378 = vunpack.c.l.b16 %v1342
      %v1379 = vunpack.c.l.b16 %v1343
      %v1380 = vunpack.c.l.b16 %v1344
      %v1381 = vpack.c.b16 %v1366, %v1365
      %v1382 = vpack.c.b16 %v1368, %v1367
      %v1383 = vpack.c.b16 %v1370, %v1369
      %v1384 = vpack.c.b16 %v1372, %v1371
      %v1385 = vpack.c.b16 %v1374, %v1373
      %v1386 = vpack.c.b16 %v1376, %v1375
      %v1387 = vpack.c.b16 %v1378, %v1377
      %v1388 = vpack.c.b16 %v1380, %v1379
      %1397 = vmatprep.subr.bf16.mxu0 0
      %1398 = vmatpush1.bf16.msra.mxu0 %v1388
      %1399 = vmatprep.subr.bf16.mxu0 0
      %1400 = vmatpush1.bf16.msra.mxu0 %v1387
      %1401 = vmatprep.subr.bf16.mxu0 0
      %1402 = vmatpush1.bf16.msra.mxu0 %v1386
      %1403 = vmatprep.subr.bf16.mxu0 0
      %1404 = vmatpush1.bf16.msra.mxu0 %v1385
      %1405 = vmatprep.subr.bf16.mxu0 0
      %1406 = vmatpush1.bf16.msra.mxu0 %v1384
      %1407 = vmatprep.subr.bf16.mxu0 0
      %1408 = vmatpush1.bf16.msra.mxu0 %v1383
      %1409 = vmatprep.subr.bf16.mxu0 0
      %1410 = vmatpush1.bf16.msra.mxu0 %v1382
      %1411 = vmatprep.subr.bf16.mxu0 0
      %1412 = vmatpush1.bf16.msra.mxu0 %v1381
      %1413 = vmatprep.subr.bf16.mxu0 0
      %1414 = vmatpush2.bf16.msra.mxu0 0
      %1415 = vmatprep.subr.bf16.mxu0 0
      %1416 = vmatpush2.bf16.msra.mxu0 0
      %1417 = vmatprep.subr.bf16.mxu0 0
      %1418 = vmatpush2.bf16.msra.mxu0 0
      %1419 = vmatprep.subr.bf16.mxu0 0
      %1420 = vmatpush2.bf16.msra.mxu0 0
      %1421 = vmatprep.subr.bf16.mxu0 0
      %1422 = vmatpush2.bf16.msra.mxu0 0
      %1423 = vmatprep.subr.bf16.mxu0 0
      %1424 = vmatpush2.bf16.msra.mxu0 0
      %1425 = vmatprep.subr.bf16.mxu0 0
      %1426 = vmatpush2.bf16.msra.mxu0 0
      %1427 = vmatprep.subr.bf16.mxu0 0
      %1428 = vmatpush2.bf16.msra.mxu0 0
      %1429 = vmatprep.mubr.bf16.mxu0 0
      %1430 = vmatmul.mubr.bf16.gmra.mxu0 %v1328
      %v1431 = vpop.f32.mrf.mxu0
      %v1432 = vadd.f32 %v1348, %v1431
      %v1433 = vpop.f32.mrf.mxu0
      %v1434 = vpop.f32.mrf.mxu0
      %v1435 = vpop.f32.mrf.mxu0
      %1436 = vdwg.mxu0
      %v1437 = vmul.f32 %v1432, %v1432
      %v1438 = vmul.f32 %v1432, %v1437
      %v1439 = vmul.f32 %v1438, 0.044715
      %v1440 = vadd.f32 %v1432, %v1439
      %v1441 = vmul.f32 %v1440, 0.7978846
      %v1442 = vtanh.pop %v1441
      %v1443 = vadd.f32 %v1442, 1.0
      %v1444 = vmul.f32 %v1443, 0.5
      %v1445 = vmul.f32 %v1432, %v1444
      %v1446 = vld [vmem:[%s4 + $0xa] sm:$0x1]
      %v1447 = vpack.c.bf16 %v1445, %v1445
      %v1448 = vld [vmem:[%s10] sm:$0xf]
      %v1449 = vld [vmem:[%s10 + $0x4] sm:$0xf]
      %v1450 = vld [vmem:[%s10 + $0x8] sm:$0xf]
      %v1451 = vld [vmem:[%s10 + $0xc] sm:$0xf]
      %v1452 = vld [vmem:[%s10 + $0x10] sm:$0xf]
      %v1453 = vld [vmem:[%s10 + $0x14] sm:$0xf]
      %v1454 = vld [vmem:[%s10 + $0x18] sm:$0xf]
      %v1455 = vld [vmem:[%s10 + $0x1c] sm:$0xf]
      %v1456 = vld [vmem:[%s10 + $0x20] sm:$0xf]
      %v1457 = vld [vmem:[%s10 + $0x24] sm:$0xf]
      %v1458 = vld [vmem:[%s10 + $0x28] sm:$0xf]
      %v1459 = vld [vmem:[%s10 + $0x2c] sm:$0xf]
      %v1460 = vld [vmem:[%s10 + $0x30] sm:$0xf]
      %v1461 = vld [vmem:[%s10 + $0x34] sm:$0xf]
      %v1462 = vld [vmem:[%s10 + $0x38] sm:$0xf]
      %v1463 = vld [vmem:[%s10 + $0x3c] sm:$0xf]
      %v1464 = vlaneseq
      %v1465 = vshrl.u32 %v1464, 7
      %v1466 = vsub.s32 0, %v1465
      %v1467 = vrot.slane %v1446, %v1466
      %v1484 = vunpack.c.l.b16 %v1448
      %v1485 = vunpack.c.l.b16 %v1449
      %v1486 = vunpack.c.l.b16 %v1450
      %v1487 = vunpack.c.l.b16 %v1451
      %v1488 = vunpack.c.l.b16 %v1452
      %v1489 = vunpack.c.l.b16 %v1453
      %v1490 = vunpack.c.l.b16 %v1454
      %v1491 = vunpack.c.l.b16 %v1455
      %v1492 = vunpack.c.l.b16 %v1456
      %v1493 = vunpack.c.l.b16 %v1457
      %v1494 = vunpack.c.l.b16 %v1458
      %v1495 = vunpack.c.l.b16 %v1459
      %v1496 = vunpack.c.l.b16 %v1460
      %v1497 = vunpack.c.l.b16 %v1461
      %v1498 = vunpack.c.l.b16 %v1462
      %v1499 = vunpack.c.l.b16 %v1463
      %v1500 = vpack.c.b16 %v1485, %v1484
      %v1501 = vpack.c.b16 %v1487, %v1486
      %v1502 = vpack.c.b16 %v1489, %v1488
      %v1503 = vpack.c.b16 %v1491, %v1490
      %v1504 = vpack.c.b16 %v1493, %v1492
      %v1505 = vpack.c.b16 %v1495, %v1494
      %v1506 = vpack.c.b16 %v1497, %v1496
      %v1507 = vpack.c.b16 %v1499, %v1498
      %1516 = vmatprep.subr.bf16.mxu0 0
      %1517 = vmatpush1.bf16.msra.mxu0 %v1507
      %1518 = vmatprep.subr.bf16.mxu0 0
      %1519 = vmatpush1.bf16.msra.mxu0 %v1506
      %1520 = vmatprep.subr.bf16.mxu0 0
      %1521 = vmatpush1.bf16.msra.mxu0 %v1505
      %1522 = vmatprep.subr.bf16.mxu0 0
      %1523 = vmatpush1.bf16.msra.mxu0 %v1504
      %1524 = vmatprep.subr.bf16.mxu0 0
      %1525 = vmatpush1.bf16.msra.mxu0 %v1503
      %1526 = vmatprep.subr.bf16.mxu0 0
      %1527 = vmatpush1.bf16.msra.mxu0 %v1502
      %1528 = vmatprep.subr.bf16.mxu0 0
      %1529 = vmatpush1.bf16.msra.mxu0 %v1501
      %1530 = vmatprep.subr.bf16.mxu0 0
      %1531 = vmatpush1.bf16.msra.mxu0 %v1500
      %1532 = vmatprep.subr.bf16.mxu0 0
      %1533 = vmatpush2.bf16.msra.mxu0 0
      %1534 = vmatprep.subr.bf16.mxu0 0
      %1535 = vmatpush2.bf16.msra.mxu0 0
      %1536 = vmatprep.subr.bf16.mxu0 0
      %1537 = vmatpush2.bf16.msra.mxu0 0
      %1538 = vmatprep.subr.bf16.mxu0 0
      %1539 = vmatpush2.bf16.msra.mxu0 0
      %1540 = vmatprep.subr.bf16.mxu0 0
      %1541 = vmatpush2.bf16.msra.mxu0 0
      %1542 = vmatprep.subr.bf16.mxu0 0
      %1543 = vmatpush2.bf16.msra.mxu0 0
      %1544 = vmatprep.subr.bf16.mxu0 0
      %1545 = vmatpush2.bf16.msra.mxu0 0
      %1546 = vmatprep.subr.bf16.mxu0 0
      %1547 = vmatpush2.bf16.msra.mxu0 0
      %1548 = vmatprep.mubr.bf16.mxu0 0
      %1549 = vmatmul.mubr.bf16.gmra.mxu0 %v1447
      %v1550 = vpop.f32.mrf.mxu0
      %v1551 = vadd.f32 %v1467, %v1550
      %v1552 = vpop.f32.mrf.mxu0
      %v1553 = vpop.f32.mrf.mxu0
      %v1554 = vpop.f32.mrf.mxu0
      %1555 = vdwg.mxu0
      %v1556 = vadd.f32 %v1299, %v1551
      %v1557 = vld [vmem:[%s4 + $0xb] sm:$0x1]
      %v1558 = vpack.c.bf16 %v1556, %v1556
      %v1559 = vld [vmem:[%s11] sm:$0xf]
      %v1560 = vld [vmem:[%s11 + $0x4] sm:$0xf]
      %v1561 = vld [vmem:[%s11 + $0x8] sm:$0xf]
      %v1562 = vld [vmem:[%s11 + $0xc] sm:$0xf]
      %v1563 = vld [vmem:[%s11 + $0x10] sm:$0xf]
      %v1564 = vld [vmem:[%s11 + $0x14] sm:$0xf]
      %v1565 = vld [vmem:[%s11 + $0x18] sm:$0xf]
      %v1566 = vld [vmem:[%s11 + $0x1c] sm:$0xf]
      %v1567 = vld [vmem:[%s11 + $0x20] sm:$0xf]
      %v1568 = vld [vmem:[%s11 + $0x24] sm:$0xf]
      %v1569 = vld [vmem:[%s11 + $0x28] sm:$0xf]
      %v1570 = vld [vmem:[%s11 + $0x2c] sm:$0xf]
      %v1571 = vld [vmem:[%s11 + $0x30] sm:$0xf]
      %v1572 = vld [vmem:[%s11 + $0x34] sm:$0xf]
      %v1573 = vld [vmem:[%s11 + $0x38] sm:$0xf]
      %v1574 = vld [vmem:[%s11 + $0x3c] sm:$0xf]
      %v1575 = vlaneseq
      %v1576 = vshrl.u32 %v1575, 7
      %v1577 = vsub.s32 0, %v1576
      %v1578 = vrot.slane %v1557, %v1577
      %v1580 = vshrl.u32 %v1558, 16
      %v1582 = vshll.u32 %v1558, 16
      %v1584 = vrot.slane %v1582, 1
      %v1585 = vor.u32 %v1580, %v1584
      %v1603 = vunpack.c.l.b16 %v1559
      %v1604 = vunpack.c.l.b16 %v1560
      %v1605 = vunpack.c.l.b16 %v1561
      %v1606 = vunpack.c.l.b16 %v1562
      %v1607 = vunpack.c.l.b16 %v1563
      %v1608 = vunpack.c.l.b16 %v1564
      %v1609 = vunpack.c.l.b16 %v1565
      %v1610 = vunpack.c.l.b16 %v1566
      %v1611 = vunpack.c.l.b16 %v1567
      %v1612 = vunpack.c.l.b16 %v1568
      %v1613 = vunpack.c.l.b16 %v1569
      %v1614 = vunpack.c.l.b16 %v1570
      %v1615 = vunpack.c.l.b16 %v1571
      %v1616 = vunpack.c.l.b16 %v1572
      %v1617 = vunpack.c.l.b16 %v1573
      %v1618 = vunpack.c.l.b16 %v1574
      %v1619 = vpack.c.b16 %v1604, %v1603
      %v1620 = vpack.c.b16 %v1606, %v1605
      %v1621 = vpack.c.b16 %v1608, %v1607
      %v1622 = vpack.c.b16 %v1610, %v1609
      %v1623 = vpack.c.b16 %v1612, %v1611
      %v1624 = vpack.c.b16 %v1614, %v1613
      %v1625 = vpack.c.b16 %v1616, %v1615
      %v1626 = vpack.c.b16 %v1618, %v1617
      %1635 = vmatprep.subr.bf16.mxu0 0
      %1636 = vmatpush1.bf16.msra.mxu0 %v1626
      %1637 = vmatprep.subr.bf16.mxu0 0
      %1638 = vmatpush1.bf16.msra.mxu0 %v1625
      %1639 = vmatprep.subr.bf16.mxu0 0
      %1640 = vmatpush1.bf16.msra.mxu0 %v1624
      %1641 = vmatprep.subr.bf16.mxu0 0
      %1642 = vmatpush1.bf16.msra.mxu0 %v1623
      %1643 = vmatprep.subr.bf16.mxu0 0
      %1644 = vmatpush1.bf16.msra.mxu0 %v1622
      %1645 = vmatprep.subr.bf16.mxu0 0
      %1646 = vmatpush1.bf16.msra.mxu0 %v1621
      %1647 = vmatprep.subr.bf16.mxu0 0
      %1648 = vmatpush1.bf16.msra.mxu0 %v1620
      %1649 = vmatprep.subr.bf16.mxu0 0
      %1650 = vmatpush1.bf16.msra.mxu0 %v1619
      %1651 = vmatprep.subr.bf16.mxu0 0
      %1652 = vmatpush2.bf16.msra.mxu0 0
      %1653 = vmatprep.subr.bf16.mxu0 0
      %1654 = vmatpush2.bf16.msra.mxu0 0
      %1655 = vmatprep.subr.bf16.mxu0 0
      %1656 = vmatpush2.bf16.msra.mxu0 0
      %1657 = vmatprep.subr.bf16.mxu0 0
      %1658 = vmatpush2.bf16.msra.mxu0 0
      %1659 = vmatprep.subr.bf16.mxu0 0
      %1660 = vmatpush2.bf16.msra.mxu0 0
      %1661 = vmatprep.subr.bf16.mxu0 0
      %1662 = vmatpush2.bf16.msra.mxu0 0
      %1663 = vmatprep.subr.bf16.mxu0 0
      %1664 = vmatpush2.bf16.msra.mxu0 0
      %1665 = vmatprep.subr.bf16.mxu0 0
      %1666 = vmatpush2.bf16.msra.mxu0 0
      %1667 = vmatprep.mubr.bf16.mxu0 0
      %1668 = vmatmul.mubr.bf16.gmra.mxu0 %v1585
      %v1669 = vpop.f32.mrf.mxu0
      %v1670 = vadd.f32 %v1578, %v1669
      %v1671 = vpop.f32.mrf.mxu0
      %v1672 = vpop.f32.mrf.mxu0
      %v1673 = vpop.f32.mrf.mxu0
      %1674 = vdwg.mxu0
      %v1675 = vmul.f32 %v1670, %v1670
      %v1676 = vmul.f32 %v1670, %v1675
      %v1677 = vmul.f32 %v1676, 0.044715
      %v1678 = vadd.f32 %v1670, %v1677
      %v1679 = vmul.f32 %v1678, 0.7978846
      %v1680 = vtanh.pop %v1679
      %v1681 = vadd.f32 %v1680, 1.0
      %v1682 = vmul.f32 %v1681, 0.5
      %v1683 = vmul.f32 %v1670, %v1682
      %v1684 = vld [vmem:[%s4 + $0xc] sm:$0x1]
      %v1685 = vpack.c.bf16 %v1683, %v1683
      %v1686 = vld [vmem:[%s12] sm:$0xf]
      %v1687 = vld [vmem:[%s12 + $0x4] sm:$0xf]
      %v1688 = vld [vmem:[%s12 + $0x8] sm:$0xf]
      %v1689 = vld [vmem:[%s12 + $0xc] sm:$0xf]
      %v1690 = vld [vmem:[%s12 + $0x10] sm:$0xf]
      %v1691 = vld [vmem:[%s12 + $0x14] sm:$0xf]
      %v1692 = vld [vmem:[%s12 + $0x18] sm:$0xf]
      %v1693 = vld [vmem:[%s12 + $0x1c] sm:$0xf]
      %v1694 = vld [vmem:[%s12 + $0x20] sm:$0xf]
      %v1695 = vld [vmem:[%s12 + $0x24] sm:$0xf]
      %v1696 = vld [vmem:[%s12 + $0x28] sm:$0xf]
      %v1697 = vld [vmem:[%s12 + $0x2c] sm:$0xf]
      %v1698 = vld [vmem:[%s12 + $0x30] sm:$0xf]
      %v1699 = vld [vmem:[%s12 + $0x34] sm:$0xf]
      %v1700 = vld [vmem:[%s12 + $0x38] sm:$0xf]
      %v1701 = vld [vmem:[%s12 + $0x3c] sm:$0xf]
      %v1702 = vlaneseq
      %v1703 = vshrl.u32 %v1702, 7
      %v1704 = vsub.s32 0, %v1703
      %v1705 = vrot.slane %v1684, %v1704
      %v1722 = vunpack.c.l.b16 %v1686
      %v1723 = vunpack.c.l.b16 %v1687
      %v1724 = vunpack.c.l.b16 %v1688
      %v1725 = vunpack.c.l.b16 %v1689
      %v1726 = vunpack.c.l.b16 %v1690
      %v1727 = vunpack.c.l.b16 %v1691
      %v1728 = vunpack.c.l.b16 %v1692
      %v1729 = vunpack.c.l.b16 %v1693
      %v1730 = vunpack.c.l.b16 %v1694
      %v1731 = vunpack.c.l.b16 %v1695
      %v1732 = vunpack.c.l.b16 %v1696
      %v1733 = vunpack.c.l.b16 %v1697
      %v1734 = vunpack.c.l.b16 %v1698
      %v1735 = vunpack.c.l.b16 %v1699
      %v1736 = vunpack.c.l.b16 %v1700
      %v1737 = vunpack.c.l.b16 %v1701
      %v1738 = vpack.c.b16 %v1723, %v1722
      %v1739 = vpack.c.b16 %v1725, %v1724
      %v1740 = vpack.c.b16 %v1727, %v1726
      %v1741 = vpack.c.b16 %v1729, %v1728
      %v1742 = vpack.c.b16 %v1731, %v1730
      %v1743 = vpack.c.b16 %v1733, %v1732
      %v1744 = vpack.c.b16 %v1735, %v1734
      %v1745 = vpack.c.b16 %v1737, %v1736
      %1754 = vmatprep.subr.bf16.mxu0 0
      %1755 = vmatpush1.bf16.msra.mxu0 %v1745
      %1756 = vmatprep.subr.bf16.mxu0 0
      %1757 = vmatpush1.bf16.msra.mxu0 %v1744
      %1758 = vmatprep.subr.bf16.mxu0 0
      %1759 = vmatpush1.bf16.msra.mxu0 %v1743
      %1760 = vmatprep.subr.bf16.mxu0 0
      %1761 = vmatpush1.bf16.msra.mxu0 %v1742
      %1762 = vmatprep.subr.bf16.mxu0 0
      %1763 = vmatpush1.bf16.msra.mxu0 %v1741
      %1764 = vmatprep.subr.bf16.mxu0 0
      %1765 = vmatpush1.bf16.msra.mxu0 %v1740
      %1766 = vmatprep.subr.bf16.mxu0 0
      %1767 = vmatpush1.bf16.msra.mxu0 %v1739
      %1768 = vmatprep.subr.bf16.mxu0 0
      %1769 = vmatpush1.bf16.msra.mxu0 %v1738
      %1770 = vmatprep.subr.bf16.mxu0 0
      %1771 = vmatpush2.bf16.msra.mxu0 0
      %1772 = vmatprep.subr.bf16.mxu0 0
      %1773 = vmatpush2.bf16.msra.mxu0 0
      %1774 = vmatprep.subr.bf16.mxu0 0
      %1775 = vmatpush2.bf16.msra.mxu0 0
      %1776 = vmatprep.subr.bf16.mxu0 0
      %1777 = vmatpush2.bf16.msra.mxu0 0
      %1778 = vmatprep.subr.bf16.mxu0 0
      %1779 = vmatpush2.bf16.msra.mxu0 0
      %1780 = vmatprep.subr.bf16.mxu0 0
      %1781 = vmatpush2.bf16.msra.mxu0 0
      %1782 = vmatprep.subr.bf16.mxu0 0
      %1783 = vmatpush2.bf16.msra.mxu0 0
      %1784 = vmatprep.subr.bf16.mxu0 0
      %1785 = vmatpush2.bf16.msra.mxu0 0
      %1786 = vmatprep.mubr.bf16.mxu0 0
      %1787 = vmatmul.mubr.bf16.gmra.mxu0 %v1685
      %v1788 = vpop.f32.mrf.mxu0
      %v1789 = vadd.f32 %v1705, %v1788
      %v1790 = vpop.f32.mrf.mxu0
      %v1791 = vpop.f32.mrf.mxu0
      %v1792 = vpop.f32.mrf.mxu0
      %1793 = vdwg.mxu0
      %v1794 = vld [vmem:[%s598] sm:$0xff]
      %v1796 = vrot.slane %v1794, 4
      %vm1798 = vcmask 1043456
      %v1799 = vsel %vm1798, %v1789, %v1796
      %v1800 = vld [vmem:[%s3] sm:$0xff]
      %v1801 = vld [vmem:[%s3 + $0x8] sm:$0xff]
      %v1802 = vlaneseq
      %v1803 = vshrl.u32 %v1802, 7
      %v1804 = vadd.s32 %v1803, 8
      %v1805 = vlaneseq
      %v1806 = vand.u32 %v1805, 127
      %vm1807 = vcmp.ge.s32.totalorder %v1803, %v1806
      %vm1808 = vcmp.ge.s32.totalorder %v1804, %v1806
      %v1809 = vsel %vm1807, 0.0, -1e+09
      %v1810 = vsel %vm1808, 0.0, -1e+09
      %v1811 = vld [vmem:[%s601] sm:$0x1]
      %v1813 = vlaneseq
      %v1814 = vshrl.u32 %v1813, 7
      %v1815 = vsub.s32 0, %v1814
      %v1816 = vrot.slane %v1811, %v1815
      %v1818 = vadd.f32 %v1809, %v1816
      %v1819 = vadd.f32 %v1810, %v1816
      %v1820 = vld [vmem:[%s4 + $0xd] sm:$0x1]
      %v1821 = vmul.f32 %v1799, %v1799
      %v1822 = vmul.f32 %v1796, %v1796
      %1823 = vadd.xlane.f32.xlu0 %v1821
      %v1824 = vpop.xlane.xlu0 %1823
      %v1825 = vsel %vm1798, %v1822, 0.0
      %1826 = vadd.xlane.f32.xlu0 %v1825
      %v1827 = vpop.xlane.xlu0 %1826
      %v1828 = vmul.f32 %v1824, %v800
      %v1829 = vmul.f32 %v1827, %v800
      %v1830 = vadd.f32 %v1828, 1e-06
      %v1831 = vadd.f32 %v1829, 1e-06
      %v1832 = vrsqrt.pop %v1830
      %v1833 = vrsqrt.pop %v1831
      %v1834 = vmul.f32 %v1799, %v1832
      %v1835 = vmul.f32 %v1796, %v1833
      %v1836 = vlaneseq
      %v1837 = vshrl.u32 %v1836, 7
      %v1838 = vsub.s32 0, %v1837
      %v1839 = vrot.slane %v1820, %v1838
      %v1840 = vmul.f32 %v1834, %v1839
      %v1841 = vmul.f32 %v1835, %v1839
      %v1842 = vpack.c.bf16 %v1841, %v1840
      %v1843 = vld [vmem:[%s13] sm:$0xf]
      %v1844 = vld [vmem:[%s13 + $0x4] sm:$0xf]
      %v1845 = vld [vmem:[%s13 + $0x8] sm:$0xf]
      %v1846 = vld [vmem:[%s13 + $0xc] sm:$0xf]
      %v1847 = vld [vmem:[%s13 + $0x10] sm:$0xf]
      %v1848 = vld [vmem:[%s13 + $0x14] sm:$0xf]
      %v1849 = vld [vmem:[%s13 + $0x18] sm:$0xf]
      %v1850 = vld [vmem:[%s13 + $0x1c] sm:$0xf]
      %v1851 = vld [vmem:[%s13 + $0x20] sm:$0xf]
      %v1852 = vld [vmem:[%s13 + $0x24] sm:$0xf]
      %v1853 = vld [vmem:[%s13 + $0x28] sm:$0xf]
      %v1854 = vld [vmem:[%s13 + $0x2c] sm:$0xf]
      %v1855 = vld [vmem:[%s13 + $0x30] sm:$0xf]
      %v1856 = vld [vmem:[%s13 + $0x34] sm:$0xf]
      %v1857 = vld [vmem:[%s13 + $0x38] sm:$0xf]
      %v1858 = vld [vmem:[%s13 + $0x3c] sm:$0xf]
      %v1875 = vunpack.c.l.b16 %v1843
      %v1876 = vunpack.c.l.b16 %v1844
      %v1877 = vunpack.c.l.b16 %v1845
      %v1878 = vunpack.c.l.b16 %v1846
      %v1879 = vunpack.c.l.b16 %v1847
      %v1880 = vunpack.c.l.b16 %v1848
      %v1881 = vunpack.c.l.b16 %v1849
      %v1882 = vunpack.c.l.b16 %v1850
      %v1883 = vunpack.c.l.b16 %v1851
      %v1884 = vunpack.c.l.b16 %v1852
      %v1885 = vunpack.c.l.b16 %v1853
      %v1886 = vunpack.c.l.b16 %v1854
      %v1887 = vunpack.c.l.b16 %v1855
      %v1888 = vunpack.c.l.b16 %v1856
      %v1889 = vunpack.c.l.b16 %v1857
      %v1890 = vunpack.c.l.b16 %v1858
      %v1891 = vpack.c.b16 %v1876, %v1875
      %v1892 = vpack.c.b16 %v1878, %v1877
      %v1893 = vpack.c.b16 %v1880, %v1879
      %v1894 = vpack.c.b16 %v1882, %v1881
      %v1895 = vpack.c.b16 %v1884, %v1883
      %v1896 = vpack.c.b16 %v1886, %v1885
      %v1897 = vpack.c.b16 %v1888, %v1887
      %v1898 = vpack.c.b16 %v1890, %v1889
      %1907 = vmatprep.subr.bf16.mxu0 0
      %1908 = vmatpush1.bf16.msra.mxu0 %v1898
      %1909 = vmatprep.subr.bf16.mxu0 0
      %1910 = vmatpush1.bf16.msra.mxu0 %v1897
      %1911 = vmatprep.subr.bf16.mxu0 0
      %1912 = vmatpush1.bf16.msra.mxu0 %v1896
      %1913 = vmatprep.subr.bf16.mxu0 0
      %1914 = vmatpush1.bf16.msra.mxu0 %v1895
      %1915 = vmatprep.subr.bf16.mxu0 0
      %1916 = vmatpush1.bf16.msra.mxu0 %v1894
      %1917 = vmatprep.subr.bf16.mxu0 0
      %1918 = vmatpush1.bf16.msra.mxu0 %v1893
      %1919 = vmatprep.subr.bf16.mxu0 0
      %1920 = vmatpush1.bf16.msra.mxu0 %v1892
      %1921 = vmatprep.subr.bf16.mxu0 0
      %1922 = vmatpush1.bf16.msra.mxu0 %v1891
      %1923 = vmatprep.subr.bf16.mxu0 0
      %1924 = vmatpush2.bf16.msra.mxu0 0
      %1925 = vmatprep.subr.bf16.mxu0 0
      %1926 = vmatpush2.bf16.msra.mxu0 0
      %1927 = vmatprep.subr.bf16.mxu0 0
      %1928 = vmatpush2.bf16.msra.mxu0 0
      %1929 = vmatprep.subr.bf16.mxu0 0
      %1930 = vmatpush2.bf16.msra.mxu0 0
      %1931 = vmatprep.subr.bf16.mxu0 0
      %1932 = vmatpush2.bf16.msra.mxu0 0
      %1933 = vmatprep.subr.bf16.mxu0 0
      %1934 = vmatpush2.bf16.msra.mxu0 0
      %1935 = vmatprep.subr.bf16.mxu0 0
      %1936 = vmatpush2.bf16.msra.mxu0 0
      %1937 = vmatprep.subr.bf16.mxu0 0
      %1938 = vmatpush2.bf16.msra.mxu0 0
      %1939 = vmatprep.mubr.bf16.mxu0 0
      %1940 = vmatmul.mubr.bf16.gmra.mxu0 %v1842
      %v1941 = vpop.f32.mrf.mxu0
      %v1942 = vadd.f32 0.0, %v1941
      %v1943 = vpop.f32.mrf.mxu0
      %v1944 = vpop.f32.mrf.mxu0
      %v1945 = vadd.f32 0.0, %v1944
      %v1946 = vpop.f32.mrf.mxu0
      %1947 = vdwg.mxu0
      %v1948 = vsub.f32 0.0, %v1942
      %v1949 = vsub.f32 0.0, %v1945
      %1952 = vrot.lane.b32.xlu0 %v1948, 120
      %v1953 = vpop.permute.xlu0 %1952
      %1954 = vrot.lane.b32.xlu0 %v1949, 120
      %v1955 = vpop.permute.xlu0 %1954
      %1960 = vrot.lane.b32.xlu0 %v1942, 8
      %v1961 = vpop.permute.xlu0 %1960
      %1962 = vrot.lane.b32.xlu0 %v1945, 8
      %v1963 = vpop.permute.xlu0 %1962
      %vm1966 = vcmask 64512
      %v1967 = vsel %vm1966, %v1953, %v1961
      %v1968 = vsel %vm1966, %v1955, %v1963
      %v1969 = vmul.f32 %v1942, %v1800
      %v1970 = vmul.f32 %v1945, %v1801
      %1973 = vrot.lane.b32.xlu0 %v1800, 112
      %v1974 = vpop.permute.xlu0 %1973
      %1975 = vrot.lane.b32.xlu0 %v1801, 112
      %v1976 = vpop.permute.xlu0 %1975
      %v1979 = vmul.f32 %v1967, %v1974
      %v1980 = vmul.f32 %v1968, %v1976
      %v1981 = vadd.f32 %v1969, %v1979
      %v1982 = vadd.f32 %v1970, %v1980
      %1983 = vrot.lane.b32.xlu0 %v1948, 88
      %v1984 = vpop.permute.xlu0 %1983
      %1985 = vrot.lane.b32.xlu0 %v1949, 88
      %v1986 = vpop.permute.xlu0 %1985
      %1989 = vrot.lane.b32.xlu0 %v1942, 104
      %v1990 = vpop.permute.xlu0 %1989
      %1991 = vrot.lane.b32.xlu0 %v1945, 104
      %v1992 = vpop.permute.xlu0 %1991
      %v1995 = vsel %vm1966, %v1984, %v1990
      %v1996 = vsel %vm1966, %v1986, %v1992
      %1997 = vrot.lane.b32.xlu0 %v1800, 32
      %v1998 = vpop.permute.xlu0 %1997
      %1999 = vrot.lane.b32.xlu0 %v1801, 32
      %v2000 = vpop.permute.xlu0 %1999
      %v2003 = vmul.f32 %v1942, %v1998
      %v2004 = vmul.f32 %v1945, %v2000
      %v2005 = vmul.f32 %v1995, %v1974
      %v2006 = vmul.f32 %v1996, %v1976
      %2009 = vrot.lane.b32.xlu0 %v2005, 32
      %v2010 = vpop.permute.xlu0 %2009
      %2011 = vrot.lane.b32.xlu0 %v2006, 32
      %v2012 = vpop.permute.xlu0 %2011
      %v2015 = vadd.f32 %v2003, %v2010
      %v2016 = vadd.f32 %v2004, %v2012
      %v2017 = vpack.c.bf16 %v1982, %v1981
      %v2018 = vpack.c.bf16 %v2016, %v2015
      %2020 = vrot.lane.b32.xlu0 %v2018, 96
      %v2021 = vpop.permute.xlu0 %2020
      %v2023 = vsel %vm964, %v2017, 0
      %v2026 = vsel %vm964, %v2021, 0
      %2028 = vmatprep.subr.bf16.mxu0 0
      %2029 = vmatpush1.bf16.xpose.msra.mxu0 0
      %2030 = vmatprep.subr.bf16.mxu0 0
      %2031 = vmatpush1.bf16.xpose.msra.mxu0 0
      %2032 = vmatprep.subr.bf16.mxu0 0
      %2033 = vmatpush1.bf16.xpose.msra.mxu0 0
      %2034 = vmatprep.subr.bf16.mxu0 0
      %2035 = vmatpush1.bf16.xpose.msra.mxu0 0
      %2036 = vmatprep.subr.bf16.mxu0 0
      %2037 = vmatpush1.bf16.xpose.msra.mxu0 0
      %2038 = vmatprep.subr.bf16.mxu0 0
      %2039 = vmatpush1.bf16.xpose.msra.mxu0 0
      %2040 = vmatprep.subr.bf16.mxu0 0
      %2041 = vmatpush1.bf16.xpose.msra.mxu0 0
      %2042 = vmatprep.subr.bf16.mxu0 0
      %2043 = vmatpush1.bf16.xpose.msra.mxu0 %v2026
      %2044 = vmatprep.subr.bf16.mxu0 0
      %2045 = vmatpush2.bf16.xpose.msra.mxu0 0
      %2046 = vmatprep.subr.bf16.mxu0 0
      %2047 = vmatpush2.bf16.xpose.msra.mxu0 0
      %2048 = vmatprep.subr.bf16.mxu0 0
      %2049 = vmatpush2.bf16.xpose.msra.mxu0 0
      %2050 = vmatprep.subr.bf16.mxu0 0
      %2051 = vmatpush2.bf16.xpose.msra.mxu0 0
      %2052 = vmatprep.subr.bf16.mxu0 0
      %2053 = vmatpush2.bf16.xpose.msra.mxu0 0
      %2054 = vmatprep.subr.bf16.mxu0 0
      %2055 = vmatpush2.bf16.xpose.msra.mxu0 0
      %2056 = vmatprep.subr.bf16.mxu0 0
      %2057 = vmatpush2.bf16.xpose.msra.mxu0 0
      %2058 = vmatprep.subr.bf16.mxu0 0
      %2059 = vmatpush2.bf16.xpose.msra.mxu0 0
      %2060 = vmatprep.mubr.bf16.mxu0 0
      %2061 = vmatmul.mubr.bf16.gmra.mxu0 %v2023
      %v2062 = vpop.f32.mrf.mxu0
      %v2063 = vadd.f32 0.0, %v2062
      %v2064 = vpop.f32.mrf.mxu0
      %v2065 = vpop.f32.mrf.mxu0
      %v2066 = vadd.f32 0.0, %v2065
      %v2067 = vpop.f32.mrf.mxu0
      %2068 = vdwg.mxu0
      %v2069 = vmul.f32 %v2063, 0.25
      %v2070 = vmul.f32 %v2066, 0.25
      %v2071 = vadd.f32 %v2069, %v1818
      %v2072 = vadd.f32 %v2070, %v1819
      %vm2073 = vcmask 97280
      %v2074 = vsel %vm2073, %v2071, -inf
      %2075 = vmax.xlane.f32.xlu0 %v2074
      %v2076 = vpop.xlane.xlu0 %2075
      %vm2077 = vcmask 93184
      %v2078 = vsel %vm2077, %v2072, -inf
      %2079 = vmax.xlane.f32.xlu0 %v2078
      %v2080 = vpop.xlane.xlu0 %2079
      %v2081 = vsub.f32 %v2071, %v2076
      %v2082 = vsub.f32 %v2072, %v2080
      %v2083 = vmul.f32 %v2081, 1.442695
      %v2084 = vpow.pop %v2083
      %v2085 = vmul.f32 %v2082, 1.442695
      %v2086 = vpow.pop %v2085
      %v2087 = vsel %vm2073, %v2084, 0.0
      %2088 = vadd.xlane.f32.xlu0 %v2087
      %v2089 = vpop.xlane.xlu0 %2088
      %v2090 = vsel %vm2077, %v2086, 0.0
      %2091 = vadd.xlane.f32.xlu0 %v2090
      %v2092 = vpop.xlane.xlu0 %2091
      %v2093 = vrcp.pop %v2089
      %v2094 = vrcp.pop %v2092
      %v2095 = vmul.f32 %v2084, %v2093
      %v2096 = vmul.f32 %v2086, %v2094
      %v2097 = vpack.c.bf16 %v2096, %v2095
      %v2098 = vpack.c.bf16 %v1945, %v1942
      %2100 = vrot.lane.b32.xlu0 %v2098, 64
      %v2101 = vpop.permute.xlu0 %2100
      %v2103 = vsel %vm2073, %v2097, 0
      %vm2105 = vcmask 1045504
      %v2107 = vsel %vm2105, %v2101, 0
      %2109 = vmatprep.subr.bf16.mxu0 0
      %2110 = vmatpush1.bf16.msra.mxu0 0
      %2111 = vmatprep.subr.bf16.mxu0 0
      %2112 = vmatpush1.bf16.msra.mxu0 0
      %2113 = vmatprep.subr.bf16.mxu0 0
      %2114 = vmatpush1.bf16.msra.mxu0 0
      %2115 = vmatprep.subr.bf16.mxu0 0
      %2116 = vmatpush1.bf16.msra.mxu0 0
      %2117 = vmatprep.subr.bf16.mxu0 0
      %2118 = vmatpush1.bf16.msra.mxu0 0
      %2119 = vmatprep.subr.bf16.mxu0 0
      %2120 = vmatpush1.bf16.msra.mxu0 0
      %2121 = vmatprep.subr.bf16.mxu0 0
      %2122 = vmatpush1.bf16.msra.mxu0 0
      %2123 = vmatprep.subr.bf16.mxu0 0
      %2124 = vmatpush1.bf16.msra.mxu0 %v2107
      %2125 = vmatprep.subr.bf16.mxu0 0
      %2126 = vmatpush2.bf16.msra.mxu0 0
      %2127 = vmatprep.subr.bf16.mxu0 0
      %2128 = vmatpush2.bf16.msra.mxu0 0
      %2129 = vmatprep.subr.bf16.mxu0 0
      %2130 = vmatpush2.bf16.msra.mxu0 0
      %2131 = vmatprep.subr.bf16.mxu0 0
      %2132 = vmatpush2.bf16.msra.mxu0 0
      %2133 = vmatprep.subr.bf16.mxu0 0
      %2134 = vmatpush2.bf16.msra.mxu0 0
      %2135 = vmatprep.subr.bf16.mxu0 0
      %2136 = vmatpush2.bf16.msra.mxu0 0
      %2137 = vmatprep.subr.bf16.mxu0 0
      %2138 = vmatpush2.bf16.msra.mxu0 0
      %2139 = vmatprep.subr.bf16.mxu0 0
      %2140 = vmatpush2.bf16.msra.mxu0 0
      %2141 = vmatprep.mubr.bf16.mxu0 0
      %2142 = vmatmul.mubr.bf16.gmra.mxu0 %v2103
      %v2143 = vpop.f32.mrf.mxu0
      %v2144 = vadd.f32 0.0, %v2143
      %v2145 = vpop.f32.mrf.mxu0
      %v2146 = vpop.f32.mrf.mxu0
      %v2147 = vadd.f32 0.0, %v2146
      %v2148 = vpop.f32.mrf.mxu0
      %2149 = vdwg.mxu0
      %v2150 = vpack.c.bf16 %v2147, %v2144
      %v2151 = vld [vmem:[%s14] sm:$0xf]
      %v2152 = vld [vmem:[%s14 + $0x4] sm:$0xf]
      %2153 = vrot.lane.b32.xlu0 %v1948, 104
      %v2154 = vpop.permute.xlu0 %2153
      %2155 = vrot.lane.b32.xlu0 %v1949, 104
      %v2156 = vpop.permute.xlu0 %2155
      %2159 = vrot.lane.b32.xlu0 %v1942, 120
      %v2160 = vpop.permute.xlu0 %2159
      %2161 = vrot.lane.b32.xlu0 %v1945, 120
      %v2162 = vpop.permute.xlu0 %2161
      %v2165 = vsel %vm1966, %v2154, %v2160
      %v2166 = vsel %vm1966, %v2156, %v2162
      %2167 = vrot.lane.b32.xlu0 %v1800, 16
      %v2168 = vpop.permute.xlu0 %2167
      %2169 = vrot.lane.b32.xlu0 %v1801, 16
      %v2170 = vpop.permute.xlu0 %2169
      %v2173 = vmul.f32 %v1942, %v2168
      %v2174 = vmul.f32 %v1945, %v2170
      %v2175 = vmul.f32 %v2165, %v1974
      %v2176 = vmul.f32 %v2166, %v1976
      %2179 = vrot.lane.b32.xlu0 %v2175, 16
      %v2180 = vpop.permute.xlu0 %2179
      %2181 = vrot.lane.b32.xlu0 %v2176, 16
      %v2182 = vpop.permute.xlu0 %2181
      %v2185 = vadd.f32 %v2173, %v2180
      %v2186 = vadd.f32 %v2174, %v2182
      %2187 = vrot.lane.b32.xlu0 %v1948, 72
      %v2188 = vpop.permute.xlu0 %2187
      %2189 = vrot.lane.b32.xlu0 %v1949, 72
      %v2190 = vpop.permute.xlu0 %2189
      %2193 = vrot.lane.b32.xlu0 %v1942, 88
      %v2194 = vpop.permute.xlu0 %2193
      %2195 = vrot.lane.b32.xlu0 %v1945, 88
      %v2196 = vpop.permute.xlu0 %2195
      %v2199 = vsel %vm1966, %v2188, %v2194
      %v2200 = vsel %vm1966, %v2190, %v2196
      %2201 = vrot.lane.b32.xlu0 %v1800, 48
      %v2202 = vpop.permute.xlu0 %2201
      %2203 = vrot.lane.b32.xlu0 %v1801, 48
      %v2204 = vpop.permute.xlu0 %2203
      %v2207 = vmul.f32 %v1942, %v2202
      %v2208 = vmul.f32 %v1945, %v2204
      %v2209 = vmul.f32 %v2199, %v1974
      %v2210 = vmul.f32 %v2200, %v1976
      %2213 = vrot.lane.b32.xlu0 %v2209, 48
      %v2214 = vpop.permute.xlu0 %2213
      %2215 = vrot.lane.b32.xlu0 %v2210, 48
      %v2216 = vpop.permute.xlu0 %2215
      %v2219 = vadd.f32 %v2207, %v2214
      %v2220 = vadd.f32 %v2208, %v2216
      %v2221 = vpack.c.bf16 %v2186, %v2185
      %v2222 = vpack.c.bf16 %v2220, %v2219
      %2224 = vrot.lane.b32.xlu0 %v2221, 112
      %v2225 = vpop.permute.xlu0 %2224
      %2227 = vrot.lane.b32.xlu0 %v2222, 80
      %v2228 = vpop.permute.xlu0 %2227
      %v2230 = vsel %vm964, %v2225, 0
      %v2233 = vsel %vm964, %v2228, 0
      %2235 = vmatprep.subr.bf16.mxu0 0
      %2236 = vmatpush1.bf16.xpose.msra.mxu0 0
      %2237 = vmatprep.subr.bf16.mxu0 0
      %2238 = vmatpush1.bf16.xpose.msra.mxu0 0
      %2239 = vmatprep.subr.bf16.mxu0 0
      %2240 = vmatpush1.bf16.xpose.msra.mxu0 0
      %2241 = vmatprep.subr.bf16.mxu0 0
      %2242 = vmatpush1.bf16.xpose.msra.mxu0 0
      %2243 = vmatprep.subr.bf16.mxu0 0
      %2244 = vmatpush1.bf16.xpose.msra.mxu0 0
      %2245 = vmatprep.subr.bf16.mxu0 0
      %2246 = vmatpush1.bf16.xpose.msra.mxu0 0
      %2247 = vmatprep.subr.bf16.mxu0 0
      %2248 = vmatpush1.bf16.xpose.msra.mxu0 0
      %2249 = vmatprep.subr.bf16.mxu0 0
      %2250 = vmatpush1.bf16.xpose.msra.mxu0 %v2233
      %2251 = vmatprep.subr.bf16.mxu0 0
      %2252 = vmatpush2.bf16.xpose.msra.mxu0 0
      %2253 = vmatprep.subr.bf16.mxu0 0
      %2254 = vmatpush2.bf16.xpose.msra.mxu0 0
      %2255 = vmatprep.subr.bf16.mxu0 0
      %2256 = vmatpush2.bf16.xpose.msra.mxu0 0
      %2257 = vmatprep.subr.bf16.mxu0 0
      %2258 = vmatpush2.bf16.xpose.msra.mxu0 0
      %2259 = vmatprep.subr.bf16.mxu0 0
      %2260 = vmatpush2.bf16.xpose.msra.mxu0 0
      %2261 = vmatprep.subr.bf16.mxu0 0
      %2262 = vmatpush2.bf16.xpose.msra.mxu0 0
      %2263 = vmatprep.subr.bf16.mxu0 0
      %2264 = vmatpush2.bf16.xpose.msra.mxu0 0
      %2265 = vmatprep.subr.bf16.mxu0 0
      %2266 = vmatpush2.bf16.xpose.msra.mxu0 0
      %2267 = vmatprep.mubr.bf16.mxu0 0
      %2268 = vmatmul.mubr.bf16.gmra.mxu0 %v2230
      %v2269 = vpop.f32.mrf.mxu0
      %v2270 = vadd.f32 0.0, %v2269
      %v2271 = vpop.f32.mrf.mxu0
      %v2272 = vpop.f32.mrf.mxu0
      %v2273 = vadd.f32 0.0, %v2272
      %v2274 = vpop.f32.mrf.mxu0
      %2275 = vdwg.mxu0
      %v2276 = vmul.f32 %v2270, 0.25
      %v2277 = vmul.f32 %v2273, 0.25
      %v2278 = vadd.f32 %v2276, %v1818
      %v2279 = vadd.f32 %v2277, %v1819
      %v2280 = vsel %vm2073, %v2278, -inf
      %2281 = vmax.xlane.f32.xlu0 %v2280
      %v2282 = vpop.xlane.xlu0 %2281
      %v2283 = vsel %vm2077, %v2279, -inf
      %2284 = vmax.xlane.f32.xlu0 %v2283
      %v2285 = vpop.xlane.xlu0 %2284
      %v2286 = vsub.f32 %v2278, %v2282
      %v2287 = vsub.f32 %v2279, %v2285
      %v2288 = vmul.f32 %v2286, 1.442695
      %v2289 = vpow.pop %v2288
      %v2290 = vmul.f32 %v2287, 1.442695
      %v2291 = vpow.pop %v2290
      %v2292 = vsel %vm2073, %v2289, 0.0
      %2293 = vadd.xlane.f32.xlu0 %v2292
      %v2294 = vpop.xlane.xlu0 %2293
      %v2295 = vsel %vm2077, %v2291, 0.0
      %2296 = vadd.xlane.f32.xlu0 %v2295
      %v2297 = vpop.xlane.xlu0 %2296
      %v2298 = vrcp.pop %v2294
      %v2299 = vrcp.pop %v2297
      %v2300 = vmul.f32 %v2289, %v2298
      %v2301 = vmul.f32 %v2291, %v2299
      %v2302 = vpack.c.bf16 %v2301, %v2300
      %2303 = vrot.lane.b32.xlu0 %v2098, 48
      %v2304 = vpop.permute.xlu0 %2303
      %v2306 = vsel %vm2073, %v2302, 0
      %v2309 = vsel %vm2105, %v2304, 0
      %2311 = vmatprep.subr.bf16.mxu0 0
      %2312 = vmatpush1.bf16.msra.mxu0 0
      %2313 = vmatprep.subr.bf16.mxu0 0
      %2314 = vmatpush1.bf16.msra.mxu0 0
      %2315 = vmatprep.subr.bf16.mxu0 0
      %2316 = vmatpush1.bf16.msra.mxu0 0
      %2317 = vmatprep.subr.bf16.mxu0 0
      %2318 = vmatpush1.bf16.msra.mxu0 0
      %2319 = vmatprep.subr.bf16.mxu0 0
      %2320 = vmatpush1.bf16.msra.mxu0 0
      %2321 = vmatprep.subr.bf16.mxu0 0
      %2322 = vmatpush1.bf16.msra.mxu0 0
      %2323 = vmatprep.subr.bf16.mxu0 0
      %2324 = vmatpush1.bf16.msra.mxu0 0
      %2325 = vmatprep.subr.bf16.mxu0 0
      %2326 = vmatpush1.bf16.msra.mxu0 %v2309
      %2327 = vmatprep.subr.bf16.mxu0 0
      %2328 = vmatpush2.bf16.msra.mxu0 0
      %2329 = vmatprep.subr.bf16.mxu0 0
      %2330 = vmatpush2.bf16.msra.mxu0 0
      %2331 = vmatprep.subr.bf16.mxu0 0
      %2332 = vmatpush2.bf16.msra.mxu0 0
      %2333 = vmatprep.subr.bf16.mxu0 0
      %2334 = vmatpush2.bf16.msra.mxu0 0
      %2335 = vmatprep.subr.bf16.mxu0 0
      %2336 = vmatpush2.bf16.msra.mxu0 0
      %2337 = vmatprep.subr.bf16.mxu0 0
      %2338 = vmatpush2.bf16.msra.mxu0 0
      %2339 = vmatprep.subr.bf16.mxu0 0
      %2340 = vmatpush2.bf16.msra.mxu0 0
      %2341 = vmatprep.subr.bf16.mxu0 0
      %2342 = vmatpush2.bf16.msra.mxu0 0
      %2343 = vmatprep.mubr.bf16.mxu0 0
      %2344 = vmatmul.mubr.bf16.gmra.mxu0 %v2306
      %v2345 = vpop.f32.mrf.mxu0
      %v2346 = vadd.f32 0.0, %v2345
      %v2347 = vpop.f32.mrf.mxu0
      %v2348 = vpop.f32.mrf.mxu0
      %v2349 = vadd.f32 0.0, %v2348
      %v2350 = vpop.f32.mrf.mxu0
      %2351 = vdwg.mxu0
      %v2352 = vpack.c.bf16 %v2349, %v2346
      %v2353 = vld [vmem:[%s14 + $0x8] sm:$0xf]
      %v2354 = vld [vmem:[%s14 + $0xc] sm:$0xf]
      %v2357 = vunpack.c.l.b16 %v2353
      %v2358 = vunpack.c.l.b16 %v2354
      %v2359 = vpack.c.b16 %v2358, %v2357
      %v2362 = vsel %vm964, %v2352, 0
      %2364 = vmatprep.subr.bf16.mxu0 0
      %2365 = vmatpush1.bf16.msra.mxu0 0
      %2366 = vmatprep.subr.bf16.mxu0 0
      %2367 = vmatpush1.bf16.msra.mxu0 0
      %2368 = vmatprep.subr.bf16.mxu0 0
      %2369 = vmatpush1.bf16.msra.mxu0 0
      %2370 = vmatprep.subr.bf16.mxu0 0
      %2371 = vmatpush1.bf16.msra.mxu0 0
      %2372 = vmatprep.subr.bf16.mxu0 0
      %2373 = vmatpush1.bf16.msra.mxu0 0
      %2374 = vmatprep.subr.bf16.mxu0 0
      %2375 = vmatpush1.bf16.msra.mxu0 0
      %2376 = vmatprep.subr.bf16.mxu0 0
      %2377 = vmatpush1.bf16.msra.mxu0 0
      %2378 = vmatprep.subr.bf16.mxu0 0
      %2379 = vmatpush1.bf16.msra.mxu0 %v2359
      %2380 = vmatprep.subr.bf16.mxu0 0
      %2381 = vmatpush2.bf16.msra.mxu0 0
      %2382 = vmatprep.subr.bf16.mxu0 0
      %2383 = vmatpush2.bf16.msra.mxu0 0
      %2384 = vmatprep.subr.bf16.mxu0 0
      %2385 = vmatpush2.bf16.msra.mxu0 0
      %2386 = vmatprep.subr.bf16.mxu0 0
      %2387 = vmatpush2.bf16.msra.mxu0 0
      %2388 = vmatprep.subr.bf16.mxu0 0
      %2389 = vmatpush2.bf16.msra.mxu0 0
      %2390 = vmatprep.subr.bf16.mxu0 0
      %2391 = vmatpush2.bf16.msra.mxu0 0
      %2392 = vmatprep.subr.bf16.mxu0 0
      %2393 = vmatpush2.bf16.msra.mxu0 0
      %2394 = vmatprep.subr.bf16.mxu0 0
      %2395 = vmatpush2.bf16.msra.mxu0 0
      %2396 = vmatprep.mubr.bf16.mxu0 0
      %2397 = vmatmul.mubr.bf16.gmra.mxu0 %v2362
      %v2398 = vpop.f32.mrf.mxu0
      %v2399 = vadd.f32 0.0, %v2398
      %v2400 = vpop.f32.mrf.mxu0
      %v2401 = vpop.f32.mrf.mxu0
      %v2402 = vadd.f32 0.0, %v2401
      %v2403 = vpop.f32.mrf.mxu0
      %2404 = vdwg.mxu0
      %v2407 = vunpack.c.l.b16 %v2151
      %v2408 = vunpack.c.l.b16 %v2152
      %v2409 = vpack.c.b16 %v2408, %v2407
      %v2412 = vsel %vm964, %v2150, 0
      %2414 = vmatprep.subr.bf16.mxu0 0
      %2415 = vmatpush1.bf16.msra.mxu0 0
      %2416 = vmatprep.subr.bf16.mxu0 0
      %2417 = vmatpush1.bf16.msra.mxu0 0
      %2418 = vmatprep.subr.bf16.mxu0 0
      %2419 = vmatpush1.bf16.msra.mxu0 0
      %2420 = vmatprep.subr.bf16.mxu0 0
      %2421 = vmatpush1.bf16.msra.mxu0 0
      %2422 = vmatprep.subr.bf16.mxu0 0
      %2423 = vmatpush1.bf16.msra.mxu0 0
      %2424 = vmatprep.subr.bf16.mxu0 0
      %2425 = vmatpush1.bf16.msra.mxu0 0
      %2426 = vmatprep.subr.bf16.mxu0 0
      %2427 = vmatpush1.bf16.msra.mxu0 0
      %2428 = vmatprep.subr.bf16.mxu0 0
      %2429 = vmatpush1.bf16.msra.mxu0 %v2409
      %2430 = vmatprep.subr.bf16.mxu0 0
      %2431 = vmatpush2.bf16.msra.mxu0 0
      %2432 = vmatprep.subr.bf16.mxu0 0
      %2433 = vmatpush2.bf16.msra.mxu0 0
      %2434 = vmatprep.subr.bf16.mxu0 0
      %2435 = vmatpush2.bf16.msra.mxu0 0
      %2436 = vmatprep.subr.bf16.mxu0 0
      %2437 = vmatpush2.bf16.msra.mxu0 0
      %2438 = vmatprep.subr.bf16.mxu0 0
      %2439 = vmatpush2.bf16.msra.mxu0 0
      %2440 = vmatprep.subr.bf16.mxu0 0
      %2441 = vmatpush2.bf16.msra.mxu0 0
      %2442 = vmatprep.subr.bf16.mxu0 0
      %2443 = vmatpush2.bf16.msra.mxu0 0
      %2444 = vmatprep.subr.bf16.mxu0 0
      %2445 = vmatpush2.bf16.msra.mxu0 0
      %2446 = vmatprep.mubr.bf16.mxu0 0
      %2447 = vmatmul.mubr.bf16.gmra.mxu0 %v2412
      %v2448 = vpop.f32.mrf.mxu0
      %v2449 = vadd.f32 %v2399, %v2448
      %v2450 = vpop.f32.mrf.mxu0
      %v2451 = vpop.f32.mrf.mxu0
      %v2452 = vadd.f32 %v2402, %v2451
      %v2453 = vpop.f32.mrf.mxu0
      %2454 = vdwg.mxu0
      %v2455 = vadd.f32 %v1799, %v2449
      %v2456 = vadd.f32 %v1796, %v2452
      %v2457 = vld [vmem:[%s4 + $0xe] sm:$0x1]
      %v2458 = vmul.f32 %v2455, %v2455
      %v2459 = vmul.f32 %v2456, %v2456
      %2460 = vadd.xlane.f32.xlu0 %v2458
      %v2461 = vpop.xlane.xlu0 %2460
      %v2462 = vsel %vm1798, %v2459, 0.0
      %2463 = vadd.xlane.f32.xlu0 %v2462
      %v2464 = vpop.xlane.xlu0 %2463
      %v2465 = vmul.f32 %v2461, %v800
      %v2466 = vmul.f32 %v2464, %v800
      %v2467 = vadd.f32 %v2465, 1e-06
      %v2468 = vadd.f32 %v2466, 1e-06
      %v2469 = vrsqrt.pop %v2467
      %v2470 = vrsqrt.pop %v2468
      %v2471 = vmul.f32 %v2455, %v2469
      %v2472 = vmul.f32 %v2456, %v2470
      %v2473 = vlaneseq
      %v2474 = vshrl.u32 %v2473, 7
      %v2475 = vsub.s32 0, %v2474
      %v2476 = vrot.slane %v2457, %v2475
      %v2477 = vmul.f32 %v2471, %v2476
      %v2478 = vmul.f32 %v2472, %v2476
      %v2479 = vpack.c.bf16 %v2478, %v2477
      %v2480 = vld [vmem:[%s15] sm:$0xf]
      %v2481 = vld [vmem:[%s15 + $0x4] sm:$0xf]
      %v2482 = vld [vmem:[%s15 + $0x8] sm:$0xf]
      %v2483 = vld [vmem:[%s15 + $0xc] sm:$0xf]
      %v2484 = vld [vmem:[%s15 + $0x10] sm:$0xf]
      %v2485 = vld [vmem:[%s15 + $0x14] sm:$0xf]
      %v2486 = vld [vmem:[%s15 + $0x18] sm:$0xf]
      %v2487 = vld [vmem:[%s15 + $0x1c] sm:$0xf]
      %v2488 = vld [vmem:[%s15 + $0x20] sm:$0xf]
      %v2489 = vld [vmem:[%s15 + $0x24] sm:$0xf]
      %v2490 = vld [vmem:[%s15 + $0x28] sm:$0xf]
      %v2491 = vld [vmem:[%s15 + $0x2c] sm:$0xf]
      %v2492 = vld [vmem:[%s15 + $0x30] sm:$0xf]
      %v2493 = vld [vmem:[%s15 + $0x34] sm:$0xf]
      %v2494 = vld [vmem:[%s15 + $0x38] sm:$0xf]
      %v2495 = vld [vmem:[%s15 + $0x3c] sm:$0xf]
      %v2512 = vunpack.c.l.b16 %v2480
      %v2513 = vunpack.c.l.b16 %v2481
      %v2514 = vunpack.c.l.b16 %v2482
      %v2515 = vunpack.c.l.b16 %v2483
      %v2516 = vunpack.c.l.b16 %v2484
      %v2517 = vunpack.c.l.b16 %v2485
      %v2518 = vunpack.c.l.b16 %v2486
      %v2519 = vunpack.c.l.b16 %v2487
      %v2520 = vunpack.c.l.b16 %v2488
      %v2521 = vunpack.c.l.b16 %v2489
      %v2522 = vunpack.c.l.b16 %v2490
      %v2523 = vunpack.c.l.b16 %v2491
      %v2524 = vunpack.c.l.b16 %v2492
      %v2525 = vunpack.c.l.b16 %v2493
      %v2526 = vunpack.c.l.b16 %v2494
      %v2527 = vunpack.c.l.b16 %v2495
      %v2528 = vpack.c.b16 %v2513, %v2512
      %v2529 = vpack.c.b16 %v2515, %v2514
      %v2530 = vpack.c.b16 %v2517, %v2516
      %v2531 = vpack.c.b16 %v2519, %v2518
      %v2532 = vpack.c.b16 %v2521, %v2520
      %v2533 = vpack.c.b16 %v2523, %v2522
      %v2534 = vpack.c.b16 %v2525, %v2524
      %v2535 = vpack.c.b16 %v2527, %v2526
      %2544 = vmatprep.subr.bf16.mxu0 0
      %2545 = vmatpush1.bf16.msra.mxu0 %v2535
      %2546 = vmatprep.subr.bf16.mxu0 0
      %2547 = vmatpush1.bf16.msra.mxu0 %v2534
      %2548 = vmatprep.subr.bf16.mxu0 0
      %2549 = vmatpush1.bf16.msra.mxu0 %v2533
      %2550 = vmatprep.subr.bf16.mxu0 0
      %2551 = vmatpush1.bf16.msra.mxu0 %v2532
      %2552 = vmatprep.subr.bf16.mxu0 0
      %2553 = vmatpush1.bf16.msra.mxu0 %v2531
      %2554 = vmatprep.subr.bf16.mxu0 0
      %2555 = vmatpush1.bf16.msra.mxu0 %v2530
      %2556 = vmatprep.subr.bf16.mxu0 0
      %2557 = vmatpush1.bf16.msra.mxu0 %v2529
      %2558 = vmatprep.subr.bf16.mxu0 0
      %2559 = vmatpush1.bf16.msra.mxu0 %v2528
      %2560 = vmatprep.subr.bf16.mxu0 0
      %2561 = vmatpush2.bf16.msra.mxu0 0
      %2562 = vmatprep.subr.bf16.mxu0 0
      %2563 = vmatpush2.bf16.msra.mxu0 0
      %2564 = vmatprep.subr.bf16.mxu0 0
      %2565 = vmatpush2.bf16.msra.mxu0 0
      %2566 = vmatprep.subr.bf16.mxu0 0
      %2567 = vmatpush2.bf16.msra.mxu0 0
      %2568 = vmatprep.subr.bf16.mxu0 0
      %2569 = vmatpush2.bf16.msra.mxu0 0
      %2570 = vmatprep.subr.bf16.mxu0 0
      %2571 = vmatpush2.bf16.msra.mxu0 0
      %2572 = vmatprep.subr.bf16.mxu0 0
      %2573 = vmatpush2.bf16.msra.mxu0 0
      %2574 = vmatprep.subr.bf16.mxu0 0
      %2575 = vmatpush2.bf16.msra.mxu0 0
      %2576 = vmatprep.mubr.bf16.mxu0 0
      %2577 = vmatmul.mubr.bf16.gmra.mxu0 %v2479
      %v2578 = vpop.f32.mrf.mxu0
      %v2579 = vadd.f32 0.0, %v2578
      %v2580 = vpop.f32.mrf.mxu0
      %v2581 = vpop.f32.mrf.mxu0
      %v2582 = vadd.f32 0.0, %v2581
      %v2583 = vpop.f32.mrf.mxu0
      %2584 = vdwg.mxu0
      %v2585 = vxor.u32 %v2579, 2147483648
      %v2586 = vxor.u32 %v2582, 2147483648
      %v2587 = vmul.f32 %v2585, 1.442695
      %v2588 = vpow.pop %v2587
      %v2589 = vmul.f32 %v2586, 1.442695
      %v2590 = vpow.pop %v2589
      %v2591 = vadd.f32 %v2588, 1.0
      %v2592 = vadd.f32 %v2590, 1.0
      %v2593 = vrcp.pop %v2591
      %v2594 = vmul.f32 1.0, %v2593
      %v2595 = vrcp.pop %v2592
      %v2596 = vmul.f32 1.0, %v2595
      %v2597 = vmul.f32 %v2579, %v2594
      %v2598 = vmul.f32 %v2582, %v2596
      %2601 = vrot.lane.b32.xlu0 %v2579, 64
      %v2602 = vpop.permute.xlu0 %2601
      %2603 = vrot.lane.b32.xlu0 %v2582, 64
      %v2604 = vpop.permute.xlu0 %2603
      %v2607 = vmul.f32 %v2597, %v2602
      %v2608 = vmul.f32 %v2598, %v2604
      %v2609 = vpack.c.bf16 %v2608, %v2607
      %v2610 = vld [vmem:[%s16] sm:$0xf]
      %v2611 = vld [vmem:[%s16 + $0x4] sm:$0xf]
      %v2612 = vld [vmem:[%s16 + $0x8] sm:$0xf]
      %v2613 = vld [vmem:[%s16 + $0xc] sm:$0xf]
      %v2614 = vld [vmem:[%s16 + $0x10] sm:$0xf]
      %v2615 = vld [vmem:[%s16 + $0x14] sm:$0xf]
      %v2616 = vld [vmem:[%s16 + $0x18] sm:$0xf]
      %v2617 = vld [vmem:[%s16 + $0x1c] sm:$0xf]
      %v2626 = vunpack.c.l.b16 %v2610
      %v2627 = vunpack.c.l.b16 %v2611
      %v2628 = vunpack.c.l.b16 %v2612
      %v2629 = vunpack.c.l.b16 %v2613
      %v2630 = vunpack.c.l.b16 %v2614
      %v2631 = vunpack.c.l.b16 %v2615
      %v2632 = vunpack.c.l.b16 %v2616
      %v2633 = vunpack.c.l.b16 %v2617
      %v2634 = vpack.c.b16 %v2627, %v2626
      %v2635 = vpack.c.b16 %v2629, %v2628
      %v2636 = vpack.c.b16 %v2631, %v2630
      %v2637 = vpack.c.b16 %v2633, %v2632
      %vm2642 = vcmask 523264
      %v2644 = vsel %vm2642, %v2609, 0
      %2646 = vmatprep.subr.bf16.mxu0 0
      %2647 = vmatpush1.bf16.msra.mxu0 0
      %2648 = vmatprep.subr.bf16.mxu0 0
      %2649 = vmatpush1.bf16.msra.mxu0 0
      %2650 = vmatprep.subr.bf16.mxu0 0
      %2651 = vmatpush1.bf16.msra.mxu0 0
      %2652 = vmatprep.subr.bf16.mxu0 0
      %2653 = vmatpush1.bf16.msra.mxu0 0
      %2654 = vmatprep.subr.bf16.mxu0 0
      %2655 = vmatpush1.bf16.msra.mxu0 %v2637
      %2656 = vmatprep.subr.bf16.mxu0 0
      %2657 = vmatpush1.bf16.msra.mxu0 %v2636
      %2658 = vmatprep.subr.bf16.mxu0 0
      %2659 = vmatpush1.bf16.msra.mxu0 %v2635
      %2660 = vmatprep.subr.bf16.mxu0 0
      %2661 = vmatpush1.bf16.msra.mxu0 %v2634
      %2662 = vmatprep.subr.bf16.mxu0 0
      %2663 = vmatpush2.bf16.msra.mxu0 0
      %2664 = vmatprep.subr.bf16.mxu0 0
      %2665 = vmatpush2.bf16.msra.mxu0 0
      %2666 = vmatprep.subr.bf16.mxu0 0
      %2667 = vmatpush2.bf16.msra.mxu0 0
      %2668 = vmatprep.subr.bf16.mxu0 0
      %2669 = vmatpush2.bf16.msra.mxu0 0
      %2670 = vmatprep.subr.bf16.mxu0 0
      %2671 = vmatpush2.bf16.msra.mxu0 0
      %2672 = vmatprep.subr.bf16.mxu0 0
      %2673 = vmatpush2.bf16.msra.mxu0 0
      %2674 = vmatprep.subr.bf16.mxu0 0
      %2675 = vmatpush2.bf16.msra.mxu0 0
      %2676 = vmatprep.subr.bf16.mxu0 0
      %2677 = vmatpush2.bf16.msra.mxu0 0
      %2678 = vmatprep.mubr.bf16.mxu0 0
      %2679 = vmatmul.mubr.bf16.gmra.mxu0 %v2644
      %v2680 = vpop.f32.mrf.mxu0
      %v2681 = vadd.f32 0.0, %v2680
      %v2682 = vpop.f32.mrf.mxu0
      %v2683 = vpop.f32.mrf.mxu0
      %v2684 = vadd.f32 0.0, %v2683
      %v2685 = vpop.f32.mrf.mxu0
      %2686 = vdwg.mxu0
      %v2687 = vadd.f32 %v2455, %v2681
      %v2688 = vadd.f32 %v2456, %v2684
      %v2689 = vld [vmem:[%s4 + $0xf] sm:$0x1]
      %v2690 = vmul.f32 %v2687, %v2687
      %v2691 = vmul.f32 %v2688, %v2688
      %2692 = vadd.xlane.f32.xlu0 %v2690
      %v2693 = vpop.xlane.xlu0 %2692
      %v2694 = vsel %vm1798, %v2691, 0.0
      %2695 = vadd.xlane.f32.xlu0 %v2694
      %v2696 = vpop.xlane.xlu0 %2695
      %v2697 = vmul.f32 %v2693, %v800
      %v2698 = vmul.f32 %v2696, %v800
      %v2699 = vadd.f32 %v2697, 1e-06
      %v2700 = vadd.f32 %v2698, 1e-06
      %v2701 = vrsqrt.pop %v2699
      %v2702 = vrsqrt.pop %v2700
      %v2703 = vmul.f32 %v2687, %v2701
      %v2704 = vmul.f32 %v2688, %v2702
      %v2705 = vlaneseq
      %v2706 = vshrl.u32 %v2705, 7
      %v2707 = vsub.s32 0, %v2706
      %v2708 = vrot.slane %v2689, %v2707
      %v2709 = vmul.f32 %v2703, %v2708
      %v2710 = vmul.f32 %v2704, %v2708
      %v2711 = vld [vmem:[%s4 + $0x10] sm:$0x1]
      %v2712 = vpack.c.bf16 %v2710, %v2709
      %v2713 = vld [vmem:[%s17] sm:$0xf]
      %v2714 = vld [vmem:[%s17 + $0x4] sm:$0xf]
      %v2715 = vld [vmem:[%s17 + $0x8] sm:$0xf]
      %v2716 = vld [vmem:[%s17 + $0xc] sm:$0xf]
      %v2717 = vld [vmem:[%s17 + $0x10] sm:$0xf]
      %v2718 = vld [vmem:[%s17 + $0x14] sm:$0xf]
      %v2719 = vld [vmem:[%s17 + $0x18] sm:$0xf]
      %v2720 = vld [vmem:[%s17 + $0x1c] sm:$0xf]
      %v2721 = vld [vmem:[%s17 + $0x20] sm:$0xf]
      %v2722 = vld [vmem:[%s17 + $0x24] sm:$0xf]
      %v2723 = vld [vmem:[%s17 + $0x28] sm:$0xf]
      %v2724 = vld [vmem:[%s17 + $0x2c] sm:$0xf]
      %v2725 = vld [vmem:[%s17 + $0x30] sm:$0xf]
      %v2726 = vld [vmem:[%s17 + $0x34] sm:$0xf]
      %v2727 = vld [vmem:[%s17 + $0x38] sm:$0xf]
      %v2728 = vld [vmem:[%s17 + $0x3c] sm:$0xf]
      %v2729 = vlaneseq
      %v2730 = vshrl.u32 %v2729, 7
      %v2731 = vsub.s32 0, %v2730
      %v2732 = vrot.slane %v2711, %v2731
      %v2749 = vunpack.c.l.b16 %v2713
      %v2750 = vunpack.c.l.b16 %v2714
      %v2751 = vunpack.c.l.b16 %v2715
      %v2752 = vunpack.c.l.b16 %v2716
      %v2753 = vunpack.c.l.b16 %v2717
      %v2754 = vunpack.c.l.b16 %v2718
      %v2755 = vunpack.c.l.b16 %v2719
      %v2756 = vunpack.c.l.b16 %v2720
      %v2757 = vunpack.c.l.b16 %v2721
      %v2758 = vunpack.c.l.b16 %v2722
      %v2759 = vunpack.c.l.b16 %v2723
      %v2760 = vunpack.c.l.b16 %v2724
      %v2761 = vunpack.c.l.b16 %v2725
      %v2762 = vunpack.c.l.b16 %v2726
      %v2763 = vunpack.c.l.b16 %v2727
      %v2764 = vunpack.c.l.b16 %v2728
      %v2765 = vpack.c.b16 %v2750, %v2749
      %v2766 = vpack.c.b16 %v2752, %v2751
      %v2767 = vpack.c.b16 %v2754, %v2753
      %v2768 = vpack.c.b16 %v2756, %v2755
      %v2769 = vpack.c.b16 %v2758, %v2757
      %v2770 = vpack.c.b16 %v2760, %v2759
      %v2771 = vpack.c.b16 %v2762, %v2761
      %v2772 = vpack.c.b16 %v2764, %v2763
      %2781 = vmatprep.subr.bf16.mxu0 0
      %2782 = vmatpush1.bf16.msra.mxu0 %v2772
      %2783 = vmatprep.subr.bf16.mxu0 0
      %2784 = vmatpush1.bf16.msra.mxu0 %v2771
      %2785 = vmatprep.subr.bf16.mxu0 0
      %2786 = vmatpush1.bf16.msra.mxu0 %v2770
      %2787 = vmatprep.subr.bf16.mxu0 0
      %2788 = vmatpush1.bf16.msra.mxu0 %v2769
      %2789 = vmatprep.subr.bf16.mxu0 0
      %2790 = vmatpush1.bf16.msra.mxu0 %v2768
      %2791 = vmatprep.subr.bf16.mxu0 0
      %2792 = vmatpush1.bf16.msra.mxu0 %v2767
      %2793 = vmatprep.subr.bf16.mxu0 0
      %2794 = vmatpush1.bf16.msra.mxu0 %v2766
      %2795 = vmatprep.subr.bf16.mxu0 0
      %2796 = vmatpush1.bf16.msra.mxu0 %v2765
      %2797 = vmatprep.subr.bf16.mxu0 0
      %2798 = vmatpush2.bf16.msra.mxu0 0
      %2799 = vmatprep.subr.bf16.mxu0 0
      %2800 = vmatpush2.bf16.msra.mxu0 0
      %2801 = vmatprep.subr.bf16.mxu0 0
      %2802 = vmatpush2.bf16.msra.mxu0 0
      %2803 = vmatprep.subr.bf16.mxu0 0
      %2804 = vmatpush2.bf16.msra.mxu0 0
      %2805 = vmatprep.subr.bf16.mxu0 0
      %2806 = vmatpush2.bf16.msra.mxu0 0
      %2807 = vmatprep.subr.bf16.mxu0 0
      %2808 = vmatpush2.bf16.msra.mxu0 0
      %2809 = vmatprep.subr.bf16.mxu0 0
      %2810 = vmatpush2.bf16.msra.mxu0 0
      %2811 = vmatprep.subr.bf16.mxu0 0
      %2812 = vmatpush2.bf16.msra.mxu0 0
      %2813 = vmatprep.mubr.bf16.mxu0 0
      %2814 = vmatmul.mubr.bf16.gmra.mxu0 %v2712
      %v2815 = vpop.f32.mrf.mxu0
      %v2816 = vadd.f32 %v2732, %v2815
      %v2817 = vpop.f32.mrf.mxu0
      %v2818 = vpop.f32.mrf.mxu0
      %v2819 = vadd.f32 %v2732, %v2818
      %v2820 = vpop.f32.mrf.mxu0
      %2821 = vdwg.mxu0
      %2822 = vst [vmem:[%s606] sm:$0xff] %v2816
      %2823 = vst [vmem:[%s606 + $0x8] sm:$0xf] %v2819
      %p2824 = scmp.lt.s32.totalorder %s29, 1
      %s2825 = scalar_select %p2824, %s29, 1
      %s2826 = smul.addr %s2825, 2
      %s2827 = smul.addr %s2826, 8
      %s2828 = scalar_lea.vmem %s18, %s2827
      // Predicated region
      $region93: #{llava_forward.1} parent=91 // pred_check
        %p2829 = pneg %p440
      $region94: #{llava_forward.1} parent=91 // pred_check_branch
        %2831 = sbr.rel (%p2829) target = $region96
      $region95: #{llava_forward.1} parent=91 // pred_region
        _
      $region96: #{llava_forward.1} parent=91 // pred_fallthru
        _
    $region92: #{llava_forward.1} parent=5 // pred_fallthru
      _
    %p2832 = scmp.le.s32.totalorder 2, %s24
    // Predicated region
    $region97: #{llava_forward.1} parent=5 // pred_check
      %p2833 = pneg %p2832
    $region98: #{llava_forward.1} parent=5 // pred_check_branch
      %2835 = sbr.rel (%p2833) target = $region100
    $region99: #{llava_forward.1} parent=5 // pred_region
      %s2836 = ssub.s32 %s24, 2
      // Predicated region
      $region101: #{llava_forward.1} parent=99 // pred_check
        %p2837 = pneg %p446
      $region102: #{llava_forward.1} parent=99 // pred_check_branch
        %2839 = sbr.rel (%p2837) target = $region104
      $region103: #{llava_forward.1} parent=99 // pred_region
        %p2840 = scmp.lt.s32.totalorder %s30, 1
        %s2841 = scalar_select %p2840, %s30, 1
        %s2842 = smul.addr %s2841, 2
        %s2843 = smul.addr %s2842, 8
        %s2844 = scalar_lea.vmem %s18, %s2843
      $region104: #{llava_forward.1} parent=99 // pred_fallthru
        _
    $region100: #{llava_forward.1} parent=5 // pred_fallthru
      _
  $region6: #{llava_forward.1} parent=0 // loop_footer
    %s28 = sadd.s32 1, %s24
  $region7: #{llava_forward.1} parent=0 // loop_footer_branch
    %23 = sbr.rel target = $region3
  $region8: #{llava_forward.1} parent=0 // loop_exit
    _

</llo_original>
